<compile_context>
chip_gen: v5e
topology: v5e:2x2
jax: 0.10.0
libtpu: 0.0.40
codegen_flags: <defaults>
</compile_context>

<pallas_src>
import jax
import jax.numpy as jnp
from jax.experimental import pallas as pl
from jax.experimental.pallas import tpu as pltpu

HIDDEN = 512
OUT_DIM = 3
OUT_PAD = 128            # fc3 output padded to a full lane width
_MIN_SPLIT_TILE = 512    # don't force a grid split below this many rows/step


def _predictor_kernel(x_ref, w1_ref, w2_ref, w3_ref, bias_ref, o_ref):
    # bias_ref layout: [ b1' (512) | b2' (512) | b3 padded (128) ]  (f32)
    b1 = bias_ref[:, 0:HIDDEN]
    b2 = bias_ref[:, HIDDEN:2 * HIDDEN]
    b3 = bias_ref[:, 2 * HIDDEN:2 * HIDDEN + OUT_PAD]

    # fc1 (+ folded bn1) + relu   (dropout1 = identity in eval)
    # x is already bf16 (cast in the wrapper), accumulate in f32 on the MXU.
    h = jnp.dot(x_ref[...], w1_ref[...], preferred_element_type=jnp.float32)
    h = jnp.maximum(h + b1, 0.0)

    # fc2 (+ folded bn2) + relu   (dropout2 = identity in eval)
    h = jnp.dot(h.astype(jnp.bfloat16), w2_ref[...],
                preferred_element_type=jnp.float32)
    h = jnp.maximum(h + b2, 0.0)

    # fc3 (lane-dense, padded to 128 output lanes)
    o = jnp.dot(h.astype(jnp.bfloat16), w3_ref[...],
                preferred_element_type=jnp.float32)
    o_ref[...] = (o + b3).astype(o_ref.dtype)


def _round_up(x, m):
    return (x + m - 1) // m * m


def _choose_tile(B, tile_b):
    """Pick (tb, Bp): big tiles (amortize ~0.35us/step overhead), >=2 grid
    steps for large batches (v7x dual TensorCore), 128-row MXU alignment on
    v5e, and padding bounded to less than one tile."""
    n_steps = max(1, pl.cdiv(B, max(tile_b, 8)))
    if n_steps == 1 and B >= 2 * _MIN_SPLIT_TILE:
        n_steps = 2                      # let both v7x TensorCores participate
    per_step = pl.cdiv(B, n_steps)
    align = 128 if per_step >= 128 else 8
    tb = _round_up(per_step, align)
    Bp = _round_up(B, tb)
    return tb, Bp


def predictor_fc_forward(x, params, *, tile_b=1024, out_dtype=jnp.float32):
    """x: (B, F) float32. Returns (B, 3) in out_dtype (eval-mode forward)."""
    w1, w2, w3p, bias = params
    B, F = x.shape
    assert w1.shape[0] == F

    tb, Bp = _choose_tile(B, tile_b)

    # bf16 input halves the dominant streamed HBM read; math stays f32-accum.
    xb = x.astype(jnp.bfloat16)
    if Bp != B:
        xb = jnp.pad(xb, ((0, Bp - B), (0, 0)))

    def call(const_pipeline_mode):
        if const_pipeline_mode is None:
            const = lambda shape: pl.BlockSpec(shape, lambda i: (0,) * len(shape))
        else:
            const = lambda shape: pl.BlockSpec(
                shape, lambda i: (0,) * len(shape),
                pipeline_mode=const_pipeline_mode)
        return pl.pallas_call(
            _predictor_kernel,
            out_shape=jax.ShapeDtypeStruct((Bp, OUT_PAD), out_dtype),
            grid=(Bp // tb,),
            in_specs=[
                pl.BlockSpec((tb, F), lambda i: (i, 0)),   # x: tiled over batch
                const(w1.shape),                           # weights stay VMEM-resident
                const(w2.shape),
                const(w3p.shape),
                const(bias.shape),                         # fused bias vector
            ],
            out_specs=pl.BlockSpec((tb, OUT_PAD), lambda i: (i, 0)),
            compiler_params=pltpu.CompilerParams(
                dimension_semantics=("parallel",),
            ),
        )(xb, w1, w2, w3p, bias)

    # Constant-index blocks don't need double buffers; single-buffer them to
    # return ~1 MiB of VMEM.  Fall back (when called eagerly) if this jax
    # build rejects pipeline_mode on the classic pallas_call pipeline.
    try:
        out_padded = call(pl.Buffered(1))
    except Exception:
        out_padded = call(None)

    return out_padded[:B, :OUT_DIM]


def make_params(key, in_channel=256, hidden=HIDDEN, out_dim=OUT_DIM,
                out_pad=OUT_PAD, eps=1e-5):
    """Build deterministic eval-mode parameters.

    Returns (kernel_params, raw) where kernel_params = (w1', w2', w3p, bias)
    with the BN affine + linear bias folded in, weights in bf16, and raw holds
    the unfolded f32 parameters for the reference check.
    """
    ks = jax.random.split(key, 14)

    # nn.Linear weights stored transposed as (in, out) so the kernel does x @ W.
    w1 = jax.random.normal(ks[0], (in_channel, hidden), jnp.float32) * 0.02
    b1 = jax.random.normal(ks[1], (hidden,), jnp.float32) * 0.02
    w2 = jax.random.normal(ks[2], (hidden, hidden), jnp.float32) * 0.02
    b2 = jax.random.normal(ks[3], (hidden,), jnp.float32) * 0.02
    w3 = jax.random.normal(ks[4], (hidden, out_dim), jnp.float32) * 0.02
    b3 = jax.random.normal(ks[5], (out_dim,), jnp.float32) * 0.02

    # BatchNorm1d (eval mode) parameters.
    gamma1 = 1.0 + 0.1 * jax.random.normal(ks[6], (hidden,), jnp.float32)
    beta1 = 0.1 * jax.random.normal(ks[7], (hidden,), jnp.float32)
    rmean1 = 0.1 * jax.random.normal(ks[8], (hidden,), jnp.float32)
    rvar1 = 1.0 + 0.1 * jax.random.uniform(ks[9], (hidden,), jnp.float32)
    gamma2 = 1.0 + 0.1 * jax.random.normal(ks[10], (hidden,), jnp.float32)
    beta2 = 0.1 * jax.random.normal(ks[11], (hidden,), jnp.float32)
    rmean2 = 0.1 * jax.random.normal(ks[12], (hidden,), jnp.float32)
    rvar2 = 1.0 + 0.1 * jax.random.uniform(ks[13], (hidden,), jnp.float32)

    s1 = gamma1 / jnp.sqrt(rvar1 + eps)
    t1 = beta1 - rmean1 * s1
    s2 = gamma2 / jnp.sqrt(rvar2 + eps)
    t2 = beta2 - rmean2 * s2

    # Fold BN affine + linear bias into the weight columns / one bias vector.
    w1f = (w1 * s1[None, :]).astype(jnp.bfloat16)
    b1f = b1 * s1 + t1
    w2f = (w2 * s2[None, :]).astype(jnp.bfloat16)
    b2f = b2 * s2 + t2

    # Pad fc3 to 128 output lanes.
    w3p = jnp.zeros((hidden, out_pad), jnp.float32).at[:, :out_dim].set(w3)
    w3p = w3p.astype(jnp.bfloat16)
    b3p = jnp.zeros((out_pad,), jnp.float32).at[:out_dim].set(b3)

    # Single fused bias input (f32): [b1' | b2' | b3 padded].
    bias = jnp.concatenate([b1f, b2f, b3p])[None, :]

    kernel_params = (w1f, w2f, w3p, bias)
    raw = dict(w1=w1, b1=b1, w2=w2, b2=b2, w3=w3, b3=b3,
               s1=s1, t1=t1, s2=s2, t2=t2)
    return kernel_params, raw


def _reference_f32(x, raw):
    """Unfolded, all-f32 eval-mode forward (PyTorch semantics)."""
    h = x @ raw["w1"] + raw["b1"]
    h = jnp.maximum(h * raw["s1"] + raw["t1"], 0.0)
    h = h @ raw["w2"] + raw["b2"]
    h = jnp.maximum(h * raw["s2"] + raw["t2"], 0.0)
    return h @ raw["w3"] + raw["b3"]


def _reference_bf16(x, params):
    """Same math as the kernel (folded params, bf16 matmul inputs, f32 accum)."""
    w1, w2, w3p, bias = params
    b1 = bias[:, :HIDDEN]
    b2 = bias[:, HIDDEN:2 * HIDDEN]
    b3 = bias[:, 2 * HIDDEN:]
    h = jnp.dot(x.astype(jnp.bfloat16), w1, preferred_element_type=jnp.float32)
    h = jnp.maximum(h + b1, 0.0)
    h = jnp.dot(h.astype(jnp.bfloat16), w2, preferred_element_type=jnp.float32)
    h = jnp.maximum(h + b2, 0.0)
    o = jnp.dot(h.astype(jnp.bfloat16), w3p, preferred_element_type=jnp.float32) + b3
    return o[:, :OUT_DIM]


if __name__ == "__main__":
    key = jax.random.PRNGKey(0)
    kx, kp = jax.random.split(key)

    # Predictor_fc(n=1, add_box=False) -> in_channel = 256.
    in_channel = 256
    params, raw = make_params(kp, in_channel=in_channel)

    # Exercise both regimes: tiny batch (single 8-row tile) and a batch large
    # enough to hit the multi-step, padded-tile grid path (tb=640, grid=2).
    for B in (8, 1100):
        x = jax.random.normal(jax.random.fold_in(kx, B), (B, in_channel),
                              jnp.float32)
        out = jax.block_until_ready(predictor_fc_forward(x, params))
        assert out.shape == (B, OUT_DIM), out.shape
        assert out.dtype == jnp.float32, out.dtype

        # Tight check against the exact math the kernel performs.
        ref_bf16 = _reference_bf16(x, params)
        assert jnp.allclose(out, ref_bf16, atol=2e-3, rtol=2e-3), (
            f"B={B}: mismatch vs bf16 reference")

        # Looser check against the unfolded full-f32 PyTorch-semantics forward
        # (difference is only the bf16 weight/activation rounding).
        ref_f32 = _reference_f32(x, raw)
        assert jnp.allclose(out, ref_f32, atol=3e-2, rtol=3e-2), (
            f"B={B}: mismatch vs f32 reference")

    # Optional bf16 output store (writeback saving on v6e/v7x); looser check
    # since the 3 real outputs pick up one extra bf16 rounding.
    xl = jax.random.normal(jax.random.fold_in(kx, 1100), (1100, in_channel),
                           jnp.float32)
    out_bf16 = jax.block_until_ready(
        predictor_fc_forward(xl, params, out_dtype=jnp.bfloat16))
    assert out_bf16.dtype == jnp.bfloat16
    assert jnp.allclose(out_bf16.astype(jnp.float32), _reference_f32(xl, raw),
                        atol=5e-2, rtol=5e-2), "mismatch vs f32 reference (bf16 out)"

    print("KERNEL_OK")
</pallas_src>

<mosaic_0001>
module attributes {stable_mosaic.version = 11 : i64} {
  func.func @_predictor_kernel(%arg0: i32, %arg1: memref<8x256xbf16, #tpu.memory_space<vmem>>, %arg2: memref<256x512xbf16, #tpu.memory_space<vmem>>, %arg3: memref<512x512xbf16, #tpu.memory_space<vmem>>, %arg4: memref<512x128xbf16, #tpu.memory_space<vmem>>, %arg5: memref<1x1152xf32, #tpu.memory_space<vmem>>, %arg6: memref<8x128xf32, #tpu.memory_space<vmem>>) attributes {dimension_semantics = [#tpu.dimension_semantics<parallel>], iteration_bounds = array<i64: 1>, scalar_prefetch = 0 : i64, scratch_operands = 0 : i64, tpu.core_type = #tpu.core_type<tc>, window_params = [{transform_indices = @transform_0, window_bounds = array<i64: 8, 256>}, {pipeline_mode = #tpu.pipeline_mode<synchronous>, transform_indices = @transform_1, window_bounds = array<i64: 256, 512>}, {pipeline_mode = #tpu.pipeline_mode<synchronous>, transform_indices = @transform_2, window_bounds = array<i64: 512, 512>}, {pipeline_mode = #tpu.pipeline_mode<synchronous>, transform_indices = @transform_3, window_bounds = array<i64: 512, 128>}, {pipeline_mode = #tpu.pipeline_mode<synchronous>, transform_indices = @transform_4, window_bounds = array<i64: 1, 1152>}, {transform_indices = @transform_5, window_bounds = array<i64: 8, 128>}]} {
    %c0 = arith.constant 0 : index
    %c0_0 = arith.constant 0 : index
    %0 = vector.load %arg5[%c0, %c0_0] : memref<1x1152xf32, #tpu.memory_space<vmem>>, vector<1x512xf32>
    %c0_1 = arith.constant 0 : index
    %c512 = arith.constant 512 : index
    %1 = vector.load %arg5[%c0_1, %c512] : memref<1x1152xf32, #tpu.memory_space<vmem>>, vector<1x512xf32>
    %c0_2 = arith.constant 0 : index
    %c1024 = arith.constant 1024 : index
    %2 = vector.load %arg5[%c0_2, %c1024] : memref<1x1152xf32, #tpu.memory_space<vmem>>, vector<1x128xf32>
    %c0_3 = arith.constant 0 : index
    %c0_4 = arith.constant 0 : index
    %3 = vector.load %arg1[%c0_3, %c0_4] : memref<8x256xbf16, #tpu.memory_space<vmem>>, vector<8x256xbf16>
    %c0_5 = arith.constant 0 : index
    %c0_6 = arith.constant 0 : index
    %4 = vector.load %arg2[%c0_5, %c0_6] : memref<256x512xbf16, #tpu.memory_space<vmem>>, vector<256x512xbf16>
    %cst = arith.constant dense<0.000000e+00> : vector<8x512xf32>
    %5 = tpu.matmul %3, %4, %cst {dimension_numbers = #tpu.dot_dimension_numbers<[1], [0], [0], [1], [0, 0, 1, 1], [], []>} : vector<8x256xbf16>, vector<256x512xbf16>, vector<8x512xf32> -> vector<8x512xf32>
    %6 = vector.broadcast %0 : vector<1x512xf32> to vector<8x512xf32>
    %7 = arith.addf %5, %6 : vector<8x512xf32>
    %cst_7 = arith.constant 0.000000e+00 : f32
    %8 = vector.broadcast %cst_7 : f32 to vector<8x512xf32>
    %9 = arith.maximumf %7, %8 : vector<8x512xf32>
    %10 = arith.truncf %9 : vector<8x512xf32> to vector<8x512xbf16>
    %c0_8 = arith.constant 0 : index
    %c0_9 = arith.constant 0 : index
    %11 = vector.load %arg3[%c0_8, %c0_9] : memref<512x512xbf16, #tpu.memory_space<vmem>>, vector<512x512xbf16>
    %cst_10 = arith.constant dense<0.000000e+00> : vector<8x512xf32>
    %12 = tpu.matmul %10, %11, %cst_10 {dimension_numbers = #tpu.dot_dimension_numbers<[1], [0], [0], [1], [0, 0, 1, 1], [], []>} : vector<8x512xbf16>, vector<512x512xbf16>, vector<8x512xf32> -> vector<8x512xf32>
    %13 = vector.broadcast %1 : vector<1x512xf32> to vector<8x512xf32>
    %14 = arith.addf %12, %13 : vector<8x512xf32>
    %cst_11 = arith.constant 0.000000e+00 : f32
    %15 = vector.broadcast %cst_11 : f32 to vector<8x512xf32>
    %16 = arith.maximumf %14, %15 : vector<8x512xf32>
    %17 = arith.truncf %16 : vector<8x512xf32> to vector<8x512xbf16>
    %c0_12 = arith.constant 0 : index
    %c0_13 = arith.constant 0 : index
    %18 = vector.load %arg4[%c0_12, %c0_13] : memref<512x128xbf16, #tpu.memory_space<vmem>>, vector<512x128xbf16>
    %cst_14 = arith.constant dense<0.000000e+00> : vector<8x128xf32>
    %19 = tpu.matmul %17, %18, %cst_14 {dimension_numbers = #tpu.dot_dimension_numbers<[1], [0], [0], [1], [0, 0, 1, 1], [], []>} : vector<8x512xbf16>, vector<512x128xbf16>, vector<8x128xf32> -> vector<8x128xf32>
    %20 = vector.broadcast %2 : vector<1x128xf32> to vector<8x128xf32>
    %21 = arith.addf %19, %20 : vector<8x128xf32>
    %c0_15 = arith.constant 0 : index
    %c0_16 = arith.constant 0 : index
    %22 = vector.load %arg6[%c0_15, %c0_16] : memref<8x128xf32, #tpu.memory_space<vmem>>, vector<8x128xf32>
    tpu.vector_store %arg6[%c0_15, %c0_16], %21 {strides = array<i32>} : memref<8x128xf32, #tpu.memory_space<vmem>>, vector<8x128xf32>,
    return
  }
  func.func @transform_0(%arg0: i32) -> (i32, i32) {
    %c0_i32 = arith.constant 0 : i32
    %c0_i32_0 = arith.constant 0 : i32
    return %arg0, %c0_i32 : i32, i32
  }
  func.func @transform_1(%arg0: i32) -> (i32, i32) {
    %c0_i32 = arith.constant 0 : i32
    %c0_i32_0 = arith.constant 0 : i32
    %c0_i32_1 = arith.constant 0 : i32
    return %c0_i32, %c0_i32_0 : i32, i32
  }
  func.func @transform_2(%arg0: i32) -> (i32, i32) {
    %c0_i32 = arith.constant 0 : i32
    %c0_i32_0 = arith.constant 0 : i32
    %c0_i32_1 = arith.constant 0 : i32
    return %c0_i32, %c0_i32_0 : i32, i32
  }
  func.func @transform_3(%arg0: i32) -> (i32, i32) {
    %c0_i32 = arith.constant 0 : i32
    %c0_i32_0 = arith.constant 0 : i32
    %c0_i32_1 = arith.constant 0 : i32
    return %c0_i32, %c0_i32_0 : i32, i32
  }
  func.func @transform_4(%arg0: i32) -> (i32, i32) {
    %c0_i32 = arith.constant 0 : i32
    %c0_i32_0 = arith.constant 0 : i32
    %c0_i32_1 = arith.constant 0 : i32
    return %c0_i32, %c0_i32_0 : i32, i32
  }
  func.func @transform_5(%arg0: i32) -> (i32, i32) {
    %c0_i32 = arith.constant 0 : i32
    %c0_i32_0 = arith.constant 0 : i32
    return %arg0, %c0_i32 : i32, i32
  }
}

module attributes {stable_mosaic.version = 11 : i64} {
  func.func @_predictor_kernel(%arg0: i32, %arg1: memref<8x256xbf16, #tpu.memory_space<vmem>>, %arg2: memref<256x512xbf16, #tpu.memory_space<vmem>>, %arg3: memref<512x512xbf16, #tpu.memory_space<vmem>>, %arg4: memref<512x128xbf16, #tpu.memory_space<vmem>>, %arg5: memref<1x1152xf32, #tpu.memory_space<vmem>>, %arg6: memref<8x128xf32, #tpu.memory_space<vmem>>) attributes {dimension_semantics = [#tpu.dimension_semantics<parallel>], iteration_bounds = array<i64: 1>, scalar_prefetch = 0 : i64, scratch_operands = 0 : i64, tpu.core_type = #tpu.core_type<tc>, window_params = [{transform_indices = @transform_0, window_bounds = array<i64: 8, 256>}, {pipeline_mode = #tpu.pipeline_mode<synchronous>, transform_indices = @transform_1, window_bounds = array<i64: 256, 512>}, {pipeline_mode = #tpu.pipeline_mode<synchronous>, transform_indices = @transform_2, window_bounds = array<i64: 512, 512>}, {pipeline_mode = #tpu.pipeline_mode<synchronous>, transform_indices = @transform_3, window_bounds = array<i64: 512, 128>}, {pipeline_mode = #tpu.pipeline_mode<synchronous>, transform_indices = @transform_4, window_bounds = array<i64: 1, 1152>}, {transform_indices = @transform_5, window_bounds = array<i64: 8, 128>}]} {
    %c0 = arith.constant 0 : index
    %c0_0 = arith.constant 0 : index
    %0 = vector.load %arg5[%c0, %c0_0] : memref<1x1152xf32, #tpu.memory_space<vmem>>, vector<1x512xf32>
    %c0_1 = arith.constant 0 : index
    %c512 = arith.constant 512 : index
    %1 = vector.load %arg5[%c0_1, %c512] : memref<1x1152xf32, #tpu.memory_space<vmem>>, vector<1x512xf32>
    %c0_2 = arith.constant 0 : index
    %c1024 = arith.constant 1024 : index
    %2 = vector.load %arg5[%c0_2, %c1024] : memref<1x1152xf32, #tpu.memory_space<vmem>>, vector<1x128xf32>
    %c0_3 = arith.constant 0 : index
    %c0_4 = arith.constant 0 : index
    %3 = vector.load %arg1[%c0_3, %c0_4] : memref<8x256xbf16, #tpu.memory_space<vmem>>, vector<8x256xbf16>
    %c0_5 = arith.constant 0 : index
    %c0_6 = arith.constant 0 : index
    %4 = vector.load %arg2[%c0_5, %c0_6] : memref<256x512xbf16, #tpu.memory_space<vmem>>, vector<256x512xbf16>
    %cst = arith.constant dense<0.000000e+00> : vector<8x512xf32>
    %5 = tpu.matmul %3, %4, %cst {dimension_numbers = #tpu.dot_dimension_numbers<[1], [0], [0], [1], [0, 0, 1, 1], [], []>} : vector<8x256xbf16>, vector<256x512xbf16>, vector<8x512xf32> -> vector<8x512xf32>
    %6 = vector.broadcast %0 : vector<1x512xf32> to vector<8x512xf32>
    %7 = arith.addf %5, %6 : vector<8x512xf32>
    %cst_7 = arith.constant 0.000000e+00 : f32
    %8 = vector.broadcast %cst_7 : f32 to vector<8x512xf32>
    %9 = arith.maximumf %7, %8 : vector<8x512xf32>
    %10 = arith.truncf %9 : vector<8x512xf32> to vector<8x512xbf16>
    %c0_8 = arith.constant 0 : index
    %c0_9 = arith.constant 0 : index
    %11 = vector.load %arg3[%c0_8, %c0_9] : memref<512x512xbf16, #tpu.memory_space<vmem>>, vector<512x512xbf16>
    %cst_10 = arith.constant dense<0.000000e+00> : vector<8x512xf32>
    %12 = tpu.matmul %10, %11, %cst_10 {dimension_numbers = #tpu.dot_dimension_numbers<[1], [0], [0], [1], [0, 0, 1, 1], [], []>} : vector<8x512xbf16>, vector<512x512xbf16>, vector<8x512xf32> -> vector<8x512xf32>
    %13 = vector.broadcast %1 : vector<1x512xf32> to vector<8x512xf32>
    %14 = arith.addf %12, %13 : vector<8x512xf32>
    %cst_11 = arith.constant 0.000000e+00 : f32
    %15 = vector.broadcast %cst_11 : f32 to vector<8x512xf32>
    %16 = arith.maximumf %14, %15 : vector<8x512xf32>
    %17 = arith.truncf %16 : vector<8x512xf32> to vector<8x512xbf16>
    %c0_12 = arith.constant 0 : index
    %c0_13 = arith.constant 0 : index
    %18 = vector.load %arg4[%c0_12, %c0_13] : memref<512x128xbf16, #tpu.memory_space<vmem>>, vector<512x128xbf16>
    %cst_14 = arith.constant dense<0.000000e+00> : vector<8x128xf32>
    %19 = tpu.matmul %17, %18, %cst_14 {dimension_numbers = #tpu.dot_dimension_numbers<[1], [0], [0], [1], [0, 0, 1, 1], [], []>} : vector<8x512xbf16>, vector<512x128xbf16>, vector<8x128xf32> -> vector<8x128xf32>
    %20 = vector.broadcast %2 : vector<1x128xf32> to vector<8x128xf32>
    %21 = arith.addf %19, %20 : vector<8x128xf32>
    %c0_15 = arith.constant 0 : index
    %c0_16 = arith.constant 0 : index
    %22 = vector.load %arg6[%c0_15, %c0_16] : memref<8x128xf32, #tpu.memory_space<vmem>>, vector<8x128xf32>
    tpu.vector_store %arg6[%c0_15, %c0_16], %21 {strides = array<i32>} : memref<8x128xf32, #tpu.memory_space<vmem>>, vector<8x128xf32>,
    return
  }
  func.func @transform_0(%arg0: i32) -> (i32, i32) {
    %c0_i32 = arith.constant 0 : i32
    %c0_i32_0 = arith.constant 0 : i32
    return %arg0, %c0_i32 : i32, i32
  }
  func.func @transform_1(%arg0: i32) -> (i32, i32) {
    %c0_i32 = arith.constant 0 : i32
    %c0_i32_0 = arith.constant 0 : i32
    %c0_i32_1 = arith.constant 0 : i32
    return %c0_i32, %c0_i32_0 : i32, i32
  }
  func.func @transform_2(%arg0: i32) -> (i32, i32) {
    %c0_i32 = arith.constant 0 : i32
    %c0_i32_0 = arith.constant 0 : i32
    %c0_i32_1 = arith.constant 0 : i32
    return %c0_i32, %c0_i32_0 : i32, i32
  }
  func.func @transform_3(%arg0: i32) -> (i32, i32) {
    %c0_i32 = arith.constant 0 : i32
    %c0_i32_0 = arith.constant 0 : i32
    %c0_i32_1 = arith.constant 0 : i32
    return %c0_i32, %c0_i32_0 : i32, i32
  }
  func.func @transform_4(%arg0: i32) -> (i32, i32) {
    %c0_i32 = arith.constant 0 : i32
    %c0_i32_0 = arith.constant 0 : i32
    %c0_i32_1 = arith.constant 0 : i32
    return %c0_i32, %c0_i32_0 : i32, i32
  }
  func.func @transform_5(%arg0: i32) -> (i32, i32) {
    %c0_i32 = arith.constant 0 : i32
    %c0_i32_0 = arith.constant 0 : i32
    return %arg0, %c0_i32 : i32, i32
  }
}

</mosaic_0001>

<llo_original>
// kernel: tpu_custom_call.1
$region0: #{tpu_custom_call.1}
  #allocation0 [shape = 'u32[]', space=smem, size = 0x4, offset = 0x4, fixed_abs, tag = 'smem constant byte address 0x4 - core index']
  #allocation1 [shape = 'u32[72,128]{1,0:T(1,128)}', space=vmem, size = 0x9000, scoped, tag = 'internal scratch']
  %s0 = inlined_call_operand.hbm [shape: bf16[8,256], index: 0, kind: input, shape index: {}]
  %s1 = inlined_call_operand.hbm [shape: bf16[256,512], index: 1, kind: input, shape index: {}]
  %s2 = inlined_call_operand.hbm [shape: bf16[512,512], index: 2, kind: input, shape index: {}]
  %s3 = inlined_call_operand.hbm [shape: bf16[512,128], index: 3, kind: input, shape index: {}]
  %s4 = inlined_call_operand.hbm [shape: f32[1,1152], index: 4, kind: input, shape index: {}]
  %s5 = inlined_call_operand.hbm [shape: f32[8,128], index: 5, kind: output, shape index: {}]
  %s6 = sld [smem:[#allocation0]]
  $region50: #{tpu_custom_call.1} parent=0
    _
  %s8 = ssub.s32 1, %s6
  %s9 = scalar_select 0, %s8, %s6
  $region1: #{tpu_custom_call.1} parent=0
    #allocation2 [shape = 'u8[4096]{0}', space=vmem, size = 0x1000, scoped, tag = 'input window, operand 0, single buffered']
    #allocation3 [shape = 's32[1]{0}', space=sflag, size = 0x4, scoped, tag = 'scoped memory for tpu_custom_call.1']
    #allocation4 [shape = 's32[1]{0}', space=sflag, size = 0x4, scoped, tag = 'scoped memory for tpu_custom_call.1']
    #allocation5 [shape = 'u8[262144]{0}', space=vmem, size = 0x40000, scoped, tag = 'input window, operand 1, single buffered']
    #allocation6 [shape = 's32[1]{0}', space=sflag, size = 0x4, scoped, tag = 'scoped memory for tpu_custom_call.1']
    #allocation7 [shape = 'u8[524288]{0}', space=vmem, size = 0x80000, scoped, tag = 'input window, operand 2, single buffered']
    #allocation8 [shape = 'u8[131072]{0}', space=vmem, size = 0x20000, scoped, tag = 'input window, operand 3, single buffered']
    #allocation9 [shape = 's32[1]{0}', space=sflag, size = 0x4, scoped, tag = 'scoped memory for tpu_custom_call.1']
    #allocation10 [shape = 'u8[4608]{0}', space=vmem, size = 0x1400, scoped, tag = 'input window, operand 4, single buffered']
    #allocation11 [shape = 'u8[4096]{0}', space=vmem, size = 0x1000, scoped, tag = 'output window, operand 0, single buffered']
    %10 = vsyncpa [#allocation3], 0
    %11 = vsyncpa [#allocation6], 0
    %12 = vsyncpa [#allocation9], 0
    %13 = vsyncpa [#allocation4], 0
    // Predicated region
    $region2: #{tpu_custom_call.1} parent=1 // pred_check
      _
    $region3: #{tpu_custom_call.1} parent=1 // pred_check_branch
      %15 = sbr.rel (0) target = $region5
    $region4: #{tpu_custom_call.1} parent=1 // pred_region
      %17 = vsyncadd [#allocation3], 0
      %s19 = sshll.u32 %s0, 4
      %s20 = int_to_ptr.hbm [resolvable:$true] %s19
      %s21 = sshll.u32 [#allocation2], 4
      %s22 = int_to_ptr.vmem [resolvable:$true] %s21
      %24 = dma.hbm_to_vmem [thread:$0]  %s20, 128, %s22, [#allocation3]
    $region5: #{tpu_custom_call.1} parent=1 // pred_fallthru
      _
    // Predicated region
    $region6: #{tpu_custom_call.1} parent=1 // pred_check
      _
    $region7: #{tpu_custom_call.1} parent=1 // pred_check_branch
      %26 = sbr.rel (0) target = $region9
    $region8: #{tpu_custom_call.1} parent=1 // pred_region
      %28 = vsyncadd [#allocation6], 0
      %s29 = sshll.u32 %s1, 4
      %s30 = int_to_ptr.hbm [resolvable:$true] %s29
      %s31 = sshll.u32 [#allocation5], 4
      %s32 = int_to_ptr.vmem [resolvable:$true] %s31
      %37 = dma.hbm_to_vmem [thread:$0]  %s30, 8192, %s32, [#allocation6], 256, 256, 16
    $region9: #{tpu_custom_call.1} parent=1 // pred_fallthru
      _
    // Predicated region
    $region10: #{tpu_custom_call.1} parent=1 // pred_check
      _
    $region11: #{tpu_custom_call.1} parent=1 // pred_check_branch
      %39 = sbr.rel (0) target = $region13
    $region12: #{tpu_custom_call.1} parent=1 // pred_region
      %41 = vsyncadd [#allocation6], 0
      %s42 = sshll.u32 %s2, 4
      %s43 = int_to_ptr.hbm [resolvable:$true] %s42
      %s44 = sshll.u32 [#allocation7], 4
      %s45 = int_to_ptr.vmem [resolvable:$true] %s44
      %50 = dma.hbm_to_vmem [thread:$0]  %s43, 16384, %s45, [#allocation6], 256, 256, 16
    $region13: #{tpu_custom_call.1} parent=1 // pred_fallthru
      _
    // Predicated region
    $region14: #{tpu_custom_call.1} parent=1 // pred_check
      _
    $region15: #{tpu_custom_call.1} parent=1 // pred_check_branch
      %52 = sbr.rel (0) target = $region17
    $region16: #{tpu_custom_call.1} parent=1 // pred_region
      %54 = vsyncadd [#allocation9], 0
      %s55 = sshll.u32 %s3, 4
      %s56 = int_to_ptr.hbm [resolvable:$true] %s55
      %s57 = sshll.u32 [#allocation8], 4
      %s58 = int_to_ptr.vmem [resolvable:$true] %s57
      %63 = dma.hbm_to_vmem [thread:$0]  %s56, 4096, %s58, [#allocation9], 64, 64, 4
    $region17: #{tpu_custom_call.1} parent=1 // pred_fallthru
      _
    // Predicated region
    $region18: #{tpu_custom_call.1} parent=1 // pred_check
      _
    $region19: #{tpu_custom_call.1} parent=1 // pred_check_branch
      %65 = sbr.rel (0) target = $region21
    $region20: #{tpu_custom_call.1} parent=1 // pred_region
      %67 = vsyncadd [#allocation9], 0
      %s69 = sshll.u32 %s4, 4
      %s70 = int_to_ptr.hbm [resolvable:$true] %s69
      %s71 = sshll.u32 [#allocation10], 4
      %s72 = int_to_ptr.vmem [resolvable:$true] %s71
      %74 = dma.hbm_to_vmem [thread:$0]  %s70, 144, %s72, [#allocation9]
    $region21: #{tpu_custom_call.1} parent=1 // pred_fallthru
      _
    // Predicated region
    $region22: #{tpu_custom_call.1} parent=1 // pred_check
      _
    $region23: #{tpu_custom_call.1} parent=1 // pred_check_branch
      %76 = sbr.rel (0) target = $region25
    $region24: #{tpu_custom_call.1} parent=1 // pred_region
      %78 = dma.done [#allocation3], 128
    $region25: #{tpu_custom_call.1} parent=1 // pred_fallthru
      _
    // Predicated region
    $region26: #{tpu_custom_call.1} parent=1 // pred_check
      _
    $region27: #{tpu_custom_call.1} parent=1 // pred_check_branch
      %80 = sbr.rel (0) target = $region29
    $region28: #{tpu_custom_call.1} parent=1 // pred_region
      %82 = dma.done [#allocation6], 8192
    $region29: #{tpu_custom_call.1} parent=1 // pred_fallthru
      _
    // Predicated region
    $region30: #{tpu_custom_call.1} parent=1 // pred_check
      _
    $region31: #{tpu_custom_call.1} parent=1 // pred_check_branch
      %84 = sbr.rel (0) target = $region33
    $region32: #{tpu_custom_call.1} parent=1 // pred_region
      %86 = dma.done [#allocation6], 16384
    $region33: #{tpu_custom_call.1} parent=1 // pred_fallthru
      _
    // Predicated region
    $region34: #{tpu_custom_call.1} parent=1 // pred_check
      _
    $region35: #{tpu_custom_call.1} parent=1 // pred_check_branch
      %88 = sbr.rel (0) target = $region37
    $region36: #{tpu_custom_call.1} parent=1 // pred_region
      %90 = dma.done [#allocation9], 4096
    $region37: #{tpu_custom_call.1} parent=1 // pred_fallthru
      _
    // Predicated region
    $region38: #{tpu_custom_call.1} parent=1 // pred_check
      _
    $region39: #{tpu_custom_call.1} parent=1 // pred_check_branch
      %92 = sbr.rel (0) target = $region41
    $region40: #{tpu_custom_call.1} parent=1 // pred_region
      %94 = dma.done [#allocation9], 144
    $region41: #{tpu_custom_call.1} parent=1 // pred_fallthru
      _
    %v95 = vld [vmem:[#allocation10] sm:$0xf]
    %v96 = vld [vmem:[#allocation10 + $0x4] sm:$0xf]
    %v97 = vld [vmem:[#allocation10 + $0x8] sm:$0x1]
    %v98 = vld [vmem:[#allocation2] sm:$0xff]
    %v99 = vld [vmem:[#allocation5] sm:$0xff]
    %v100 = vld [vmem:[#allocation5 + $0x8] sm:$0xff]
    %v101 = vld [vmem:[#allocation5 + $0x10] sm:$0xff]
    %v102 = vld [vmem:[#allocation5 + $0x18] sm:$0xff]
    %v103 = vld [vmem:[#allocation5 + $0x20] sm:$0xff]
    %v104 = vld [vmem:[#allocation5 + $0x28] sm:$0xff]
    %v105 = vld [vmem:[#allocation5 + $0x30] sm:$0xff]
    %v106 = vld [vmem:[#allocation5 + $0x38] sm:$0xff]
    %v107 = vld [vmem:[#allocation5 + $0x40] sm:$0xff]
    %v108 = vld [vmem:[#allocation5 + $0x48] sm:$0xff]
    %v109 = vld [vmem:[#allocation5 + $0x50] sm:$0xff]
    %v110 = vld [vmem:[#allocation5 + $0x58] sm:$0xff]
    %v111 = vld [vmem:[#allocation5 + $0x60] sm:$0xff]
    %v112 = vld [vmem:[#allocation5 + $0x68] sm:$0xff]
    %v113 = vld [vmem:[#allocation5 + $0x70] sm:$0xff]
    %v114 = vld [vmem:[#allocation5 + $0x78] sm:$0xff]
    %v115 = vld [vmem:[#allocation5 + $0x80] sm:$0xff]
    %v116 = vld [vmem:[#allocation5 + $0x88] sm:$0xff]
    %v117 = vld [vmem:[#allocation5 + $0x90] sm:$0xff]
    %v118 = vld [vmem:[#allocation5 + $0x98] sm:$0xff]
    %v119 = vld [vmem:[#allocation5 + $0xa0] sm:$0xff]
    %v120 = vld [vmem:[#allocation5 + $0xa8] sm:$0xff]
    %v121 = vld [vmem:[#allocation5 + $0xb0] sm:$0xff]
    %v122 = vld [vmem:[#allocation5 + $0xb8] sm:$0xff]
    %v123 = vld [vmem:[#allocation5 + $0xc0] sm:$0xff]
    %v124 = vld [vmem:[#allocation5 + $0xc8] sm:$0xff]
    %v125 = vld [vmem:[#allocation5 + $0xd0] sm:$0xff]
    %v126 = vld [vmem:[#allocation5 + $0xd8] sm:$0xff]
    %v127 = vld [vmem:[#allocation5 + $0xe0] sm:$0xff]
    %v128 = vld [vmem:[#allocation5 + $0xe8] sm:$0xff]
    %v129 = vld [vmem:[#allocation5 + $0xf0] sm:$0xff]
    %v130 = vld [vmem:[#allocation5 + $0xf8] sm:$0xff]
    %v131 = vld [vmem:[#allocation5 + $0x100] sm:$0xff]
    %v132 = vld [vmem:[#allocation5 + $0x108] sm:$0xff]
    %v133 = vld [vmem:[#allocation5 + $0x110] sm:$0xff]
    %v134 = vld [vmem:[#allocation5 + $0x118] sm:$0xff]
    %v135 = vld [vmem:[#allocation5 + $0x120] sm:$0xff]
    %v136 = vld [vmem:[#allocation5 + $0x128] sm:$0xff]
    %v137 = vld [vmem:[#allocation5 + $0x130] sm:$0xff]
    %v138 = vld [vmem:[#allocation5 + $0x138] sm:$0xff]
    %v139 = vld [vmem:[#allocation5 + $0x140] sm:$0xff]
    %v140 = vld [vmem:[#allocation5 + $0x148] sm:$0xff]
    %v141 = vld [vmem:[#allocation5 + $0x150] sm:$0xff]
    %v142 = vld [vmem:[#allocation5 + $0x158] sm:$0xff]
    %v143 = vld [vmem:[#allocation5 + $0x160] sm:$0xff]
    %v144 = vld [vmem:[#allocation5 + $0x168] sm:$0xff]
    %v145 = vld [vmem:[#allocation5 + $0x170] sm:$0xff]
    %v146 = vld [vmem:[#allocation5 + $0x178] sm:$0xff]
    %v147 = vld [vmem:[#allocation5 + $0x180] sm:$0xff]
    %v148 = vld [vmem:[#allocation5 + $0x188] sm:$0xff]
    %v149 = vld [vmem:[#allocation5 + $0x190] sm:$0xff]
    %v150 = vld [vmem:[#allocation5 + $0x198] sm:$0xff]
    %v151 = vld [vmem:[#allocation5 + $0x1a0] sm:$0xff]
    %v152 = vld [vmem:[#allocation5 + $0x1a8] sm:$0xff]
    %v153 = vld [vmem:[#allocation5 + $0x1b0] sm:$0xff]
    %v154 = vld [vmem:[#allocation5 + $0x1b8] sm:$0xff]
    %v155 = vld [vmem:[#allocation5 + $0x1c0] sm:$0xff]
    %v156 = vld [vmem:[#allocation5 + $0x1c8] sm:$0xff]
    %v157 = vld [vmem:[#allocation5 + $0x1d0] sm:$0xff]
    %v158 = vld [vmem:[#allocation5 + $0x1d8] sm:$0xff]
    %v159 = vld [vmem:[#allocation5 + $0x1e0] sm:$0xff]
    %v160 = vld [vmem:[#allocation5 + $0x1e8] sm:$0xff]
    %v161 = vld [vmem:[#allocation5 + $0x1f0] sm:$0xff]
    %v162 = vld [vmem:[#allocation5 + $0x1f8] sm:$0xff]
    %v164 = vperm.slane %v95, 0
    %v165 = vperm.slane %v95, 1
    %v166 = vperm.slane %v95, 2
    %v167 = vperm.slane %v95, 3
    %v173 = vunpack.c.l.b16 %v98
    %v174 = vunpack.c.h.b16 %v98
    %v175 = vpack.c.b16 %v173, %v173
    %v176 = vpack.c.b16 %v174, %v174
    %v243 = vunpack.c.l.b16 %v99
    %v244 = vunpack.c.h.b16 %v99
    %v245 = vunpack.c.l.b16 %v100
    %v246 = vunpack.c.h.b16 %v100
    %v247 = vunpack.c.l.b16 %v101
    %v248 = vunpack.c.h.b16 %v101
    %v249 = vunpack.c.l.b16 %v102
    %v250 = vunpack.c.h.b16 %v102
    %v251 = vunpack.c.l.b16 %v103
    %v252 = vunpack.c.h.b16 %v103
    %v253 = vunpack.c.l.b16 %v104
    %v254 = vunpack.c.h.b16 %v104
    %v255 = vunpack.c.l.b16 %v105
    %v256 = vunpack.c.h.b16 %v105
    %v257 = vunpack.c.l.b16 %v106
    %v258 = vunpack.c.h.b16 %v106
    %v259 = vunpack.c.l.b16 %v107
    %v260 = vunpack.c.h.b16 %v107
    %v261 = vunpack.c.l.b16 %v108
    %v262 = vunpack.c.h.b16 %v108
    %v263 = vunpack.c.l.b16 %v109
    %v264 = vunpack.c.h.b16 %v109
    %v265 = vunpack.c.l.b16 %v110
    %v266 = vunpack.c.h.b16 %v110
    %v267 = vunpack.c.l.b16 %v111
    %v268 = vunpack.c.h.b16 %v111
    %v269 = vunpack.c.l.b16 %v112
    %v270 = vunpack.c.h.b16 %v112
    %v271 = vunpack.c.l.b16 %v113
    %v272 = vunpack.c.h.b16 %v113
    %v273 = vunpack.c.l.b16 %v114
    %v274 = vunpack.c.h.b16 %v114
    %v275 = vunpack.c.l.b16 %v115
    %v276 = vunpack.c.h.b16 %v115
    %v277 = vunpack.c.l.b16 %v116
    %v278 = vunpack.c.h.b16 %v116
    %v279 = vunpack.c.l.b16 %v117
    %v280 = vunpack.c.h.b16 %v117
    %v281 = vunpack.c.l.b16 %v118
    %v282 = vunpack.c.h.b16 %v118
    %v283 = vunpack.c.l.b16 %v119
    %v284 = vunpack.c.h.b16 %v119
    %v285 = vunpack.c.l.b16 %v120
    %v286 = vunpack.c.h.b16 %v120
    %v287 = vunpack.c.l.b16 %v121
    %v288 = vunpack.c.h.b16 %v121
    %v289 = vunpack.c.l.b16 %v122
    %v290 = vunpack.c.h.b16 %v122
    %v291 = vunpack.c.l.b16 %v123
    %v292 = vunpack.c.h.b16 %v123
    %v293 = vunpack.c.l.b16 %v124
    %v294 = vunpack.c.h.b16 %v124
    %v295 = vunpack.c.l.b16 %v125
    %v296 = vunpack.c.h.b16 %v125
    %v297 = vunpack.c.l.b16 %v126
    %v298 = vunpack.c.h.b16 %v126
    %v299 = vunpack.c.l.b16 %v127
    %v300 = vunpack.c.h.b16 %v127
    %v301 = vunpack.c.l.b16 %v128
    %v302 = vunpack.c.h.b16 %v128
    %v303 = vunpack.c.l.b16 %v129
    %v304 = vunpack.c.h.b16 %v129
    %v305 = vunpack.c.l.b16 %v130
    %v306 = vunpack.c.h.b16 %v130
    %v307 = vunpack.c.l.b16 %v131
    %v308 = vunpack.c.h.b16 %v131
    %v309 = vunpack.c.l.b16 %v132
    %v310 = vunpack.c.h.b16 %v132
    %v311 = vunpack.c.l.b16 %v133
    %v312 = vunpack.c.h.b16 %v133
    %v313 = vunpack.c.l.b16 %v134
    %v314 = vunpack.c.h.b16 %v134
    %v315 = vunpack.c.l.b16 %v135
    %v316 = vunpack.c.h.b16 %v135
    %v317 = vunpack.c.l.b16 %v136
    %v318 = vunpack.c.h.b16 %v136
    %v319 = vunpack.c.l.b16 %v137
    %v320 = vunpack.c.h.b16 %v137
    %v321 = vunpack.c.l.b16 %v138
    %v322 = vunpack.c.h.b16 %v138
    %v323 = vunpack.c.l.b16 %v139
    %v324 = vunpack.c.h.b16 %v139
    %v325 = vunpack.c.l.b16 %v140
    %v326 = vunpack.c.h.b16 %v140
    %v327 = vunpack.c.l.b16 %v141
    %v328 = vunpack.c.h.b16 %v141
    %v329 = vunpack.c.l.b16 %v142
    %v330 = vunpack.c.h.b16 %v142
    %v331 = vunpack.c.l.b16 %v143
    %v332 = vunpack.c.h.b16 %v143
    %v333 = vunpack.c.l.b16 %v144
    %v334 = vunpack.c.h.b16 %v144
    %v335 = vunpack.c.l.b16 %v145
    %v336 = vunpack.c.h.b16 %v145
    %v337 = vunpack.c.l.b16 %v146
    %v338 = vunpack.c.h.b16 %v146
    %v339 = vunpack.c.l.b16 %v147
    %v340 = vunpack.c.h.b16 %v147
    %v341 = vunpack.c.l.b16 %v148
    %v342 = vunpack.c.h.b16 %v148
    %v343 = vunpack.c.l.b16 %v149
    %v344 = vunpack.c.h.b16 %v149
    %v345 = vunpack.c.l.b16 %v150
    %v346 = vunpack.c.h.b16 %v150
    %v347 = vunpack.c.l.b16 %v151
    %v348 = vunpack.c.h.b16 %v151
    %v349 = vunpack.c.l.b16 %v152
    %v350 = vunpack.c.h.b16 %v152
    %v351 = vunpack.c.l.b16 %v153
    %v352 = vunpack.c.h.b16 %v153
    %v353 = vunpack.c.l.b16 %v154
    %v354 = vunpack.c.h.b16 %v154
    %v355 = vunpack.c.l.b16 %v155
    %v356 = vunpack.c.h.b16 %v155
    %v357 = vunpack.c.l.b16 %v156
    %v358 = vunpack.c.h.b16 %v156
    %v359 = vunpack.c.l.b16 %v157
    %v360 = vunpack.c.h.b16 %v157
    %v361 = vunpack.c.l.b16 %v158
    %v362 = vunpack.c.h.b16 %v158
    %v363 = vunpack.c.l.b16 %v159
    %v364 = vunpack.c.h.b16 %v159
    %v365 = vunpack.c.l.b16 %v160
    %v366 = vunpack.c.h.b16 %v160
    %v367 = vunpack.c.l.b16 %v161
    %v368 = vunpack.c.h.b16 %v161
    %v369 = vunpack.c.l.b16 %v162
    %v370 = vunpack.c.h.b16 %v162
    %v371 = vpack.c.b16 %v247, %v243
    %v372 = vpack.c.b16 %v248, %v244
    %v373 = vpack.c.b16 %v249, %v245
    %v374 = vpack.c.b16 %v250, %v246
    %v375 = vpack.c.b16 %v255, %v251
    %v376 = vpack.c.b16 %v256, %v252
    %v377 = vpack.c.b16 %v257, %v253
    %v378 = vpack.c.b16 %v258, %v254
    %v379 = vpack.c.b16 %v263, %v259
    %v380 = vpack.c.b16 %v264, %v260
    %v381 = vpack.c.b16 %v265, %v261
    %v382 = vpack.c.b16 %v266, %v262
    %v383 = vpack.c.b16 %v271, %v267
    %v384 = vpack.c.b16 %v272, %v268
    %v385 = vpack.c.b16 %v273, %v269
    %v386 = vpack.c.b16 %v274, %v270
    %v387 = vpack.c.b16 %v279, %v275
    %v388 = vpack.c.b16 %v280, %v276
    %v389 = vpack.c.b16 %v281, %v277
    %v390 = vpack.c.b16 %v282, %v278
    %v391 = vpack.c.b16 %v287, %v283
    %v392 = vpack.c.b16 %v288, %v284
    %v393 = vpack.c.b16 %v289, %v285
    %v394 = vpack.c.b16 %v290, %v286
    %v395 = vpack.c.b16 %v295, %v291
    %v396 = vpack.c.b16 %v296, %v292
    %v397 = vpack.c.b16 %v297, %v293
    %v398 = vpack.c.b16 %v298, %v294
    %v399 = vpack.c.b16 %v303, %v299
    %v400 = vpack.c.b16 %v304, %v300
    %v401 = vpack.c.b16 %v305, %v301
    %v402 = vpack.c.b16 %v306, %v302
    %v403 = vpack.c.b16 %v311, %v307
    %v404 = vpack.c.b16 %v312, %v308
    %v405 = vpack.c.b16 %v313, %v309
    %v406 = vpack.c.b16 %v314, %v310
    %v407 = vpack.c.b16 %v319, %v315
    %v408 = vpack.c.b16 %v320, %v316
    %v409 = vpack.c.b16 %v321, %v317
    %v410 = vpack.c.b16 %v322, %v318
    %v411 = vpack.c.b16 %v327, %v323
    %v412 = vpack.c.b16 %v328, %v324
    %v413 = vpack.c.b16 %v329, %v325
    %v414 = vpack.c.b16 %v330, %v326
    %v415 = vpack.c.b16 %v335, %v331
    %v416 = vpack.c.b16 %v336, %v332
    %v417 = vpack.c.b16 %v337, %v333
    %v418 = vpack.c.b16 %v338, %v334
    %v419 = vpack.c.b16 %v343, %v339
    %v420 = vpack.c.b16 %v344, %v340
    %v421 = vpack.c.b16 %v345, %v341
    %v422 = vpack.c.b16 %v346, %v342
    %v423 = vpack.c.b16 %v351, %v347
    %v424 = vpack.c.b16 %v352, %v348
    %v425 = vpack.c.b16 %v353, %v349
    %v426 = vpack.c.b16 %v354, %v350
    %v427 = vpack.c.b16 %v359, %v355
    %v428 = vpack.c.b16 %v360, %v356
    %v429 = vpack.c.b16 %v361, %v357
    %v430 = vpack.c.b16 %v362, %v358
    %v431 = vpack.c.b16 %v367, %v363
    %v432 = vpack.c.b16 %v368, %v364
    %v433 = vpack.c.b16 %v369, %v365
    %v434 = vpack.c.b16 %v370, %v366
    %499 = vmatpush.bf16.msra.mxu0 %v399
    %500 = vmatpush.bf16.msra.mxu0 %v395
    %501 = vmatpush.bf16.msra.mxu0 %v391
    %502 = vmatpush.bf16.msra.mxu0 %v387
    %503 = vmatpush.bf16.msra.mxu0 %v383
    %504 = vmatpush.bf16.msra.mxu0 %v379
    %505 = vmatpush.bf16.msra.mxu0 %v375
    %506 = vmatpush.bf16.msra.mxu0 %v371
    %507 = vmatmul.bf16.gmra.mxu0 %v175
    %v508 = vpop.f32.mrf.mxu0
    %v509 = vadd.f32 %v164, %v508
    %v510 = vpop.f32.mrf.mxu0
    %511 = vdwg.mxu0
    %512 = vmatpush.bf16.msra.mxu0 %v431
    %513 = vmatpush.bf16.msra.mxu0 %v427
    %514 = vmatpush.bf16.msra.mxu0 %v423
    %515 = vmatpush.bf16.msra.mxu0 %v419
    %516 = vmatpush.bf16.msra.mxu0 %v415
    %517 = vmatpush.bf16.msra.mxu0 %v411
    %518 = vmatpush.bf16.msra.mxu0 %v407
    %519 = vmatpush.bf16.msra.mxu0 %v403
    %520 = vmatmul.bf16.gmra.mxu0 %v176
    %v521 = vpop.f32.mrf.mxu0
    %v522 = vadd.f32 %v509, %v521
    %v523 = vpop.f32.mrf.mxu0
    %524 = vdwg.mxu0
    %525 = vmatpush.bf16.msra.mxu0 %v400
    %526 = vmatpush.bf16.msra.mxu0 %v396
    %527 = vmatpush.bf16.msra.mxu0 %v392
    %528 = vmatpush.bf16.msra.mxu0 %v388
    %529 = vmatpush.bf16.msra.mxu0 %v384
    %530 = vmatpush.bf16.msra.mxu0 %v380
    %531 = vmatpush.bf16.msra.mxu0 %v376
    %532 = vmatpush.bf16.msra.mxu0 %v372
    %533 = vmatmul.bf16.gmra.mxu0 %v175
    %v534 = vpop.f32.mrf.mxu0
    %v535 = vadd.f32 %v165, %v534
    %v536 = vpop.f32.mrf.mxu0
    %537 = vdwg.mxu0
    %538 = vmatpush.bf16.msra.mxu0 %v432
    %539 = vmatpush.bf16.msra.mxu0 %v428
    %540 = vmatpush.bf16.msra.mxu0 %v424
    %541 = vmatpush.bf16.msra.mxu0 %v420
    %542 = vmatpush.bf16.msra.mxu0 %v416
    %543 = vmatpush.bf16.msra.mxu0 %v412
    %544 = vmatpush.bf16.msra.mxu0 %v408
    %545 = vmatpush.bf16.msra.mxu0 %v404
    %546 = vmatmul.bf16.gmra.mxu0 %v176
    %v547 = vpop.f32.mrf.mxu0
    %v548 = vadd.f32 %v535, %v547
    %v549 = vpop.f32.mrf.mxu0
    %550 = vdwg.mxu0
    %551 = vmatpush.bf16.msra.mxu0 %v401
    %552 = vmatpush.bf16.msra.mxu0 %v397
    %553 = vmatpush.bf16.msra.mxu0 %v393
    %554 = vmatpush.bf16.msra.mxu0 %v389
    %555 = vmatpush.bf16.msra.mxu0 %v385
    %556 = vmatpush.bf16.msra.mxu0 %v381
    %557 = vmatpush.bf16.msra.mxu0 %v377
    %558 = vmatpush.bf16.msra.mxu0 %v373
    %559 = vmatmul.bf16.gmra.mxu0 %v175
    %v560 = vpop.f32.mrf.mxu0
    %v561 = vadd.f32 %v166, %v560
    %v562 = vpop.f32.mrf.mxu0
    %563 = vdwg.mxu0
    %564 = vmatpush.bf16.msra.mxu0 %v433
    %565 = vmatpush.bf16.msra.mxu0 %v429
    %566 = vmatpush.bf16.msra.mxu0 %v425
    %567 = vmatpush.bf16.msra.mxu0 %v421
    %568 = vmatpush.bf16.msra.mxu0 %v417
    %569 = vmatpush.bf16.msra.mxu0 %v413
    %570 = vmatpush.bf16.msra.mxu0 %v409
    %571 = vmatpush.bf16.msra.mxu0 %v405
    %572 = vmatmul.bf16.gmra.mxu0 %v176
    %v573 = vpop.f32.mrf.mxu0
    %v574 = vadd.f32 %v561, %v573
    %v575 = vpop.f32.mrf.mxu0
    %576 = vdwg.mxu0
    %577 = vmatpush.bf16.msra.mxu0 %v402
    %578 = vmatpush.bf16.msra.mxu0 %v398
    %579 = vmatpush.bf16.msra.mxu0 %v394
    %580 = vmatpush.bf16.msra.mxu0 %v390
    %581 = vmatpush.bf16.msra.mxu0 %v386
    %582 = vmatpush.bf16.msra.mxu0 %v382
    %583 = vmatpush.bf16.msra.mxu0 %v378
    %584 = vmatpush.bf16.msra.mxu0 %v374
    %585 = vmatmul.bf16.gmra.mxu0 %v175
    %v586 = vpop.f32.mrf.mxu0
    %v587 = vadd.f32 %v167, %v586
    %v588 = vpop.f32.mrf.mxu0
    %589 = vdwg.mxu0
    %590 = vmatpush.bf16.msra.mxu0 %v434
    %591 = vmatpush.bf16.msra.mxu0 %v430
    %592 = vmatpush.bf16.msra.mxu0 %v426
    %593 = vmatpush.bf16.msra.mxu0 %v422
    %594 = vmatpush.bf16.msra.mxu0 %v418
    %595 = vmatpush.bf16.msra.mxu0 %v414
    %596 = vmatpush.bf16.msra.mxu0 %v410
    %597 = vmatpush.bf16.msra.mxu0 %v406
    %598 = vmatmul.bf16.gmra.mxu0 %v176
    %v599 = vpop.f32.mrf.mxu0
    %v600 = vadd.f32 %v587, %v599
    %v601 = vpop.f32.mrf.mxu0
    %602 = vdwg.mxu0
    %v603 = vmax.f32 %v522, 0.0
    %v604 = vmax.f32 %v548, 0.0
    %v605 = vmax.f32 %v574, 0.0
    %v606 = vmax.f32 %v600, 0.0
    %v607 = vpack.c.bf16 %v603, %v603
    %v608 = vpack.c.bf16 %v604, %v604
    %v609 = vpack.c.bf16 %v605, %v605
    %v610 = vpack.c.bf16 %v606, %v606
    %v611 = vld [vmem:[#allocation7] sm:$0xff]
    %v612 = vld [vmem:[#allocation7 + $0x8] sm:$0xff]
    %v613 = vld [vmem:[#allocation7 + $0x10] sm:$0xff]
    %v614 = vld [vmem:[#allocation7 + $0x18] sm:$0xff]
    %v615 = vld [vmem:[#allocation7 + $0x20] sm:$0xff]
    %v616 = vld [vmem:[#allocation7 + $0x28] sm:$0xff]
    %v617 = vld [vmem:[#allocation7 + $0x30] sm:$0xff]
    %v618 = vld [vmem:[#allocation7 + $0x38] sm:$0xff]
    %v619 = vld [vmem:[#allocation7 + $0x40] sm:$0xff]
    %v620 = vld [vmem:[#allocation7 + $0x48] sm:$0xff]
    %v621 = vld [vmem:[#allocation7 + $0x50] sm:$0xff]
    %v622 = vld [vmem:[#allocation7 + $0x58] sm:$0xff]
    %v623 = vld [vmem:[#allocation7 + $0x60] sm:$0xff]
    %v624 = vld [vmem:[#allocation7 + $0x68] sm:$0xff]
    %v625 = vld [vmem:[#allocation7 + $0x70] sm:$0xff]
    %v626 = vld [vmem:[#allocation7 + $0x78] sm:$0xff]
    %v627 = vld [vmem:[#allocation7 + $0x80] sm:$0xff]
    %v628 = vld [vmem:[#allocation7 + $0x88] sm:$0xff]
    %v629 = vld [vmem:[#allocation7 + $0x90] sm:$0xff]
    %v630 = vld [vmem:[#allocation7 + $0x98] sm:$0xff]
    %v631 = vld [vmem:[#allocation7 + $0xa0] sm:$0xff]
    %v632 = vld [vmem:[#allocation7 + $0xa8] sm:$0xff]
    %v633 = vld [vmem:[#allocation7 + $0xb0] sm:$0xff]
    %v634 = vld [vmem:[#allocation7 + $0xb8] sm:$0xff]
    %v635 = vld [vmem:[#allocation7 + $0xc0] sm:$0xff]
    %v636 = vld [vmem:[#allocation7 + $0xc8] sm:$0xff]
    %v637 = vld [vmem:[#allocation7 + $0xd0] sm:$0xff]
    %v638 = vld [vmem:[#allocation7 + $0xd8] sm:$0xff]
    %v639 = vld [vmem:[#allocation7 + $0xe0] sm:$0xff]
    %v640 = vld [vmem:[#allocation7 + $0xe8] sm:$0xff]
    %v641 = vld [vmem:[#allocation7 + $0xf0] sm:$0xff]
    %v642 = vld [vmem:[#allocation7 + $0xf8] sm:$0xff]
    %v643 = vld [vmem:[#allocation7 + $0x100] sm:$0xff]
    %v644 = vld [vmem:[#allocation7 + $0x108] sm:$0xff]
    %v645 = vld [vmem:[#allocation7 + $0x110] sm:$0xff]
    %v646 = vld [vmem:[#allocation7 + $0x118] sm:$0xff]
    %v647 = vld [vmem:[#allocation7 + $0x120] sm:$0xff]
    %v648 = vld [vmem:[#allocation7 + $0x128] sm:$0xff]
    %v649 = vld [vmem:[#allocation7 + $0x130] sm:$0xff]
    %v650 = vld [vmem:[#allocation7 + $0x138] sm:$0xff]
    %v651 = vld [vmem:[#allocation7 + $0x140] sm:$0xff]
    %v652 = vld [vmem:[#allocation7 + $0x148] sm:$0xff]
    %v653 = vld [vmem:[#allocation7 + $0x150] sm:$0xff]
    %v654 = vld [vmem:[#allocation7 + $0x158] sm:$0xff]
    %v655 = vld [vmem:[#allocation7 + $0x160] sm:$0xff]
    %v656 = vld [vmem:[#allocation7 + $0x168] sm:$0xff]
    %v657 = vld [vmem:[#allocation7 + $0x170] sm:$0xff]
    %v658 = vld [vmem:[#allocation7 + $0x178] sm:$0xff]
    %v659 = vld [vmem:[#allocation7 + $0x180] sm:$0xff]
    %v660 = vld [vmem:[#allocation7 + $0x188] sm:$0xff]
    %v661 = vld [vmem:[#allocation7 + $0x190] sm:$0xff]
    %v662 = vld [vmem:[#allocation7 + $0x198] sm:$0xff]
    %v663 = vld [vmem:[#allocation7 + $0x1a0] sm:$0xff]
    %v664 = vld [vmem:[#allocation7 + $0x1a8] sm:$0xff]
    %v665 = vld [vmem:[#allocation7 + $0x1b0] sm:$0xff]
    %v666 = vld [vmem:[#allocation7 + $0x1b8] sm:$0xff]
    %v667 = vld [vmem:[#allocation7 + $0x1c0] sm:$0xff]
    %v668 = vld [vmem:[#allocation7 + $0x1c8] sm:$0xff]
    %v669 = vld [vmem:[#allocation7 + $0x1d0] sm:$0xff]
    %v670 = vld [vmem:[#allocation7 + $0x1d8] sm:$0xff]
    %v671 = vld [vmem:[#allocation7 + $0x1e0] sm:$0xff]
    %v672 = vld [vmem:[#allocation7 + $0x1e8] sm:$0xff]
    %v673 = vld [vmem:[#allocation7 + $0x1f0] sm:$0xff]
    %v674 = vld [vmem:[#allocation7 + $0x1f8] sm:$0xff]
    %v675 = vld [vmem:[#allocation7 + $0x200] sm:$0xff]
    %v676 = vld [vmem:[#allocation7 + $0x208] sm:$0xff]
    %v677 = vld [vmem:[#allocation7 + $0x210] sm:$0xff]
    %v678 = vld [vmem:[#allocation7 + $0x218] sm:$0xff]
    %v679 = vld [vmem:[#allocation7 + $0x220] sm:$0xff]
    %v680 = vld [vmem:[#allocation7 + $0x228] sm:$0xff]
    %v681 = vld [vmem:[#allocation7 + $0x230] sm:$0xff]
    %v682 = vld [vmem:[#allocation7 + $0x238] sm:$0xff]
    %v683 = vld [vmem:[#allocation7 + $0x240] sm:$0xff]
    %v684 = vld [vmem:[#allocation7 + $0x248] sm:$0xff]
    %v685 = vld [vmem:[#allocation7 + $0x250] sm:$0xff]
    %v686 = vld [vmem:[#allocation7 + $0x258] sm:$0xff]
    %v687 = vld [vmem:[#allocation7 + $0x260] sm:$0xff]
    %v688 = vld [vmem:[#allocation7 + $0x268] sm:$0xff]
    %v689 = vld [vmem:[#allocation7 + $0x270] sm:$0xff]
    %v690 = vld [vmem:[#allocation7 + $0x278] sm:$0xff]
    %v691 = vld [vmem:[#allocation7 + $0x280] sm:$0xff]
    %v692 = vld [vmem:[#allocation7 + $0x288] sm:$0xff]
    %v693 = vld [vmem:[#allocation7 + $0x290] sm:$0xff]
    %v694 = vld [vmem:[#allocation7 + $0x298] sm:$0xff]
    %v695 = vld [vmem:[#allocation7 + $0x2a0] sm:$0xff]
    %v696 = vld [vmem:[#allocation7 + $0x2a8] sm:$0xff]
    %v697 = vld [vmem:[#allocation7 + $0x2b0] sm:$0xff]
    %v698 = vld [vmem:[#allocation7 + $0x2b8] sm:$0xff]
    %v699 = vld [vmem:[#allocation7 + $0x2c0] sm:$0xff]
    %v700 = vld [vmem:[#allocation7 + $0x2c8] sm:$0xff]
    %v701 = vld [vmem:[#allocation7 + $0x2d0] sm:$0xff]
    %v702 = vld [vmem:[#allocation7 + $0x2d8] sm:$0xff]
    %v703 = vld [vmem:[#allocation7 + $0x2e0] sm:$0xff]
    %v704 = vld [vmem:[#allocation7 + $0x2e8] sm:$0xff]
    %v705 = vld [vmem:[#allocation7 + $0x2f0] sm:$0xff]
    %v706 = vld [vmem:[#allocation7 + $0x2f8] sm:$0xff]
    %v707 = vld [vmem:[#allocation7 + $0x300] sm:$0xff]
    %v708 = vld [vmem:[#allocation7 + $0x308] sm:$0xff]
    %v709 = vld [vmem:[#allocation7 + $0x310] sm:$0xff]
    %v710 = vld [vmem:[#allocation7 + $0x318] sm:$0xff]
    %v711 = vld [vmem:[#allocation7 + $0x320] sm:$0xff]
    %v712 = vld [vmem:[#allocation7 + $0x328] sm:$0xff]
    %v713 = vld [vmem:[#allocation7 + $0x330] sm:$0xff]
    %v714 = vld [vmem:[#allocation7 + $0x338] sm:$0xff]
    %v715 = vld [vmem:[#allocation7 + $0x340] sm:$0xff]
    %v716 = vld [vmem:[#allocation7 + $0x348] sm:$0xff]
    %v717 = vld [vmem:[#allocation7 + $0x350] sm:$0xff]
    %v718 = vld [vmem:[#allocation7 + $0x358] sm:$0xff]
    %v719 = vld [vmem:[#allocation7 + $0x360] sm:$0xff]
    %v720 = vld [vmem:[#allocation7 + $0x368] sm:$0xff]
    %v721 = vld [vmem:[#allocation7 + $0x370] sm:$0xff]
    %v722 = vld [vmem:[#allocation7 + $0x378] sm:$0xff]
    %v723 = vld [vmem:[#allocation7 + $0x380] sm:$0xff]
    %v724 = vld [vmem:[#allocation7 + $0x388] sm:$0xff]
    %v725 = vld [vmem:[#allocation7 + $0x390] sm:$0xff]
    %v726 = vld [vmem:[#allocation7 + $0x398] sm:$0xff]
    %v727 = vld [vmem:[#allocation7 + $0x3a0] sm:$0xff]
    %v728 = vld [vmem:[#allocation7 + $0x3a8] sm:$0xff]
    %v729 = vld [vmem:[#allocation7 + $0x3b0] sm:$0xff]
    %v730 = vld [vmem:[#allocation7 + $0x3b8] sm:$0xff]
    %v731 = vld [vmem:[#allocation7 + $0x3c0] sm:$0xff]
    %v732 = vld [vmem:[#allocation7 + $0x3c8] sm:$0xff]
    %v733 = vld [vmem:[#allocation7 + $0x3d0] sm:$0xff]
    %v734 = vld [vmem:[#allocation7 + $0x3d8] sm:$0xff]
    %v735 = vld [vmem:[#allocation7 + $0x3e0] sm:$0xff]
    %v736 = vld [vmem:[#allocation7 + $0x3e8] sm:$0xff]
    %v737 = vld [vmem:[#allocation7 + $0x3f0] sm:$0xff]
    %v738 = vld [vmem:[#allocation7 + $0x3f8] sm:$0xff]
    %v740 = vperm.slane %v96, 0
    %v741 = vperm.slane %v96, 1
    %v742 = vperm.slane %v96, 2
    %v743 = vperm.slane %v96, 3
    %v876 = vunpack.c.l.b16 %v611
    %v877 = vunpack.c.h.b16 %v611
    %v878 = vunpack.c.l.b16 %v612
    %v879 = vunpack.c.h.b16 %v612
    %v880 = vunpack.c.l.b16 %v613
    %v881 = vunpack.c.h.b16 %v613
    %v882 = vunpack.c.l.b16 %v614
    %v883 = vunpack.c.h.b16 %v614
    %v884 = vunpack.c.l.b16 %v615
    %v885 = vunpack.c.h.b16 %v615
    %v886 = vunpack.c.l.b16 %v616
    %v887 = vunpack.c.h.b16 %v616
    %v888 = vunpack.c.l.b16 %v617
    %v889 = vunpack.c.h.b16 %v617
    %v890 = vunpack.c.l.b16 %v618
    %v891 = vunpack.c.h.b16 %v618
    %v892 = vunpack.c.l.b16 %v619
    %v893 = vunpack.c.h.b16 %v619
    %v894 = vunpack.c.l.b16 %v620
    %v895 = vunpack.c.h.b16 %v620
    %v896 = vunpack.c.l.b16 %v621
    %v897 = vunpack.c.h.b16 %v621
    %v898 = vunpack.c.l.b16 %v622
    %v899 = vunpack.c.h.b16 %v622
    %v900 = vunpack.c.l.b16 %v623
    %v901 = vunpack.c.h.b16 %v623
    %v902 = vunpack.c.l.b16 %v624
    %v903 = vunpack.c.h.b16 %v624
    %v904 = vunpack.c.l.b16 %v625
    %v905 = vunpack.c.h.b16 %v625
    %v906 = vunpack.c.l.b16 %v626
    %v907 = vunpack.c.h.b16 %v626
    %v908 = vunpack.c.l.b16 %v627
    %v909 = vunpack.c.h.b16 %v627
    %v910 = vunpack.c.l.b16 %v628
    %v911 = vunpack.c.h.b16 %v628
    %v912 = vunpack.c.l.b16 %v629
    %v913 = vunpack.c.h.b16 %v629
    %v914 = vunpack.c.l.b16 %v630
    %v915 = vunpack.c.h.b16 %v630
    %v916 = vunpack.c.l.b16 %v631
    %v917 = vunpack.c.h.b16 %v631
    %v918 = vunpack.c.l.b16 %v632
    %v919 = vunpack.c.h.b16 %v632
    %v920 = vunpack.c.l.b16 %v633
    %v921 = vunpack.c.h.b16 %v633
    %v922 = vunpack.c.l.b16 %v634
    %v923 = vunpack.c.h.b16 %v634
    %v924 = vunpack.c.l.b16 %v635
    %v925 = vunpack.c.h.b16 %v635
    %v926 = vunpack.c.l.b16 %v636
    %v927 = vunpack.c.h.b16 %v636
    %v928 = vunpack.c.l.b16 %v637
    %v929 = vunpack.c.h.b16 %v637
    %v930 = vunpack.c.l.b16 %v638
    %v931 = vunpack.c.h.b16 %v638
    %v932 = vunpack.c.l.b16 %v639
    %v933 = vunpack.c.h.b16 %v639
    %v934 = vunpack.c.l.b16 %v640
    %v935 = vunpack.c.h.b16 %v640
    %v936 = vunpack.c.l.b16 %v641
    %v937 = vunpack.c.h.b16 %v641
    %v938 = vunpack.c.l.b16 %v642
    %v939 = vunpack.c.h.b16 %v642
    %v940 = vunpack.c.l.b16 %v643
    %v941 = vunpack.c.h.b16 %v643
    %v942 = vunpack.c.l.b16 %v644
    %v943 = vunpack.c.h.b16 %v644
    %v944 = vunpack.c.l.b16 %v645
    %v945 = vunpack.c.h.b16 %v645
    %v946 = vunpack.c.l.b16 %v646
    %v947 = vunpack.c.h.b16 %v646
    %v948 = vunpack.c.l.b16 %v647
    %v949 = vunpack.c.h.b16 %v647
    %v950 = vunpack.c.l.b16 %v648
    %v951 = vunpack.c.h.b16 %v648
    %v952 = vunpack.c.l.b16 %v649
    %v953 = vunpack.c.h.b16 %v649
    %v954 = vunpack.c.l.b16 %v650
    %v955 = vunpack.c.h.b16 %v650
    %v956 = vunpack.c.l.b16 %v651
    %v957 = vunpack.c.h.b16 %v651
    %v958 = vunpack.c.l.b16 %v652
    %v959 = vunpack.c.h.b16 %v652
    %v960 = vunpack.c.l.b16 %v653
    %v961 = vunpack.c.h.b16 %v653
    %v962 = vunpack.c.l.b16 %v654
    %v963 = vunpack.c.h.b16 %v654
    %v964 = vunpack.c.l.b16 %v655
    %v965 = vunpack.c.h.b16 %v655
    %v966 = vunpack.c.l.b16 %v656
    %v967 = vunpack.c.h.b16 %v656
    %v968 = vunpack.c.l.b16 %v657
    %v969 = vunpack.c.h.b16 %v657
    %v970 = vunpack.c.l.b16 %v658
    %v971 = vunpack.c.h.b16 %v658
    %v972 = vunpack.c.l.b16 %v659
    %v973 = vunpack.c.h.b16 %v659
    %v974 = vunpack.c.l.b16 %v660
    %v975 = vunpack.c.h.b16 %v660
    %v976 = vunpack.c.l.b16 %v661
    %v977 = vunpack.c.h.b16 %v661
    %v978 = vunpack.c.l.b16 %v662
    %v979 = vunpack.c.h.b16 %v662
    %v980 = vunpack.c.l.b16 %v663
    %v981 = vunpack.c.h.b16 %v663
    %v982 = vunpack.c.l.b16 %v664
    %v983 = vunpack.c.h.b16 %v664
    %v984 = vunpack.c.l.b16 %v665
    %v985 = vunpack.c.h.b16 %v665
    %v986 = vunpack.c.l.b16 %v666
    %v987 = vunpack.c.h.b16 %v666
    %v988 = vunpack.c.l.b16 %v667
    %v989 = vunpack.c.h.b16 %v667
    %v990 = vunpack.c.l.b16 %v668
    %v991 = vunpack.c.h.b16 %v668
    %v992 = vunpack.c.l.b16 %v669
    %v993 = vunpack.c.h.b16 %v669
    %v994 = vunpack.c.l.b16 %v670
    %v995 = vunpack.c.h.b16 %v670
    %v996 = vunpack.c.l.b16 %v671
    %v997 = vunpack.c.h.b16 %v671
    %v998 = vunpack.c.l.b16 %v672
    %v999 = vunpack.c.h.b16 %v672
    %v1000 = vunpack.c.l.b16 %v673
    %v1001 = vunpack.c.h.b16 %v673
    %v1002 = vunpack.c.l.b16 %v674
    %v1003 = vunpack.c.h.b16 %v674
    %v1004 = vunpack.c.l.b16 %v675
    %v1005 = vunpack.c.h.b16 %v675
    %v1006 = vunpack.c.l.b16 %v676
    %v1007 = vunpack.c.h.b16 %v676
    %v1008 = vunpack.c.l.b16 %v677
    %v1009 = vunpack.c.h.b16 %v677
    %v1010 = vunpack.c.l.b16 %v678
    %v1011 = vunpack.c.h.b16 %v678
    %v1012 = vunpack.c.l.b16 %v679
    %v1013 = vunpack.c.h.b16 %v679
    %v1014 = vunpack.c.l.b16 %v680
    %v1015 = vunpack.c.h.b16 %v680
    %v1016 = vunpack.c.l.b16 %v681
    %v1017 = vunpack.c.h.b16 %v681
    %v1018 = vunpack.c.l.b16 %v682
    %v1019 = vunpack.c.h.b16 %v682
    %v1020 = vunpack.c.l.b16 %v683
    %v1021 = vunpack.c.h.b16 %v683
    %v1022 = vunpack.c.l.b16 %v684
    %v1023 = vunpack.c.h.b16 %v684
    %v1024 = vunpack.c.l.b16 %v685
    %v1025 = vunpack.c.h.b16 %v685
    %v1026 = vunpack.c.l.b16 %v686
    %v1027 = vunpack.c.h.b16 %v686
    %v1028 = vunpack.c.l.b16 %v687
    %v1029 = vunpack.c.h.b16 %v687
    %v1030 = vunpack.c.l.b16 %v688
    %v1031 = vunpack.c.h.b16 %v688
    %v1032 = vunpack.c.l.b16 %v689
    %v1033 = vunpack.c.h.b16 %v689
    %v1034 = vunpack.c.l.b16 %v690
    %v1035 = vunpack.c.h.b16 %v690
    %v1036 = vunpack.c.l.b16 %v691
    %v1037 = vunpack.c.h.b16 %v691
    %v1038 = vunpack.c.l.b16 %v692
    %v1039 = vunpack.c.h.b16 %v692
    %v1040 = vunpack.c.l.b16 %v693
    %v1041 = vunpack.c.h.b16 %v693
    %v1042 = vunpack.c.l.b16 %v694
    %v1043 = vunpack.c.h.b16 %v694
    %v1044 = vunpack.c.l.b16 %v695
    %v1045 = vunpack.c.h.b16 %v695
    %v1046 = vunpack.c.l.b16 %v696
    %v1047 = vunpack.c.h.b16 %v696
    %v1048 = vunpack.c.l.b16 %v697
    %v1049 = vunpack.c.h.b16 %v697
    %v1050 = vunpack.c.l.b16 %v698
    %v1051 = vunpack.c.h.b16 %v698
    %v1052 = vunpack.c.l.b16 %v699
    %v1053 = vunpack.c.h.b16 %v699
    %v1054 = vunpack.c.l.b16 %v700
    %v1055 = vunpack.c.h.b16 %v700
    %v1056 = vunpack.c.l.b16 %v701
    %v1057 = vunpack.c.h.b16 %v701
    %v1058 = vunpack.c.l.b16 %v702
    %v1059 = vunpack.c.h.b16 %v702
    %v1060 = vunpack.c.l.b16 %v703
    %v1061 = vunpack.c.h.b16 %v703
    %v1062 = vunpack.c.l.b16 %v704
    %v1063 = vunpack.c.h.b16 %v704
    %v1064 = vunpack.c.l.b16 %v705
    %v1065 = vunpack.c.h.b16 %v705
    %v1066 = vunpack.c.l.b16 %v706
    %v1067 = vunpack.c.h.b16 %v706
    %v1068 = vunpack.c.l.b16 %v707
    %v1069 = vunpack.c.h.b16 %v707
    %v1070 = vunpack.c.l.b16 %v708
    %v1071 = vunpack.c.h.b16 %v708
    %v1072 = vunpack.c.l.b16 %v709
    %v1073 = vunpack.c.h.b16 %v709
    %v1074 = vunpack.c.l.b16 %v710
    %v1075 = vunpack.c.h.b16 %v710
    %v1076 = vunpack.c.l.b16 %v711
    %v1077 = vunpack.c.h.b16 %v711
    %v1078 = vunpack.c.l.b16 %v712
    %v1079 = vunpack.c.h.b16 %v712
    %v1080 = vunpack.c.l.b16 %v713
    %v1081 = vunpack.c.h.b16 %v713
    %v1082 = vunpack.c.l.b16 %v714
    %v1083 = vunpack.c.h.b16 %v714
    %v1084 = vunpack.c.l.b16 %v715
    %v1085 = vunpack.c.h.b16 %v715
    %v1086 = vunpack.c.l.b16 %v716
    %v1087 = vunpack.c.h.b16 %v716
    %v1088 = vunpack.c.l.b16 %v717
    %v1089 = vunpack.c.h.b16 %v717
    %v1090 = vunpack.c.l.b16 %v718
    %v1091 = vunpack.c.h.b16 %v718
    %v1092 = vunpack.c.l.b16 %v719
    %v1093 = vunpack.c.h.b16 %v719
    %v1094 = vunpack.c.l.b16 %v720
    %v1095 = vunpack.c.h.b16 %v720
    %v1096 = vunpack.c.l.b16 %v721
    %v1097 = vunpack.c.h.b16 %v721
    %v1098 = vunpack.c.l.b16 %v722
    %v1099 = vunpack.c.h.b16 %v722
    %v1100 = vunpack.c.l.b16 %v723
    %v1101 = vunpack.c.h.b16 %v723
    %v1102 = vunpack.c.l.b16 %v724
    %v1103 = vunpack.c.h.b16 %v724
    %v1104 = vunpack.c.l.b16 %v725
    %v1105 = vunpack.c.h.b16 %v725
    %v1106 = vunpack.c.l.b16 %v726
    %v1107 = vunpack.c.h.b16 %v726
    %v1108 = vunpack.c.l.b16 %v727
    %v1109 = vunpack.c.h.b16 %v727
    %v1110 = vunpack.c.l.b16 %v728
    %v1111 = vunpack.c.h.b16 %v728
    %v1112 = vunpack.c.l.b16 %v729
    %v1113 = vunpack.c.h.b16 %v729
    %v1114 = vunpack.c.l.b16 %v730
    %v1115 = vunpack.c.h.b16 %v730
    %v1116 = vunpack.c.l.b16 %v731
    %v1117 = vunpack.c.h.b16 %v731
    %v1118 = vunpack.c.l.b16 %v732
    %v1119 = vunpack.c.h.b16 %v732
    %v1120 = vunpack.c.l.b16 %v733
    %v1121 = vunpack.c.h.b16 %v733
    %v1122 = vunpack.c.l.b16 %v734
    %v1123 = vunpack.c.h.b16 %v734
    %v1124 = vunpack.c.l.b16 %v735
    %v1125 = vunpack.c.h.b16 %v735
    %v1126 = vunpack.c.l.b16 %v736
    %v1127 = vunpack.c.h.b16 %v736
    %v1128 = vunpack.c.l.b16 %v737
    %v1129 = vunpack.c.h.b16 %v737
    %v1130 = vunpack.c.l.b16 %v738
    %v1131 = vunpack.c.h.b16 %v738
    %v1132 = vpack.c.b16 %v880, %v876
    %v1133 = vpack.c.b16 %v881, %v877
    %v1134 = vpack.c.b16 %v882, %v878
    %v1135 = vpack.c.b16 %v883, %v879
    %v1136 = vpack.c.b16 %v888, %v884
    %v1137 = vpack.c.b16 %v889, %v885
    %v1138 = vpack.c.b16 %v890, %v886
    %v1139 = vpack.c.b16 %v891, %v887
    %v1140 = vpack.c.b16 %v896, %v892
    %v1141 = vpack.c.b16 %v897, %v893
    %v1142 = vpack.c.b16 %v898, %v894
    %v1143 = vpack.c.b16 %v899, %v895
    %v1144 = vpack.c.b16 %v904, %v900
    %v1145 = vpack.c.b16 %v905, %v901
    %v1146 = vpack.c.b16 %v906, %v902
    %v1147 = vpack.c.b16 %v907, %v903
    %v1148 = vpack.c.b16 %v912, %v908
    %v1149 = vpack.c.b16 %v913, %v909
    %v1150 = vpack.c.b16 %v914, %v910
    %v1151 = vpack.c.b16 %v915, %v911
    %v1152 = vpack.c.b16 %v920, %v916
    %v1153 = vpack.c.b16 %v921, %v917
    %v1154 = vpack.c.b16 %v922, %v918
    %v1155 = vpack.c.b16 %v923, %v919
    %v1156 = vpack.c.b16 %v928, %v924
    %v1157 = vpack.c.b16 %v929, %v925
    %v1158 = vpack.c.b16 %v930, %v926
    %v1159 = vpack.c.b16 %v931, %v927
    %v1160 = vpack.c.b16 %v936, %v932
    %v1161 = vpack.c.b16 %v937, %v933
    %v1162 = vpack.c.b16 %v938, %v934
    %v1163 = vpack.c.b16 %v939, %v935
    %v1164 = vpack.c.b16 %v944, %v940
    %v1165 = vpack.c.b16 %v945, %v941
    %v1166 = vpack.c.b16 %v946, %v942
    %v1167 = vpack.c.b16 %v947, %v943
    %v1168 = vpack.c.b16 %v952, %v948
    %v1169 = vpack.c.b16 %v953, %v949
    %v1170 = vpack.c.b16 %v954, %v950
    %v1171 = vpack.c.b16 %v955, %v951
    %v1172 = vpack.c.b16 %v960, %v956
    %v1173 = vpack.c.b16 %v961, %v957
    %v1174 = vpack.c.b16 %v962, %v958
    %v1175 = vpack.c.b16 %v963, %v959
    %v1176 = vpack.c.b16 %v968, %v964
    %v1177 = vpack.c.b16 %v969, %v965
    %v1178 = vpack.c.b16 %v970, %v966
    %v1179 = vpack.c.b16 %v971, %v967
    %v1180 = vpack.c.b16 %v976, %v972
    %v1181 = vpack.c.b16 %v977, %v973
    %v1182 = vpack.c.b16 %v978, %v974
    %v1183 = vpack.c.b16 %v979, %v975
    %v1184 = vpack.c.b16 %v984, %v980
    %v1185 = vpack.c.b16 %v985, %v981
    %v1186 = vpack.c.b16 %v986, %v982
    %v1187 = vpack.c.b16 %v987, %v983
    %v1188 = vpack.c.b16 %v992, %v988
    %v1189 = vpack.c.b16 %v993, %v989
    %v1190 = vpack.c.b16 %v994, %v990
    %v1191 = vpack.c.b16 %v995, %v991
    %v1192 = vpack.c.b16 %v1000, %v996
    %v1193 = vpack.c.b16 %v1001, %v997
    %v1194 = vpack.c.b16 %v1002, %v998
    %v1195 = vpack.c.b16 %v1003, %v999
    %v1196 = vpack.c.b16 %v1008, %v1004
    %v1197 = vpack.c.b16 %v1009, %v1005
    %v1198 = vpack.c.b16 %v1010, %v1006
    %v1199 = vpack.c.b16 %v1011, %v1007
    %v1200 = vpack.c.b16 %v1016, %v1012
    %v1201 = vpack.c.b16 %v1017, %v1013
    %v1202 = vpack.c.b16 %v1018, %v1014
    %v1203 = vpack.c.b16 %v1019, %v1015
    %v1204 = vpack.c.b16 %v1024, %v1020
    %v1205 = vpack.c.b16 %v1025, %v1021
    %v1206 = vpack.c.b16 %v1026, %v1022
    %v1207 = vpack.c.b16 %v1027, %v1023
    %v1208 = vpack.c.b16 %v1032, %v1028
    %v1209 = vpack.c.b16 %v1033, %v1029
    %v1210 = vpack.c.b16 %v1034, %v1030
    %v1211 = vpack.c.b16 %v1035, %v1031
    %v1212 = vpack.c.b16 %v1040, %v1036
    %v1213 = vpack.c.b16 %v1041, %v1037
    %v1214 = vpack.c.b16 %v1042, %v1038
    %v1215 = vpack.c.b16 %v1043, %v1039
    %v1216 = vpack.c.b16 %v1048, %v1044
    %v1217 = vpack.c.b16 %v1049, %v1045
    %v1218 = vpack.c.b16 %v1050, %v1046
    %v1219 = vpack.c.b16 %v1051, %v1047
    %v1220 = vpack.c.b16 %v1056, %v1052
    %v1221 = vpack.c.b16 %v1057, %v1053
    %v1222 = vpack.c.b16 %v1058, %v1054
    %v1223 = vpack.c.b16 %v1059, %v1055
    %v1224 = vpack.c.b16 %v1064, %v1060
    %v1225 = vpack.c.b16 %v1065, %v1061
    %v1226 = vpack.c.b16 %v1066, %v1062
    %v1227 = vpack.c.b16 %v1067, %v1063
    %v1228 = vpack.c.b16 %v1072, %v1068
    %v1229 = vpack.c.b16 %v1073, %v1069
    %v1230 = vpack.c.b16 %v1074, %v1070
    %v1231 = vpack.c.b16 %v1075, %v1071
    %v1232 = vpack.c.b16 %v1080, %v1076
    %v1233 = vpack.c.b16 %v1081, %v1077
    %v1234 = vpack.c.b16 %v1082, %v1078
    %v1235 = vpack.c.b16 %v1083, %v1079
    %v1236 = vpack.c.b16 %v1088, %v1084
    %v1237 = vpack.c.b16 %v1089, %v1085
    %v1238 = vpack.c.b16 %v1090, %v1086
    %v1239 = vpack.c.b16 %v1091, %v1087
    %v1240 = vpack.c.b16 %v1096, %v1092
    %v1241 = vpack.c.b16 %v1097, %v1093
    %v1242 = vpack.c.b16 %v1098, %v1094
    %v1243 = vpack.c.b16 %v1099, %v1095
    %v1244 = vpack.c.b16 %v1104, %v1100
    %v1245 = vpack.c.b16 %v1105, %v1101
    %v1246 = vpack.c.b16 %v1106, %v1102
    %v1247 = vpack.c.b16 %v1107, %v1103
    %v1248 = vpack.c.b16 %v1112, %v1108
    %v1249 = vpack.c.b16 %v1113, %v1109
    %v1250 = vpack.c.b16 %v1114, %v1110
    %v1251 = vpack.c.b16 %v1115, %v1111
    %v1252 = vpack.c.b16 %v1120, %v1116
    %v1253 = vpack.c.b16 %v1121, %v1117
    %v1254 = vpack.c.b16 %v1122, %v1118
    %v1255 = vpack.c.b16 %v1123, %v1119
    %v1256 = vpack.c.b16 %v1128, %v1124
    %v1257 = vpack.c.b16 %v1129, %v1125
    %v1258 = vpack.c.b16 %v1130, %v1126
    %v1259 = vpack.c.b16 %v1131, %v1127
    %1388 = vmatpush.bf16.msra.mxu0 %v1160
    %1389 = vmatpush.bf16.msra.mxu0 %v1156
    %1390 = vmatpush.bf16.msra.mxu0 %v1152
    %1391 = vmatpush.bf16.msra.mxu0 %v1148
    %1392 = vmatpush.bf16.msra.mxu0 %v1144
    %1393 = vmatpush.bf16.msra.mxu0 %v1140
    %1394 = vmatpush.bf16.msra.mxu0 %v1136
    %1395 = vmatpush.bf16.msra.mxu0 %v1132
    %1396 = vmatmul.bf16.gmra.mxu0 %v607
    %v1397 = vpop.f32.mrf.mxu0
    %v1398 = vadd.f32 %v740, %v1397
    %v1399 = vpop.f32.mrf.mxu0
    %1400 = vdwg.mxu0
    %1401 = vmatpush.bf16.msra.mxu0 %v1192
    %1402 = vmatpush.bf16.msra.mxu0 %v1188
    %1403 = vmatpush.bf16.msra.mxu0 %v1184
    %1404 = vmatpush.bf16.msra.mxu0 %v1180
    %1405 = vmatpush.bf16.msra.mxu0 %v1176
    %1406 = vmatpush.bf16.msra.mxu0 %v1172
    %1407 = vmatpush.bf16.msra.mxu0 %v1168
    %1408 = vmatpush.bf16.msra.mxu0 %v1164
    %1409 = vmatmul.bf16.gmra.mxu0 %v608
    %v1410 = vpop.f32.mrf.mxu0
    %v1411 = vadd.f32 %v1398, %v1410
    %v1412 = vpop.f32.mrf.mxu0
    %1413 = vdwg.mxu0
    %1414 = vmatpush.bf16.msra.mxu0 %v1224
    %1415 = vmatpush.bf16.msra.mxu0 %v1220
    %1416 = vmatpush.bf16.msra.mxu0 %v1216
    %1417 = vmatpush.bf16.msra.mxu0 %v1212
    %1418 = vmatpush.bf16.msra.mxu0 %v1208
    %1419 = vmatpush.bf16.msra.mxu0 %v1204
    %1420 = vmatpush.bf16.msra.mxu0 %v1200
    %1421 = vmatpush.bf16.msra.mxu0 %v1196
    %1422 = vmatmul.bf16.gmra.mxu0 %v609
    %v1423 = vpop.f32.mrf.mxu0
    %v1424 = vadd.f32 %v1411, %v1423
    %v1425 = vpop.f32.mrf.mxu0
    %1426 = vdwg.mxu0
    %1427 = vmatpush.bf16.msra.mxu0 %v1256
    %1428 = vmatpush.bf16.msra.mxu0 %v1252
    %1429 = vmatpush.bf16.msra.mxu0 %v1248
    %1430 = vmatpush.bf16.msra.mxu0 %v1244
    %1431 = vmatpush.bf16.msra.mxu0 %v1240
    %1432 = vmatpush.bf16.msra.mxu0 %v1236
    %1433 = vmatpush.bf16.msra.mxu0 %v1232
    %1434 = vmatpush.bf16.msra.mxu0 %v1228
    %1435 = vmatmul.bf16.gmra.mxu0 %v610
    %v1436 = vpop.f32.mrf.mxu0
    %v1437 = vadd.f32 %v1424, %v1436
    %v1438 = vpop.f32.mrf.mxu0
    %1439 = vdwg.mxu0
    %1440 = vmatpush.bf16.msra.mxu0 %v1161
    %1441 = vmatpush.bf16.msra.mxu0 %v1157
    %1442 = vmatpush.bf16.msra.mxu0 %v1153
    %1443 = vmatpush.bf16.msra.mxu0 %v1149
    %1444 = vmatpush.bf16.msra.mxu0 %v1145
    %1445 = vmatpush.bf16.msra.mxu0 %v1141
    %1446 = vmatpush.bf16.msra.mxu0 %v1137
    %1447 = vmatpush.bf16.msra.mxu0 %v1133
    %1448 = vmatmul.bf16.gmra.mxu0 %v607
    %v1449 = vpop.f32.mrf.mxu0
    %v1450 = vadd.f32 %v741, %v1449
    %v1451 = vpop.f32.mrf.mxu0
    %1452 = vdwg.mxu0
    %1453 = vmatpush.bf16.msra.mxu0 %v1193
    %1454 = vmatpush.bf16.msra.mxu0 %v1189
    %1455 = vmatpush.bf16.msra.mxu0 %v1185
    %1456 = vmatpush.bf16.msra.mxu0 %v1181
    %1457 = vmatpush.bf16.msra.mxu0 %v1177
    %1458 = vmatpush.bf16.msra.mxu0 %v1173
    %1459 = vmatpush.bf16.msra.mxu0 %v1169
    %1460 = vmatpush.bf16.msra.mxu0 %v1165
    %1461 = vmatmul.bf16.gmra.mxu0 %v608
    %v1462 = vpop.f32.mrf.mxu0
    %v1463 = vadd.f32 %v1450, %v1462
    %v1464 = vpop.f32.mrf.mxu0
    %1465 = vdwg.mxu0
    %1466 = vmatpush.bf16.msra.mxu0 %v1225
    %1467 = vmatpush.bf16.msra.mxu0 %v1221
    %1468 = vmatpush.bf16.msra.mxu0 %v1217
    %1469 = vmatpush.bf16.msra.mxu0 %v1213
    %1470 = vmatpush.bf16.msra.mxu0 %v1209
    %1471 = vmatpush.bf16.msra.mxu0 %v1205
    %1472 = vmatpush.bf16.msra.mxu0 %v1201
    %1473 = vmatpush.bf16.msra.mxu0 %v1197
    %1474 = vmatmul.bf16.gmra.mxu0 %v609
    %v1475 = vpop.f32.mrf.mxu0
    %v1476 = vadd.f32 %v1463, %v1475
    %v1477 = vpop.f32.mrf.mxu0
    %1478 = vdwg.mxu0
    %1479 = vmatpush.bf16.msra.mxu0 %v1257
    %1480 = vmatpush.bf16.msra.mxu0 %v1253
    %1481 = vmatpush.bf16.msra.mxu0 %v1249
    %1482 = vmatpush.bf16.msra.mxu0 %v1245
    %1483 = vmatpush.bf16.msra.mxu0 %v1241
    %1484 = vmatpush.bf16.msra.mxu0 %v1237
    %1485 = vmatpush.bf16.msra.mxu0 %v1233
    %1486 = vmatpush.bf16.msra.mxu0 %v1229
    %1487 = vmatmul.bf16.gmra.mxu0 %v610
    %v1488 = vpop.f32.mrf.mxu0
    %v1489 = vadd.f32 %v1476, %v1488
    %v1490 = vpop.f32.mrf.mxu0
    %1491 = vdwg.mxu0
    %1492 = vmatpush.bf16.msra.mxu0 %v1162
    %1493 = vmatpush.bf16.msra.mxu0 %v1158
    %1494 = vmatpush.bf16.msra.mxu0 %v1154
    %1495 = vmatpush.bf16.msra.mxu0 %v1150
    %1496 = vmatpush.bf16.msra.mxu0 %v1146
    %1497 = vmatpush.bf16.msra.mxu0 %v1142
    %1498 = vmatpush.bf16.msra.mxu0 %v1138
    %1499 = vmatpush.bf16.msra.mxu0 %v1134
    %1500 = vmatmul.bf16.gmra.mxu0 %v607
    %v1501 = vpop.f32.mrf.mxu0
    %v1502 = vadd.f32 %v742, %v1501
    %v1503 = vpop.f32.mrf.mxu0
    %1504 = vdwg.mxu0
    %1505 = vmatpush.bf16.msra.mxu0 %v1194
    %1506 = vmatpush.bf16.msra.mxu0 %v1190
    %1507 = vmatpush.bf16.msra.mxu0 %v1186
    %1508 = vmatpush.bf16.msra.mxu0 %v1182
    %1509 = vmatpush.bf16.msra.mxu0 %v1178
    %1510 = vmatpush.bf16.msra.mxu0 %v1174
    %1511 = vmatpush.bf16.msra.mxu0 %v1170
    %1512 = vmatpush.bf16.msra.mxu0 %v1166
    %1513 = vmatmul.bf16.gmra.mxu0 %v608
    %v1514 = vpop.f32.mrf.mxu0
    %v1515 = vadd.f32 %v1502, %v1514
    %v1516 = vpop.f32.mrf.mxu0
    %1517 = vdwg.mxu0
    %1518 = vmatpush.bf16.msra.mxu0 %v1226
    %1519 = vmatpush.bf16.msra.mxu0 %v1222
    %1520 = vmatpush.bf16.msra.mxu0 %v1218
    %1521 = vmatpush.bf16.msra.mxu0 %v1214
    %1522 = vmatpush.bf16.msra.mxu0 %v1210
    %1523 = vmatpush.bf16.msra.mxu0 %v1206
    %1524 = vmatpush.bf16.msra.mxu0 %v1202
    %1525 = vmatpush.bf16.msra.mxu0 %v1198
    %1526 = vmatmul.bf16.gmra.mxu0 %v609
    %v1527 = vpop.f32.mrf.mxu0
    %v1528 = vadd.f32 %v1515, %v1527
    %v1529 = vpop.f32.mrf.mxu0
    %1530 = vdwg.mxu0
    %1531 = vmatpush.bf16.msra.mxu0 %v1258
    %1532 = vmatpush.bf16.msra.mxu0 %v1254
    %1533 = vmatpush.bf16.msra.mxu0 %v1250
    %1534 = vmatpush.bf16.msra.mxu0 %v1246
    %1535 = vmatpush.bf16.msra.mxu0 %v1242
    %1536 = vmatpush.bf16.msra.mxu0 %v1238
    %1537 = vmatpush.bf16.msra.mxu0 %v1234
    %1538 = vmatpush.bf16.msra.mxu0 %v1230
    %1539 = vmatmul.bf16.gmra.mxu0 %v610
    %v1540 = vpop.f32.mrf.mxu0
    %v1541 = vadd.f32 %v1528, %v1540
    %v1542 = vpop.f32.mrf.mxu0
    %1543 = vdwg.mxu0
    %1544 = vmatpush.bf16.msra.mxu0 %v1163
    %1545 = vmatpush.bf16.msra.mxu0 %v1159
    %1546 = vmatpush.bf16.msra.mxu0 %v1155
    %1547 = vmatpush.bf16.msra.mxu0 %v1151
    %1548 = vmatpush.bf16.msra.mxu0 %v1147
    %1549 = vmatpush.bf16.msra.mxu0 %v1143
    %1550 = vmatpush.bf16.msra.mxu0 %v1139
    %1551 = vmatpush.bf16.msra.mxu0 %v1135
    %1552 = vmatmul.bf16.gmra.mxu0 %v607
    %v1553 = vpop.f32.mrf.mxu0
    %v1554 = vadd.f32 %v743, %v1553
    %v1555 = vpop.f32.mrf.mxu0
    %1556 = vdwg.mxu0
    %1557 = vmatpush.bf16.msra.mxu0 %v1195
    %1558 = vmatpush.bf16.msra.mxu0 %v1191
    %1559 = vmatpush.bf16.msra.mxu0 %v1187
    %1560 = vmatpush.bf16.msra.mxu0 %v1183
    %1561 = vmatpush.bf16.msra.mxu0 %v1179
    %1562 = vmatpush.bf16.msra.mxu0 %v1175
    %1563 = vmatpush.bf16.msra.mxu0 %v1171
    %1564 = vmatpush.bf16.msra.mxu0 %v1167
    %1565 = vmatmul.bf16.gmra.mxu0 %v608
    %v1566 = vpop.f32.mrf.mxu0
    %v1567 = vadd.f32 %v1554, %v1566
    %v1568 = vpop.f32.mrf.mxu0
    %1569 = vdwg.mxu0
    %1570 = vmatpush.bf16.msra.mxu0 %v1227
    %1571 = vmatpush.bf16.msra.mxu0 %v1223
    %1572 = vmatpush.bf16.msra.mxu0 %v1219
    %1573 = vmatpush.bf16.msra.mxu0 %v1215
    %1574 = vmatpush.bf16.msra.mxu0 %v1211
    %1575 = vmatpush.bf16.msra.mxu0 %v1207
    %1576 = vmatpush.bf16.msra.mxu0 %v1203
    %1577 = vmatpush.bf16.msra.mxu0 %v1199
    %1578 = vmatmul.bf16.gmra.mxu0 %v609
    %v1579 = vpop.f32.mrf.mxu0
    %v1580 = vadd.f32 %v1567, %v1579
    %v1581 = vpop.f32.mrf.mxu0
    %1582 = vdwg.mxu0
    %1583 = vmatpush.bf16.msra.mxu0 %v1259
    %1584 = vmatpush.bf16.msra.mxu0 %v1255
    %1585 = vmatpush.bf16.msra.mxu0 %v1251
    %1586 = vmatpush.bf16.msra.mxu0 %v1247
    %1587 = vmatpush.bf16.msra.mxu0 %v1243
    %1588 = vmatpush.bf16.msra.mxu0 %v1239
    %1589 = vmatpush.bf16.msra.mxu0 %v1235
    %1590 = vmatpush.bf16.msra.mxu0 %v1231
    %1591 = vmatmul.bf16.gmra.mxu0 %v610
    %v1592 = vpop.f32.mrf.mxu0
    %v1593 = vadd.f32 %v1580, %v1592
    %v1594 = vpop.f32.mrf.mxu0
    %1595 = vdwg.mxu0
    %v1596 = vmax.f32 %v1437, 0.0
    %v1597 = vmax.f32 %v1489, 0.0
    %v1598 = vmax.f32 %v1541, 0.0
    %v1599 = vmax.f32 %v1593, 0.0
    %v1600 = vpack.c.bf16 %v1596, %v1596
    %v1601 = vpack.c.bf16 %v1597, %v1597
    %v1602 = vpack.c.bf16 %v1598, %v1598
    %v1603 = vpack.c.bf16 %v1599, %v1599
    %v1604 = vld [vmem:[#allocation8] sm:$0xf]
    %v1605 = vld [vmem:[#allocation8 + $0x4] sm:$0xf]
    %v1606 = vld [vmem:[#allocation8 + $0x8] sm:$0xf]
    %v1607 = vld [vmem:[#allocation8 + $0xc] sm:$0xf]
    %v1608 = vld [vmem:[#allocation8 + $0x10] sm:$0xf]
    %v1609 = vld [vmem:[#allocation8 + $0x14] sm:$0xf]
    %v1610 = vld [vmem:[#allocation8 + $0x18] sm:$0xf]
    %v1611 = vld [vmem:[#allocation8 + $0x1c] sm:$0xf]
    %v1612 = vld [vmem:[#allocation8 + $0x20] sm:$0xf]
    %v1613 = vld [vmem:[#allocation8 + $0x24] sm:$0xf]
    %v1614 = vld [vmem:[#allocation8 + $0x28] sm:$0xf]
    %v1615 = vld [vmem:[#allocation8 + $0x2c] sm:$0xf]
    %v1616 = vld [vmem:[#allocation8 + $0x30] sm:$0xf]
    %v1617 = vld [vmem:[#allocation8 + $0x34] sm:$0xf]
    %v1618 = vld [vmem:[#allocation8 + $0x38] sm:$0xf]
    %v1619 = vld [vmem:[#allocation8 + $0x3c] sm:$0xf]
    %v1620 = vld [vmem:[#allocation8 + $0x40] sm:$0xf]
    %v1621 = vld [vmem:[#allocation8 + $0x44] sm:$0xf]
    %v1622 = vld [vmem:[#allocation8 + $0x48] sm:$0xf]
    %v1623 = vld [vmem:[#allocation8 + $0x4c] sm:$0xf]
    %v1624 = vld [vmem:[#allocation8 + $0x50] sm:$0xf]
    %v1625 = vld [vmem:[#allocation8 + $0x54] sm:$0xf]
    %v1626 = vld [vmem:[#allocation8 + $0x58] sm:$0xf]
    %v1627 = vld [vmem:[#allocation8 + $0x5c] sm:$0xf]
    %v1628 = vld [vmem:[#allocation8 + $0x60] sm:$0xf]
    %v1629 = vld [vmem:[#allocation8 + $0x64] sm:$0xf]
    %v1630 = vld [vmem:[#allocation8 + $0x68] sm:$0xf]
    %v1631 = vld [vmem:[#allocation8 + $0x6c] sm:$0xf]
    %v1632 = vld [vmem:[#allocation8 + $0x70] sm:$0xf]
    %v1633 = vld [vmem:[#allocation8 + $0x74] sm:$0xf]
    %v1634 = vld [vmem:[#allocation8 + $0x78] sm:$0xf]
    %v1635 = vld [vmem:[#allocation8 + $0x7c] sm:$0xf]
    %v1636 = vld [vmem:[#allocation8 + $0x80] sm:$0xf]
    %v1637 = vld [vmem:[#allocation8 + $0x84] sm:$0xf]
    %v1638 = vld [vmem:[#allocation8 + $0x88] sm:$0xf]
    %v1639 = vld [vmem:[#allocation8 + $0x8c] sm:$0xf]
    %v1640 = vld [vmem:[#allocation8 + $0x90] sm:$0xf]
    %v1641 = vld [vmem:[#allocation8 + $0x94] sm:$0xf]
    %v1642 = vld [vmem:[#allocation8 + $0x98] sm:$0xf]
    %v1643 = vld [vmem:[#allocation8 + $0x9c] sm:$0xf]
    %v1644 = vld [vmem:[#allocation8 + $0xa0] sm:$0xf]
    %v1645 = vld [vmem:[#allocation8 + $0xa4] sm:$0xf]
    %v1646 = vld [vmem:[#allocation8 + $0xa8] sm:$0xf]
    %v1647 = vld [vmem:[#allocation8 + $0xac] sm:$0xf]
    %v1648 = vld [vmem:[#allocation8 + $0xb0] sm:$0xf]
    %v1649 = vld [vmem:[#allocation8 + $0xb4] sm:$0xf]
    %v1650 = vld [vmem:[#allocation8 + $0xb8] sm:$0xf]
    %v1651 = vld [vmem:[#allocation8 + $0xbc] sm:$0xf]
    %v1652 = vld [vmem:[#allocation8 + $0xc0] sm:$0xf]
    %v1653 = vld [vmem:[#allocation8 + $0xc4] sm:$0xf]
    %v1654 = vld [vmem:[#allocation8 + $0xc8] sm:$0xf]
    %v1655 = vld [vmem:[#allocation8 + $0xcc] sm:$0xf]
    %v1656 = vld [vmem:[#allocation8 + $0xd0] sm:$0xf]
    %v1657 = vld [vmem:[#allocation8 + $0xd4] sm:$0xf]
    %v1658 = vld [vmem:[#allocation8 + $0xd8] sm:$0xf]
    %v1659 = vld [vmem:[#allocation8 + $0xdc] sm:$0xf]
    %v1660 = vld [vmem:[#allocation8 + $0xe0] sm:$0xf]
    %v1661 = vld [vmem:[#allocation8 + $0xe4] sm:$0xf]
    %v1662 = vld [vmem:[#allocation8 + $0xe8] sm:$0xf]
    %v1663 = vld [vmem:[#allocation8 + $0xec] sm:$0xf]
    %v1664 = vld [vmem:[#allocation8 + $0xf0] sm:$0xf]
    %v1665 = vld [vmem:[#allocation8 + $0xf4] sm:$0xf]
    %v1666 = vld [vmem:[#allocation8 + $0xf8] sm:$0xf]
    %v1667 = vld [vmem:[#allocation8 + $0xfc] sm:$0xf]
    %v1669 = vperm.slane %v97, 0
    %v1735 = vunpack.c.l.b16 %v1604
    %v1736 = vunpack.c.l.b16 %v1605
    %v1737 = vunpack.c.l.b16 %v1606
    %v1738 = vunpack.c.l.b16 %v1607
    %v1739 = vunpack.c.l.b16 %v1608
    %v1740 = vunpack.c.l.b16 %v1609
    %v1741 = vunpack.c.l.b16 %v1610
    %v1742 = vunpack.c.l.b16 %v1611
    %v1743 = vunpack.c.l.b16 %v1612
    %v1744 = vunpack.c.l.b16 %v1613
    %v1745 = vunpack.c.l.b16 %v1614
    %v1746 = vunpack.c.l.b16 %v1615
    %v1747 = vunpack.c.l.b16 %v1616
    %v1748 = vunpack.c.l.b16 %v1617
    %v1749 = vunpack.c.l.b16 %v1618
    %v1750 = vunpack.c.l.b16 %v1619
    %v1751 = vunpack.c.l.b16 %v1620
    %v1752 = vunpack.c.l.b16 %v1621
    %v1753 = vunpack.c.l.b16 %v1622
    %v1754 = vunpack.c.l.b16 %v1623
    %v1755 = vunpack.c.l.b16 %v1624
    %v1756 = vunpack.c.l.b16 %v1625
    %v1757 = vunpack.c.l.b16 %v1626
    %v1758 = vunpack.c.l.b16 %v1627
    %v1759 = vunpack.c.l.b16 %v1628
    %v1760 = vunpack.c.l.b16 %v1629
    %v1761 = vunpack.c.l.b16 %v1630
    %v1762 = vunpack.c.l.b16 %v1631
    %v1763 = vunpack.c.l.b16 %v1632
    %v1764 = vunpack.c.l.b16 %v1633
    %v1765 = vunpack.c.l.b16 %v1634
    %v1766 = vunpack.c.l.b16 %v1635
    %v1767 = vunpack.c.l.b16 %v1636
    %v1768 = vunpack.c.l.b16 %v1637
    %v1769 = vunpack.c.l.b16 %v1638
    %v1770 = vunpack.c.l.b16 %v1639
    %v1771 = vunpack.c.l.b16 %v1640
    %v1772 = vunpack.c.l.b16 %v1641
    %v1773 = vunpack.c.l.b16 %v1642
    %v1774 = vunpack.c.l.b16 %v1643
    %v1775 = vunpack.c.l.b16 %v1644
    %v1776 = vunpack.c.l.b16 %v1645
    %v1777 = vunpack.c.l.b16 %v1646
    %v1778 = vunpack.c.l.b16 %v1647
    %v1779 = vunpack.c.l.b16 %v1648
    %v1780 = vunpack.c.l.b16 %v1649
    %v1781 = vunpack.c.l.b16 %v1650
    %v1782 = vunpack.c.l.b16 %v1651
    %v1783 = vunpack.c.l.b16 %v1652
    %v1784 = vunpack.c.l.b16 %v1653
    %v1785 = vunpack.c.l.b16 %v1654
    %v1786 = vunpack.c.l.b16 %v1655
    %v1787 = vunpack.c.l.b16 %v1656
    %v1788 = vunpack.c.l.b16 %v1657
    %v1789 = vunpack.c.l.b16 %v1658
    %v1790 = vunpack.c.l.b16 %v1659
    %v1791 = vunpack.c.l.b16 %v1660
    %v1792 = vunpack.c.l.b16 %v1661
    %v1793 = vunpack.c.l.b16 %v1662
    %v1794 = vunpack.c.l.b16 %v1663
    %v1795 = vunpack.c.l.b16 %v1664
    %v1796 = vunpack.c.l.b16 %v1665
    %v1797 = vunpack.c.l.b16 %v1666
    %v1798 = vunpack.c.l.b16 %v1667
    %v1799 = vpack.c.b16 %v1736, %v1735
    %v1800 = vpack.c.b16 %v1738, %v1737
    %v1801 = vpack.c.b16 %v1740, %v1739
    %v1802 = vpack.c.b16 %v1742, %v1741
    %v1803 = vpack.c.b16 %v1744, %v1743
    %v1804 = vpack.c.b16 %v1746, %v1745
    %v1805 = vpack.c.b16 %v1748, %v1747
    %v1806 = vpack.c.b16 %v1750, %v1749
    %v1807 = vpack.c.b16 %v1752, %v1751
    %v1808 = vpack.c.b16 %v1754, %v1753
    %v1809 = vpack.c.b16 %v1756, %v1755
    %v1810 = vpack.c.b16 %v1758, %v1757
    %v1811 = vpack.c.b16 %v1760, %v1759
    %v1812 = vpack.c.b16 %v1762, %v1761
    %v1813 = vpack.c.b16 %v1764, %v1763
    %v1814 = vpack.c.b16 %v1766, %v1765
    %v1815 = vpack.c.b16 %v1768, %v1767
    %v1816 = vpack.c.b16 %v1770, %v1769
    %v1817 = vpack.c.b16 %v1772, %v1771
    %v1818 = vpack.c.b16 %v1774, %v1773
    %v1819 = vpack.c.b16 %v1776, %v1775
    %v1820 = vpack.c.b16 %v1778, %v1777
    %v1821 = vpack.c.b16 %v1780, %v1779
    %v1822 = vpack.c.b16 %v1782, %v1781
    %v1823 = vpack.c.b16 %v1784, %v1783
    %v1824 = vpack.c.b16 %v1786, %v1785
    %v1825 = vpack.c.b16 %v1788, %v1787
    %v1826 = vpack.c.b16 %v1790, %v1789
    %v1827 = vpack.c.b16 %v1792, %v1791
    %v1828 = vpack.c.b16 %v1794, %v1793
    %v1829 = vpack.c.b16 %v1796, %v1795
    %v1830 = vpack.c.b16 %v1798, %v1797
    %1863 = vmatpush.bf16.msra.mxu0 %v1806
    %1864 = vmatpush.bf16.msra.mxu0 %v1805
    %1865 = vmatpush.bf16.msra.mxu0 %v1804
    %1866 = vmatpush.bf16.msra.mxu0 %v1803
    %1867 = vmatpush.bf16.msra.mxu0 %v1802
    %1868 = vmatpush.bf16.msra.mxu0 %v1801
    %1869 = vmatpush.bf16.msra.mxu0 %v1800
    %1870 = vmatpush.bf16.msra.mxu0 %v1799
    %1871 = vmatmul.bf16.gmra.mxu0 %v1600
    %v1872 = vpop.f32.mrf.mxu0
    %v1873 = vadd.f32 %v1669, %v1872
    %v1874 = vpop.f32.mrf.mxu0
    %1875 = vdwg.mxu0
    %1876 = vmatpush.bf16.msra.mxu0 %v1814
    %1877 = vmatpush.bf16.msra.mxu0 %v1813
    %1878 = vmatpush.bf16.msra.mxu0 %v1812
    %1879 = vmatpush.bf16.msra.mxu0 %v1811
    %1880 = vmatpush.bf16.msra.mxu0 %v1810
    %1881 = vmatpush.bf16.msra.mxu0 %v1809
    %1882 = vmatpush.bf16.msra.mxu0 %v1808
    %1883 = vmatpush.bf16.msra.mxu0 %v1807
    %1884 = vmatmul.bf16.gmra.mxu0 %v1601
    %v1885 = vpop.f32.mrf.mxu0
    %v1886 = vadd.f32 %v1873, %v1885
    %v1887 = vpop.f32.mrf.mxu0
    %1888 = vdwg.mxu0
    %1889 = vmatpush.bf16.msra.mxu0 %v1822
    %1890 = vmatpush.bf16.msra.mxu0 %v1821
    %1891 = vmatpush.bf16.msra.mxu0 %v1820
    %1892 = vmatpush.bf16.msra.mxu0 %v1819
    %1893 = vmatpush.bf16.msra.mxu0 %v1818
    %1894 = vmatpush.bf16.msra.mxu0 %v1817
    %1895 = vmatpush.bf16.msra.mxu0 %v1816
    %1896 = vmatpush.bf16.msra.mxu0 %v1815
    %1897 = vmatmul.bf16.gmra.mxu0 %v1602
    %v1898 = vpop.f32.mrf.mxu0
    %v1899 = vadd.f32 %v1886, %v1898
    %v1900 = vpop.f32.mrf.mxu0
    %1901 = vdwg.mxu0
    %1902 = vmatpush.bf16.msra.mxu0 %v1830
    %1903 = vmatpush.bf16.msra.mxu0 %v1829
    %1904 = vmatpush.bf16.msra.mxu0 %v1828
    %1905 = vmatpush.bf16.msra.mxu0 %v1827
    %1906 = vmatpush.bf16.msra.mxu0 %v1826
    %1907 = vmatpush.bf16.msra.mxu0 %v1825
    %1908 = vmatpush.bf16.msra.mxu0 %v1824
    %1909 = vmatpush.bf16.msra.mxu0 %v1823
    %1910 = vmatmul.bf16.gmra.mxu0 %v1603
    %v1911 = vpop.f32.mrf.mxu0
    %v1912 = vadd.f32 %v1899, %v1911
    %v1913 = vpop.f32.mrf.mxu0
    %1914 = vdwg.mxu0
    %1915 = vst [vmem:[#allocation11] sm:$0xff] %v1912
    // Predicated region
    $region42: #{tpu_custom_call.1} parent=1 // pred_check
      _
    $region43: #{tpu_custom_call.1} parent=1 // pred_check_branch
      %1917 = sbr.rel (0) target = $region45
    $region44: #{tpu_custom_call.1} parent=1 // pred_region
      %1919 = vsyncadd [#allocation4], 0
      %s1921 = sshll.u32 [#allocation11], 4
      %s1922 = int_to_ptr.vmem [resolvable:$true] %s1921
      %s1923 = sshll.u32 %s5, 4
      %s1924 = int_to_ptr.hbm [resolvable:$true] %s1923
      %1926 = dma.vmem_to_hbm [thread:$0]  %s1922, 128, %s1924, [#allocation4]
    $region45: #{tpu_custom_call.1} parent=1 // pred_fallthru
      _
    // Predicated region
    $region46: #{tpu_custom_call.1} parent=1 // pred_check
      _
    $region47: #{tpu_custom_call.1} parent=1 // pred_check_branch
      %1928 = sbr.rel (0) target = $region49
    $region48: #{tpu_custom_call.1} parent=1 // pred_region
      %1930 = dma.done [#allocation4], 128
    $region49: #{tpu_custom_call.1} parent=1 // pred_fallthru
      _
    %1931 = vsyncpa [#allocation3], 1
    %1932 = vsyncpa [#allocation6], 1
    %1933 = vsyncpa [#allocation9], 1
    %1934 = vsyncpa [#allocation4], 1

// kernel: tpu_custom_call.1
$region0: #{tpu_custom_call.1}
  #allocation0 [shape = 'u32[]', space=smem, size = 0x4, offset = 0x4, fixed_abs, tag = 'smem constant byte address 0x4 - core index']
  #allocation1 [shape = 'u32[72,128]{1,0:T(1,128)}', space=vmem, size = 0x9000, scoped, tag = 'internal scratch']
  %s0 = inlined_call_operand.hbm [shape: bf16[8,256], index: 0, kind: input, shape index: {}]
  %s1 = inlined_call_operand.hbm [shape: bf16[256,512], index: 1, kind: input, shape index: {}]
  %s2 = inlined_call_operand.hbm [shape: bf16[512,512], index: 2, kind: input, shape index: {}]
  %s3 = inlined_call_operand.hbm [shape: bf16[512,128], index: 3, kind: input, shape index: {}]
  %s4 = inlined_call_operand.hbm [shape: f32[1,1152], index: 4, kind: input, shape index: {}]
  %s5 = inlined_call_operand.hbm [shape: f32[8,128], index: 5, kind: output, shape index: {}]
  %s6 = sld [smem:[#allocation0]]
  $region50: #{tpu_custom_call.1} parent=0
    _
  %s8 = ssub.s32 1, %s6
  %s9 = scalar_select 0, %s8, %s6
  $region1: #{tpu_custom_call.1} parent=0
    #allocation2 [shape = 'u8[4096]{0}', space=vmem, size = 0x1000, scoped, tag = 'input window, operand 0, single buffered']
    #allocation3 [shape = 's32[1]{0}', space=sflag, size = 0x4, scoped, tag = 'scoped memory for tpu_custom_call.1']
    #allocation4 [shape = 's32[1]{0}', space=sflag, size = 0x4, scoped, tag = 'scoped memory for tpu_custom_call.1']
    #allocation5 [shape = 'u8[262144]{0}', space=vmem, size = 0x40000, scoped, tag = 'input window, operand 1, single buffered']
    #allocation6 [shape = 's32[1]{0}', space=sflag, size = 0x4, scoped, tag = 'scoped memory for tpu_custom_call.1']
    #allocation7 [shape = 'u8[524288]{0}', space=vmem, size = 0x80000, scoped, tag = 'input window, operand 2, single buffered']
    #allocation8 [shape = 'u8[131072]{0}', space=vmem, size = 0x20000, scoped, tag = 'input window, operand 3, single buffered']
    #allocation9 [shape = 's32[1]{0}', space=sflag, size = 0x4, scoped, tag = 'scoped memory for tpu_custom_call.1']
    #allocation10 [shape = 'u8[4608]{0}', space=vmem, size = 0x1400, scoped, tag = 'input window, operand 4, single buffered']
    #allocation11 [shape = 'u8[4096]{0}', space=vmem, size = 0x1000, scoped, tag = 'output window, operand 0, single buffered']
    %10 = vsyncpa [#allocation3], 0
    %11 = vsyncpa [#allocation6], 0
    %12 = vsyncpa [#allocation9], 0
    %13 = vsyncpa [#allocation4], 0
    // Predicated region
    $region2: #{tpu_custom_call.1} parent=1 // pred_check
      _
    $region3: #{tpu_custom_call.1} parent=1 // pred_check_branch
      %15 = sbr.rel (0) target = $region5
    $region4: #{tpu_custom_call.1} parent=1 // pred_region
      %17 = vsyncadd [#allocation3], 0
      %s19 = sshll.u32 %s0, 4
      %s20 = int_to_ptr.hbm [resolvable:$true] %s19
      %s21 = sshll.u32 [#allocation2], 4
      %s22 = int_to_ptr.vmem [resolvable:$true] %s21
      %24 = dma.hbm_to_vmem [thread:$0]  %s20, 128, %s22, [#allocation3]
    $region5: #{tpu_custom_call.1} parent=1 // pred_fallthru
      _
    // Predicated region
    $region6: #{tpu_custom_call.1} parent=1 // pred_check
      _
    $region7: #{tpu_custom_call.1} parent=1 // pred_check_branch
      %26 = sbr.rel (0) target = $region9
    $region8: #{tpu_custom_call.1} parent=1 // pred_region
      %28 = vsyncadd [#allocation6], 0
      %s29 = sshll.u32 %s1, 4
      %s30 = int_to_ptr.hbm [resolvable:$true] %s29
      %s31 = sshll.u32 [#allocation5], 4
      %s32 = int_to_ptr.vmem [resolvable:$true] %s31
      %37 = dma.hbm_to_vmem [thread:$0]  %s30, 8192, %s32, [#allocation6], 256, 256, 16
    $region9: #{tpu_custom_call.1} parent=1 // pred_fallthru
      _
    // Predicated region
    $region10: #{tpu_custom_call.1} parent=1 // pred_check
      _
    $region11: #{tpu_custom_call.1} parent=1 // pred_check_branch
      %39 = sbr.rel (0) target = $region13
    $region12: #{tpu_custom_call.1} parent=1 // pred_region
      %41 = vsyncadd [#allocation6], 0
      %s42 = sshll.u32 %s2, 4
      %s43 = int_to_ptr.hbm [resolvable:$true] %s42
      %s44 = sshll.u32 [#allocation7], 4
      %s45 = int_to_ptr.vmem [resolvable:$true] %s44
      %50 = dma.hbm_to_vmem [thread:$0]  %s43, 16384, %s45, [#allocation6], 256, 256, 16
    $region13: #{tpu_custom_call.1} parent=1 // pred_fallthru
      _
    // Predicated region
    $region14: #{tpu_custom_call.1} parent=1 // pred_check
      _
    $region15: #{tpu_custom_call.1} parent=1 // pred_check_branch
      %52 = sbr.rel (0) target = $region17
    $region16: #{tpu_custom_call.1} parent=1 // pred_region
      %54 = vsyncadd [#allocation9], 0
      %s55 = sshll.u32 %s3, 4
      %s56 = int_to_ptr.hbm [resolvable:$true] %s55
      %s57 = sshll.u32 [#allocation8], 4
      %s58 = int_to_ptr.vmem [resolvable:$true] %s57
      %63 = dma.hbm_to_vmem [thread:$0]  %s56, 4096, %s58, [#allocation9], 64, 64, 4
    $region17: #{tpu_custom_call.1} parent=1 // pred_fallthru
      _
    // Predicated region
    $region18: #{tpu_custom_call.1} parent=1 // pred_check
      _
    $region19: #{tpu_custom_call.1} parent=1 // pred_check_branch
      %65 = sbr.rel (0) target = $region21
    $region20: #{tpu_custom_call.1} parent=1 // pred_region
      %67 = vsyncadd [#allocation9], 0
      %s69 = sshll.u32 %s4, 4
      %s70 = int_to_ptr.hbm [resolvable:$true] %s69
      %s71 = sshll.u32 [#allocation10], 4
      %s72 = int_to_ptr.vmem [resolvable:$true] %s71
      %74 = dma.hbm_to_vmem [thread:$0]  %s70, 144, %s72, [#allocation9]
    $region21: #{tpu_custom_call.1} parent=1 // pred_fallthru
      _
    // Predicated region
    $region22: #{tpu_custom_call.1} parent=1 // pred_check
      _
    $region23: #{tpu_custom_call.1} parent=1 // pred_check_branch
      %76 = sbr.rel (0) target = $region25
    $region24: #{tpu_custom_call.1} parent=1 // pred_region
      %78 = dma.done [#allocation3], 128
    $region25: #{tpu_custom_call.1} parent=1 // pred_fallthru
      _
    // Predicated region
    $region26: #{tpu_custom_call.1} parent=1 // pred_check
      _
    $region27: #{tpu_custom_call.1} parent=1 // pred_check_branch
      %80 = sbr.rel (0) target = $region29
    $region28: #{tpu_custom_call.1} parent=1 // pred_region
      %82 = dma.done [#allocation6], 8192
    $region29: #{tpu_custom_call.1} parent=1 // pred_fallthru
      _
    // Predicated region
    $region30: #{tpu_custom_call.1} parent=1 // pred_check
      _
    $region31: #{tpu_custom_call.1} parent=1 // pred_check_branch
      %84 = sbr.rel (0) target = $region33
    $region32: #{tpu_custom_call.1} parent=1 // pred_region
      %86 = dma.done [#allocation6], 16384
    $region33: #{tpu_custom_call.1} parent=1 // pred_fallthru
      _
    // Predicated region
    $region34: #{tpu_custom_call.1} parent=1 // pred_check
      _
    $region35: #{tpu_custom_call.1} parent=1 // pred_check_branch
      %88 = sbr.rel (0) target = $region37
    $region36: #{tpu_custom_call.1} parent=1 // pred_region
      %90 = dma.done [#allocation9], 4096
    $region37: #{tpu_custom_call.1} parent=1 // pred_fallthru
      _
    // Predicated region
    $region38: #{tpu_custom_call.1} parent=1 // pred_check
      _
    $region39: #{tpu_custom_call.1} parent=1 // pred_check_branch
      %92 = sbr.rel (0) target = $region41
    $region40: #{tpu_custom_call.1} parent=1 // pred_region
      %94 = dma.done [#allocation9], 144
    $region41: #{tpu_custom_call.1} parent=1 // pred_fallthru
      _
    %v95 = vld [vmem:[#allocation10] sm:$0xf]
    %v96 = vld [vmem:[#allocation10 + $0x4] sm:$0xf]
    %v97 = vld [vmem:[#allocation10 + $0x8] sm:$0x1]
    %v98 = vld [vmem:[#allocation2] sm:$0xff]
    %v99 = vld [vmem:[#allocation5] sm:$0xff]
    %v100 = vld [vmem:[#allocation5 + $0x8] sm:$0xff]
    %v101 = vld [vmem:[#allocation5 + $0x10] sm:$0xff]
    %v102 = vld [vmem:[#allocation5 + $0x18] sm:$0xff]
    %v103 = vld [vmem:[#allocation5 + $0x20] sm:$0xff]
    %v104 = vld [vmem:[#allocation5 + $0x28] sm:$0xff]
    %v105 = vld [vmem:[#allocation5 + $0x30] sm:$0xff]
    %v106 = vld [vmem:[#allocation5 + $0x38] sm:$0xff]
    %v107 = vld [vmem:[#allocation5 + $0x40] sm:$0xff]
    %v108 = vld [vmem:[#allocation5 + $0x48] sm:$0xff]
    %v109 = vld [vmem:[#allocation5 + $0x50] sm:$0xff]
    %v110 = vld [vmem:[#allocation5 + $0x58] sm:$0xff]
    %v111 = vld [vmem:[#allocation5 + $0x60] sm:$0xff]
    %v112 = vld [vmem:[#allocation5 + $0x68] sm:$0xff]
    %v113 = vld [vmem:[#allocation5 + $0x70] sm:$0xff]
    %v114 = vld [vmem:[#allocation5 + $0x78] sm:$0xff]
    %v115 = vld [vmem:[#allocation5 + $0x80] sm:$0xff]
    %v116 = vld [vmem:[#allocation5 + $0x88] sm:$0xff]
    %v117 = vld [vmem:[#allocation5 + $0x90] sm:$0xff]
    %v118 = vld [vmem:[#allocation5 + $0x98] sm:$0xff]
    %v119 = vld [vmem:[#allocation5 + $0xa0] sm:$0xff]
    %v120 = vld [vmem:[#allocation5 + $0xa8] sm:$0xff]
    %v121 = vld [vmem:[#allocation5 + $0xb0] sm:$0xff]
    %v122 = vld [vmem:[#allocation5 + $0xb8] sm:$0xff]
    %v123 = vld [vmem:[#allocation5 + $0xc0] sm:$0xff]
    %v124 = vld [vmem:[#allocation5 + $0xc8] sm:$0xff]
    %v125 = vld [vmem:[#allocation5 + $0xd0] sm:$0xff]
    %v126 = vld [vmem:[#allocation5 + $0xd8] sm:$0xff]
    %v127 = vld [vmem:[#allocation5 + $0xe0] sm:$0xff]
    %v128 = vld [vmem:[#allocation5 + $0xe8] sm:$0xff]
    %v129 = vld [vmem:[#allocation5 + $0xf0] sm:$0xff]
    %v130 = vld [vmem:[#allocation5 + $0xf8] sm:$0xff]
    %v131 = vld [vmem:[#allocation5 + $0x100] sm:$0xff]
    %v132 = vld [vmem:[#allocation5 + $0x108] sm:$0xff]
    %v133 = vld [vmem:[#allocation5 + $0x110] sm:$0xff]
    %v134 = vld [vmem:[#allocation5 + $0x118] sm:$0xff]
    %v135 = vld [vmem:[#allocation5 + $0x120] sm:$0xff]
    %v136 = vld [vmem:[#allocation5 + $0x128] sm:$0xff]
    %v137 = vld [vmem:[#allocation5 + $0x130] sm:$0xff]
    %v138 = vld [vmem:[#allocation5 + $0x138] sm:$0xff]
    %v139 = vld [vmem:[#allocation5 + $0x140] sm:$0xff]
    %v140 = vld [vmem:[#allocation5 + $0x148] sm:$0xff]
    %v141 = vld [vmem:[#allocation5 + $0x150] sm:$0xff]
    %v142 = vld [vmem:[#allocation5 + $0x158] sm:$0xff]
    %v143 = vld [vmem:[#allocation5 + $0x160] sm:$0xff]
    %v144 = vld [vmem:[#allocation5 + $0x168] sm:$0xff]
    %v145 = vld [vmem:[#allocation5 + $0x170] sm:$0xff]
    %v146 = vld [vmem:[#allocation5 + $0x178] sm:$0xff]
    %v147 = vld [vmem:[#allocation5 + $0x180] sm:$0xff]
    %v148 = vld [vmem:[#allocation5 + $0x188] sm:$0xff]
    %v149 = vld [vmem:[#allocation5 + $0x190] sm:$0xff]
    %v150 = vld [vmem:[#allocation5 + $0x198] sm:$0xff]
    %v151 = vld [vmem:[#allocation5 + $0x1a0] sm:$0xff]
    %v152 = vld [vmem:[#allocation5 + $0x1a8] sm:$0xff]
    %v153 = vld [vmem:[#allocation5 + $0x1b0] sm:$0xff]
    %v154 = vld [vmem:[#allocation5 + $0x1b8] sm:$0xff]
    %v155 = vld [vmem:[#allocation5 + $0x1c0] sm:$0xff]
    %v156 = vld [vmem:[#allocation5 + $0x1c8] sm:$0xff]
    %v157 = vld [vmem:[#allocation5 + $0x1d0] sm:$0xff]
    %v158 = vld [vmem:[#allocation5 + $0x1d8] sm:$0xff]
    %v159 = vld [vmem:[#allocation5 + $0x1e0] sm:$0xff]
    %v160 = vld [vmem:[#allocation5 + $0x1e8] sm:$0xff]
    %v161 = vld [vmem:[#allocation5 + $0x1f0] sm:$0xff]
    %v162 = vld [vmem:[#allocation5 + $0x1f8] sm:$0xff]
    %v164 = vperm.slane %v95, 0
    %v165 = vperm.slane %v95, 1
    %v166 = vperm.slane %v95, 2
    %v167 = vperm.slane %v95, 3
    %v173 = vunpack.c.l.b16 %v98
    %v174 = vunpack.c.h.b16 %v98
    %v175 = vpack.c.b16 %v173, %v173
    %v176 = vpack.c.b16 %v174, %v174
    %v243 = vunpack.c.l.b16 %v99
    %v244 = vunpack.c.h.b16 %v99
    %v245 = vunpack.c.l.b16 %v100
    %v246 = vunpack.c.h.b16 %v100
    %v247 = vunpack.c.l.b16 %v101
    %v248 = vunpack.c.h.b16 %v101
    %v249 = vunpack.c.l.b16 %v102
    %v250 = vunpack.c.h.b16 %v102
    %v251 = vunpack.c.l.b16 %v103
    %v252 = vunpack.c.h.b16 %v103
    %v253 = vunpack.c.l.b16 %v104
    %v254 = vunpack.c.h.b16 %v104
    %v255 = vunpack.c.l.b16 %v105
    %v256 = vunpack.c.h.b16 %v105
    %v257 = vunpack.c.l.b16 %v106
    %v258 = vunpack.c.h.b16 %v106
    %v259 = vunpack.c.l.b16 %v107
    %v260 = vunpack.c.h.b16 %v107
    %v261 = vunpack.c.l.b16 %v108
    %v262 = vunpack.c.h.b16 %v108
    %v263 = vunpack.c.l.b16 %v109
    %v264 = vunpack.c.h.b16 %v109
    %v265 = vunpack.c.l.b16 %v110
    %v266 = vunpack.c.h.b16 %v110
    %v267 = vunpack.c.l.b16 %v111
    %v268 = vunpack.c.h.b16 %v111
    %v269 = vunpack.c.l.b16 %v112
    %v270 = vunpack.c.h.b16 %v112
    %v271 = vunpack.c.l.b16 %v113
    %v272 = vunpack.c.h.b16 %v113
    %v273 = vunpack.c.l.b16 %v114
    %v274 = vunpack.c.h.b16 %v114
    %v275 = vunpack.c.l.b16 %v115
    %v276 = vunpack.c.h.b16 %v115
    %v277 = vunpack.c.l.b16 %v116
    %v278 = vunpack.c.h.b16 %v116
    %v279 = vunpack.c.l.b16 %v117
    %v280 = vunpack.c.h.b16 %v117
    %v281 = vunpack.c.l.b16 %v118
    %v282 = vunpack.c.h.b16 %v118
    %v283 = vunpack.c.l.b16 %v119
    %v284 = vunpack.c.h.b16 %v119
    %v285 = vunpack.c.l.b16 %v120
    %v286 = vunpack.c.h.b16 %v120
    %v287 = vunpack.c.l.b16 %v121
    %v288 = vunpack.c.h.b16 %v121
    %v289 = vunpack.c.l.b16 %v122
    %v290 = vunpack.c.h.b16 %v122
    %v291 = vunpack.c.l.b16 %v123
    %v292 = vunpack.c.h.b16 %v123
    %v293 = vunpack.c.l.b16 %v124
    %v294 = vunpack.c.h.b16 %v124
    %v295 = vunpack.c.l.b16 %v125
    %v296 = vunpack.c.h.b16 %v125
    %v297 = vunpack.c.l.b16 %v126
    %v298 = vunpack.c.h.b16 %v126
    %v299 = vunpack.c.l.b16 %v127
    %v300 = vunpack.c.h.b16 %v127
    %v301 = vunpack.c.l.b16 %v128
    %v302 = vunpack.c.h.b16 %v128
    %v303 = vunpack.c.l.b16 %v129
    %v304 = vunpack.c.h.b16 %v129
    %v305 = vunpack.c.l.b16 %v130
    %v306 = vunpack.c.h.b16 %v130
    %v307 = vunpack.c.l.b16 %v131
    %v308 = vunpack.c.h.b16 %v131
    %v309 = vunpack.c.l.b16 %v132
    %v310 = vunpack.c.h.b16 %v132
    %v311 = vunpack.c.l.b16 %v133
    %v312 = vunpack.c.h.b16 %v133
    %v313 = vunpack.c.l.b16 %v134
    %v314 = vunpack.c.h.b16 %v134
    %v315 = vunpack.c.l.b16 %v135
    %v316 = vunpack.c.h.b16 %v135
    %v317 = vunpack.c.l.b16 %v136
    %v318 = vunpack.c.h.b16 %v136
    %v319 = vunpack.c.l.b16 %v137
    %v320 = vunpack.c.h.b16 %v137
    %v321 = vunpack.c.l.b16 %v138
    %v322 = vunpack.c.h.b16 %v138
    %v323 = vunpack.c.l.b16 %v139
    %v324 = vunpack.c.h.b16 %v139
    %v325 = vunpack.c.l.b16 %v140
    %v326 = vunpack.c.h.b16 %v140
    %v327 = vunpack.c.l.b16 %v141
    %v328 = vunpack.c.h.b16 %v141
    %v329 = vunpack.c.l.b16 %v142
    %v330 = vunpack.c.h.b16 %v142
    %v331 = vunpack.c.l.b16 %v143
    %v332 = vunpack.c.h.b16 %v143
    %v333 = vunpack.c.l.b16 %v144
    %v334 = vunpack.c.h.b16 %v144
    %v335 = vunpack.c.l.b16 %v145
    %v336 = vunpack.c.h.b16 %v145
    %v337 = vunpack.c.l.b16 %v146
    %v338 = vunpack.c.h.b16 %v146
    %v339 = vunpack.c.l.b16 %v147
    %v340 = vunpack.c.h.b16 %v147
    %v341 = vunpack.c.l.b16 %v148
    %v342 = vunpack.c.h.b16 %v148
    %v343 = vunpack.c.l.b16 %v149
    %v344 = vunpack.c.h.b16 %v149
    %v345 = vunpack.c.l.b16 %v150
    %v346 = vunpack.c.h.b16 %v150
    %v347 = vunpack.c.l.b16 %v151
    %v348 = vunpack.c.h.b16 %v151
    %v349 = vunpack.c.l.b16 %v152
    %v350 = vunpack.c.h.b16 %v152
    %v351 = vunpack.c.l.b16 %v153
    %v352 = vunpack.c.h.b16 %v153
    %v353 = vunpack.c.l.b16 %v154
    %v354 = vunpack.c.h.b16 %v154
    %v355 = vunpack.c.l.b16 %v155
    %v356 = vunpack.c.h.b16 %v155
    %v357 = vunpack.c.l.b16 %v156
    %v358 = vunpack.c.h.b16 %v156
    %v359 = vunpack.c.l.b16 %v157
    %v360 = vunpack.c.h.b16 %v157
    %v361 = vunpack.c.l.b16 %v158
    %v362 = vunpack.c.h.b16 %v158
    %v363 = vunpack.c.l.b16 %v159
    %v364 = vunpack.c.h.b16 %v159
    %v365 = vunpack.c.l.b16 %v160
    %v366 = vunpack.c.h.b16 %v160
    %v367 = vunpack.c.l.b16 %v161
    %v368 = vunpack.c.h.b16 %v161
    %v369 = vunpack.c.l.b16 %v162
    %v370 = vunpack.c.h.b16 %v162
    %v371 = vpack.c.b16 %v247, %v243
    %v372 = vpack.c.b16 %v248, %v244
    %v373 = vpack.c.b16 %v249, %v245
    %v374 = vpack.c.b16 %v250, %v246
    %v375 = vpack.c.b16 %v255, %v251
    %v376 = vpack.c.b16 %v256, %v252
    %v377 = vpack.c.b16 %v257, %v253
    %v378 = vpack.c.b16 %v258, %v254
    %v379 = vpack.c.b16 %v263, %v259
    %v380 = vpack.c.b16 %v264, %v260
    %v381 = vpack.c.b16 %v265, %v261
    %v382 = vpack.c.b16 %v266, %v262
    %v383 = vpack.c.b16 %v271, %v267
    %v384 = vpack.c.b16 %v272, %v268
    %v385 = vpack.c.b16 %v273, %v269
    %v386 = vpack.c.b16 %v274, %v270
    %v387 = vpack.c.b16 %v279, %v275
    %v388 = vpack.c.b16 %v280, %v276
    %v389 = vpack.c.b16 %v281, %v277
    %v390 = vpack.c.b16 %v282, %v278
    %v391 = vpack.c.b16 %v287, %v283
    %v392 = vpack.c.b16 %v288, %v284
    %v393 = vpack.c.b16 %v289, %v285
    %v394 = vpack.c.b16 %v290, %v286
    %v395 = vpack.c.b16 %v295, %v291
    %v396 = vpack.c.b16 %v296, %v292
    %v397 = vpack.c.b16 %v297, %v293
    %v398 = vpack.c.b16 %v298, %v294
    %v399 = vpack.c.b16 %v303, %v299
    %v400 = vpack.c.b16 %v304, %v300
    %v401 = vpack.c.b16 %v305, %v301
    %v402 = vpack.c.b16 %v306, %v302
    %v403 = vpack.c.b16 %v311, %v307
    %v404 = vpack.c.b16 %v312, %v308
    %v405 = vpack.c.b16 %v313, %v309
    %v406 = vpack.c.b16 %v314, %v310
    %v407 = vpack.c.b16 %v319, %v315
    %v408 = vpack.c.b16 %v320, %v316
    %v409 = vpack.c.b16 %v321, %v317
    %v410 = vpack.c.b16 %v322, %v318
    %v411 = vpack.c.b16 %v327, %v323
    %v412 = vpack.c.b16 %v328, %v324
    %v413 = vpack.c.b16 %v329, %v325
    %v414 = vpack.c.b16 %v330, %v326
    %v415 = vpack.c.b16 %v335, %v331
    %v416 = vpack.c.b16 %v336, %v332
    %v417 = vpack.c.b16 %v337, %v333
    %v418 = vpack.c.b16 %v338, %v334
    %v419 = vpack.c.b16 %v343, %v339
    %v420 = vpack.c.b16 %v344, %v340
    %v421 = vpack.c.b16 %v345, %v341
    %v422 = vpack.c.b16 %v346, %v342
    %v423 = vpack.c.b16 %v351, %v347
    %v424 = vpack.c.b16 %v352, %v348
    %v425 = vpack.c.b16 %v353, %v349
    %v426 = vpack.c.b16 %v354, %v350
    %v427 = vpack.c.b16 %v359, %v355
    %v428 = vpack.c.b16 %v360, %v356
    %v429 = vpack.c.b16 %v361, %v357
    %v430 = vpack.c.b16 %v362, %v358
    %v431 = vpack.c.b16 %v367, %v363
    %v432 = vpack.c.b16 %v368, %v364
    %v433 = vpack.c.b16 %v369, %v365
    %v434 = vpack.c.b16 %v370, %v366
    %499 = vmatpush.bf16.msra.mxu0 %v399
    %500 = vmatpush.bf16.msra.mxu0 %v395
    %501 = vmatpush.bf16.msra.mxu0 %v391
    %502 = vmatpush.bf16.msra.mxu0 %v387
    %503 = vmatpush.bf16.msra.mxu0 %v383
    %504 = vmatpush.bf16.msra.mxu0 %v379
    %505 = vmatpush.bf16.msra.mxu0 %v375
    %506 = vmatpush.bf16.msra.mxu0 %v371
    %507 = vmatmul.bf16.gmra.mxu0 %v175
    %v508 = vpop.f32.mrf.mxu0
    %v509 = vadd.f32 %v164, %v508
    %v510 = vpop.f32.mrf.mxu0
    %511 = vdwg.mxu0
    %512 = vmatpush.bf16.msra.mxu0 %v431
    %513 = vmatpush.bf16.msra.mxu0 %v427
    %514 = vmatpush.bf16.msra.mxu0 %v423
    %515 = vmatpush.bf16.msra.mxu0 %v419
    %516 = vmatpush.bf16.msra.mxu0 %v415
    %517 = vmatpush.bf16.msra.mxu0 %v411
    %518 = vmatpush.bf16.msra.mxu0 %v407
    %519 = vmatpush.bf16.msra.mxu0 %v403
    %520 = vmatmul.bf16.gmra.mxu0 %v176
    %v521 = vpop.f32.mrf.mxu0
    %v522 = vadd.f32 %v509, %v521
    %v523 = vpop.f32.mrf.mxu0
    %524 = vdwg.mxu0
    %525 = vmatpush.bf16.msra.mxu0 %v400
    %526 = vmatpush.bf16.msra.mxu0 %v396
    %527 = vmatpush.bf16.msra.mxu0 %v392
    %528 = vmatpush.bf16.msra.mxu0 %v388
    %529 = vmatpush.bf16.msra.mxu0 %v384
    %530 = vmatpush.bf16.msra.mxu0 %v380
    %531 = vmatpush.bf16.msra.mxu0 %v376
    %532 = vmatpush.bf16.msra.mxu0 %v372
    %533 = vmatmul.bf16.gmra.mxu0 %v175
    %v534 = vpop.f32.mrf.mxu0
    %v535 = vadd.f32 %v165, %v534
    %v536 = vpop.f32.mrf.mxu0
    %537 = vdwg.mxu0
    %538 = vmatpush.bf16.msra.mxu0 %v432
    %539 = vmatpush.bf16.msra.mxu0 %v428
    %540 = vmatpush.bf16.msra.mxu0 %v424
    %541 = vmatpush.bf16.msra.mxu0 %v420
    %542 = vmatpush.bf16.msra.mxu0 %v416
    %543 = vmatpush.bf16.msra.mxu0 %v412
    %544 = vmatpush.bf16.msra.mxu0 %v408
    %545 = vmatpush.bf16.msra.mxu0 %v404
    %546 = vmatmul.bf16.gmra.mxu0 %v176
    %v547 = vpop.f32.mrf.mxu0
    %v548 = vadd.f32 %v535, %v547
    %v549 = vpop.f32.mrf.mxu0
    %550 = vdwg.mxu0
    %551 = vmatpush.bf16.msra.mxu0 %v401
    %552 = vmatpush.bf16.msra.mxu0 %v397
    %553 = vmatpush.bf16.msra.mxu0 %v393
    %554 = vmatpush.bf16.msra.mxu0 %v389
    %555 = vmatpush.bf16.msra.mxu0 %v385
    %556 = vmatpush.bf16.msra.mxu0 %v381
    %557 = vmatpush.bf16.msra.mxu0 %v377
    %558 = vmatpush.bf16.msra.mxu0 %v373
    %559 = vmatmul.bf16.gmra.mxu0 %v175
    %v560 = vpop.f32.mrf.mxu0
    %v561 = vadd.f32 %v166, %v560
    %v562 = vpop.f32.mrf.mxu0
    %563 = vdwg.mxu0
    %564 = vmatpush.bf16.msra.mxu0 %v433
    %565 = vmatpush.bf16.msra.mxu0 %v429
    %566 = vmatpush.bf16.msra.mxu0 %v425
    %567 = vmatpush.bf16.msra.mxu0 %v421
    %568 = vmatpush.bf16.msra.mxu0 %v417
    %569 = vmatpush.bf16.msra.mxu0 %v413
    %570 = vmatpush.bf16.msra.mxu0 %v409
    %571 = vmatpush.bf16.msra.mxu0 %v405
    %572 = vmatmul.bf16.gmra.mxu0 %v176
    %v573 = vpop.f32.mrf.mxu0
    %v574 = vadd.f32 %v561, %v573
    %v575 = vpop.f32.mrf.mxu0
    %576 = vdwg.mxu0
    %577 = vmatpush.bf16.msra.mxu0 %v402
    %578 = vmatpush.bf16.msra.mxu0 %v398
    %579 = vmatpush.bf16.msra.mxu0 %v394
    %580 = vmatpush.bf16.msra.mxu0 %v390
    %581 = vmatpush.bf16.msra.mxu0 %v386
    %582 = vmatpush.bf16.msra.mxu0 %v382
    %583 = vmatpush.bf16.msra.mxu0 %v378
    %584 = vmatpush.bf16.msra.mxu0 %v374
    %585 = vmatmul.bf16.gmra.mxu0 %v175
    %v586 = vpop.f32.mrf.mxu0
    %v587 = vadd.f32 %v167, %v586
    %v588 = vpop.f32.mrf.mxu0
    %589 = vdwg.mxu0
    %590 = vmatpush.bf16.msra.mxu0 %v434
    %591 = vmatpush.bf16.msra.mxu0 %v430
    %592 = vmatpush.bf16.msra.mxu0 %v426
    %593 = vmatpush.bf16.msra.mxu0 %v422
    %594 = vmatpush.bf16.msra.mxu0 %v418
    %595 = vmatpush.bf16.msra.mxu0 %v414
    %596 = vmatpush.bf16.msra.mxu0 %v410
    %597 = vmatpush.bf16.msra.mxu0 %v406
    %598 = vmatmul.bf16.gmra.mxu0 %v176
    %v599 = vpop.f32.mrf.mxu0
    %v600 = vadd.f32 %v587, %v599
    %v601 = vpop.f32.mrf.mxu0
    %602 = vdwg.mxu0
    %v603 = vmax.f32 %v522, 0.0
    %v604 = vmax.f32 %v548, 0.0
    %v605 = vmax.f32 %v574, 0.0
    %v606 = vmax.f32 %v600, 0.0
    %v607 = vpack.c.bf16 %v603, %v603
    %v608 = vpack.c.bf16 %v604, %v604
    %v609 = vpack.c.bf16 %v605, %v605
    %v610 = vpack.c.bf16 %v606, %v606
    %v611 = vld [vmem:[#allocation7] sm:$0xff]
    %v612 = vld [vmem:[#allocation7 + $0x8] sm:$0xff]
    %v613 = vld [vmem:[#allocation7 + $0x10] sm:$0xff]
    %v614 = vld [vmem:[#allocation7 + $0x18] sm:$0xff]
    %v615 = vld [vmem:[#allocation7 + $0x20] sm:$0xff]
    %v616 = vld [vmem:[#allocation7 + $0x28] sm:$0xff]
    %v617 = vld [vmem:[#allocation7 + $0x30] sm:$0xff]
    %v618 = vld [vmem:[#allocation7 + $0x38] sm:$0xff]
    %v619 = vld [vmem:[#allocation7 + $0x40] sm:$0xff]
    %v620 = vld [vmem:[#allocation7 + $0x48] sm:$0xff]
    %v621 = vld [vmem:[#allocation7 + $0x50] sm:$0xff]
    %v622 = vld [vmem:[#allocation7 + $0x58] sm:$0xff]
    %v623 = vld [vmem:[#allocation7 + $0x60] sm:$0xff]
    %v624 = vld [vmem:[#allocation7 + $0x68] sm:$0xff]
    %v625 = vld [vmem:[#allocation7 + $0x70] sm:$0xff]
    %v626 = vld [vmem:[#allocation7 + $0x78] sm:$0xff]
    %v627 = vld [vmem:[#allocation7 + $0x80] sm:$0xff]
    %v628 = vld [vmem:[#allocation7 + $0x88] sm:$0xff]
    %v629 = vld [vmem:[#allocation7 + $0x90] sm:$0xff]
    %v630 = vld [vmem:[#allocation7 + $0x98] sm:$0xff]
    %v631 = vld [vmem:[#allocation7 + $0xa0] sm:$0xff]
    %v632 = vld [vmem:[#allocation7 + $0xa8] sm:$0xff]
    %v633 = vld [vmem:[#allocation7 + $0xb0] sm:$0xff]
    %v634 = vld [vmem:[#allocation7 + $0xb8] sm:$0xff]
    %v635 = vld [vmem:[#allocation7 + $0xc0] sm:$0xff]
    %v636 = vld [vmem:[#allocation7 + $0xc8] sm:$0xff]
    %v637 = vld [vmem:[#allocation7 + $0xd0] sm:$0xff]
    %v638 = vld [vmem:[#allocation7 + $0xd8] sm:$0xff]
    %v639 = vld [vmem:[#allocation7 + $0xe0] sm:$0xff]
    %v640 = vld [vmem:[#allocation7 + $0xe8] sm:$0xff]
    %v641 = vld [vmem:[#allocation7 + $0xf0] sm:$0xff]
    %v642 = vld [vmem:[#allocation7 + $0xf8] sm:$0xff]
    %v643 = vld [vmem:[#allocation7 + $0x100] sm:$0xff]
    %v644 = vld [vmem:[#allocation7 + $0x108] sm:$0xff]
    %v645 = vld [vmem:[#allocation7 + $0x110] sm:$0xff]
    %v646 = vld [vmem:[#allocation7 + $0x118] sm:$0xff]
    %v647 = vld [vmem:[#allocation7 + $0x120] sm:$0xff]
    %v648 = vld [vmem:[#allocation7 + $0x128] sm:$0xff]
    %v649 = vld [vmem:[#allocation7 + $0x130] sm:$0xff]
    %v650 = vld [vmem:[#allocation7 + $0x138] sm:$0xff]
    %v651 = vld [vmem:[#allocation7 + $0x140] sm:$0xff]
    %v652 = vld [vmem:[#allocation7 + $0x148] sm:$0xff]
    %v653 = vld [vmem:[#allocation7 + $0x150] sm:$0xff]
    %v654 = vld [vmem:[#allocation7 + $0x158] sm:$0xff]
    %v655 = vld [vmem:[#allocation7 + $0x160] sm:$0xff]
    %v656 = vld [vmem:[#allocation7 + $0x168] sm:$0xff]
    %v657 = vld [vmem:[#allocation7 + $0x170] sm:$0xff]
    %v658 = vld [vmem:[#allocation7 + $0x178] sm:$0xff]
    %v659 = vld [vmem:[#allocation7 + $0x180] sm:$0xff]
    %v660 = vld [vmem:[#allocation7 + $0x188] sm:$0xff]
    %v661 = vld [vmem:[#allocation7 + $0x190] sm:$0xff]
    %v662 = vld [vmem:[#allocation7 + $0x198] sm:$0xff]
    %v663 = vld [vmem:[#allocation7 + $0x1a0] sm:$0xff]
    %v664 = vld [vmem:[#allocation7 + $0x1a8] sm:$0xff]
    %v665 = vld [vmem:[#allocation7 + $0x1b0] sm:$0xff]
    %v666 = vld [vmem:[#allocation7 + $0x1b8] sm:$0xff]
    %v667 = vld [vmem:[#allocation7 + $0x1c0] sm:$0xff]
    %v668 = vld [vmem:[#allocation7 + $0x1c8] sm:$0xff]
    %v669 = vld [vmem:[#allocation7 + $0x1d0] sm:$0xff]
    %v670 = vld [vmem:[#allocation7 + $0x1d8] sm:$0xff]
    %v671 = vld [vmem:[#allocation7 + $0x1e0] sm:$0xff]
    %v672 = vld [vmem:[#allocation7 + $0x1e8] sm:$0xff]
    %v673 = vld [vmem:[#allocation7 + $0x1f0] sm:$0xff]
    %v674 = vld [vmem:[#allocation7 + $0x1f8] sm:$0xff]
    %v675 = vld [vmem:[#allocation7 + $0x200] sm:$0xff]
    %v676 = vld [vmem:[#allocation7 + $0x208] sm:$0xff]
    %v677 = vld [vmem:[#allocation7 + $0x210] sm:$0xff]
    %v678 = vld [vmem:[#allocation7 + $0x218] sm:$0xff]
    %v679 = vld [vmem:[#allocation7 + $0x220] sm:$0xff]
    %v680 = vld [vmem:[#allocation7 + $0x228] sm:$0xff]
    %v681 = vld [vmem:[#allocation7 + $0x230] sm:$0xff]
    %v682 = vld [vmem:[#allocation7 + $0x238] sm:$0xff]
    %v683 = vld [vmem:[#allocation7 + $0x240] sm:$0xff]
    %v684 = vld [vmem:[#allocation7 + $0x248] sm:$0xff]
    %v685 = vld [vmem:[#allocation7 + $0x250] sm:$0xff]
    %v686 = vld [vmem:[#allocation7 + $0x258] sm:$0xff]
    %v687 = vld [vmem:[#allocation7 + $0x260] sm:$0xff]
    %v688 = vld [vmem:[#allocation7 + $0x268] sm:$0xff]
    %v689 = vld [vmem:[#allocation7 + $0x270] sm:$0xff]
    %v690 = vld [vmem:[#allocation7 + $0x278] sm:$0xff]
    %v691 = vld [vmem:[#allocation7 + $0x280] sm:$0xff]
    %v692 = vld [vmem:[#allocation7 + $0x288] sm:$0xff]
    %v693 = vld [vmem:[#allocation7 + $0x290] sm:$0xff]
    %v694 = vld [vmem:[#allocation7 + $0x298] sm:$0xff]
    %v695 = vld [vmem:[#allocation7 + $0x2a0] sm:$0xff]
    %v696 = vld [vmem:[#allocation7 + $0x2a8] sm:$0xff]
    %v697 = vld [vmem:[#allocation7 + $0x2b0] sm:$0xff]
    %v698 = vld [vmem:[#allocation7 + $0x2b8] sm:$0xff]
    %v699 = vld [vmem:[#allocation7 + $0x2c0] sm:$0xff]
    %v700 = vld [vmem:[#allocation7 + $0x2c8] sm:$0xff]
    %v701 = vld [vmem:[#allocation7 + $0x2d0] sm:$0xff]
    %v702 = vld [vmem:[#allocation7 + $0x2d8] sm:$0xff]
    %v703 = vld [vmem:[#allocation7 + $0x2e0] sm:$0xff]
    %v704 = vld [vmem:[#allocation7 + $0x2e8] sm:$0xff]
    %v705 = vld [vmem:[#allocation7 + $0x2f0] sm:$0xff]
    %v706 = vld [vmem:[#allocation7 + $0x2f8] sm:$0xff]
    %v707 = vld [vmem:[#allocation7 + $0x300] sm:$0xff]
    %v708 = vld [vmem:[#allocation7 + $0x308] sm:$0xff]
    %v709 = vld [vmem:[#allocation7 + $0x310] sm:$0xff]
    %v710 = vld [vmem:[#allocation7 + $0x318] sm:$0xff]
    %v711 = vld [vmem:[#allocation7 + $0x320] sm:$0xff]
    %v712 = vld [vmem:[#allocation7 + $0x328] sm:$0xff]
    %v713 = vld [vmem:[#allocation7 + $0x330] sm:$0xff]
    %v714 = vld [vmem:[#allocation7 + $0x338] sm:$0xff]
    %v715 = vld [vmem:[#allocation7 + $0x340] sm:$0xff]
    %v716 = vld [vmem:[#allocation7 + $0x348] sm:$0xff]
    %v717 = vld [vmem:[#allocation7 + $0x350] sm:$0xff]
    %v718 = vld [vmem:[#allocation7 + $0x358] sm:$0xff]
    %v719 = vld [vmem:[#allocation7 + $0x360] sm:$0xff]
    %v720 = vld [vmem:[#allocation7 + $0x368] sm:$0xff]
    %v721 = vld [vmem:[#allocation7 + $0x370] sm:$0xff]
    %v722 = vld [vmem:[#allocation7 + $0x378] sm:$0xff]
    %v723 = vld [vmem:[#allocation7 + $0x380] sm:$0xff]
    %v724 = vld [vmem:[#allocation7 + $0x388] sm:$0xff]
    %v725 = vld [vmem:[#allocation7 + $0x390] sm:$0xff]
    %v726 = vld [vmem:[#allocation7 + $0x398] sm:$0xff]
    %v727 = vld [vmem:[#allocation7 + $0x3a0] sm:$0xff]
    %v728 = vld [vmem:[#allocation7 + $0x3a8] sm:$0xff]
    %v729 = vld [vmem:[#allocation7 + $0x3b0] sm:$0xff]
    %v730 = vld [vmem:[#allocation7 + $0x3b8] sm:$0xff]
    %v731 = vld [vmem:[#allocation7 + $0x3c0] sm:$0xff]
    %v732 = vld [vmem:[#allocation7 + $0x3c8] sm:$0xff]
    %v733 = vld [vmem:[#allocation7 + $0x3d0] sm:$0xff]
    %v734 = vld [vmem:[#allocation7 + $0x3d8] sm:$0xff]
    %v735 = vld [vmem:[#allocation7 + $0x3e0] sm:$0xff]
    %v736 = vld [vmem:[#allocation7 + $0x3e8] sm:$0xff]
    %v737 = vld [vmem:[#allocation7 + $0x3f0] sm:$0xff]
    %v738 = vld [vmem:[#allocation7 + $0x3f8] sm:$0xff]
    %v740 = vperm.slane %v96, 0
    %v741 = vperm.slane %v96, 1
    %v742 = vperm.slane %v96, 2
    %v743 = vperm.slane %v96, 3
    %v876 = vunpack.c.l.b16 %v611
    %v877 = vunpack.c.h.b16 %v611
    %v878 = vunpack.c.l.b16 %v612
    %v879 = vunpack.c.h.b16 %v612
    %v880 = vunpack.c.l.b16 %v613
    %v881 = vunpack.c.h.b16 %v613
    %v882 = vunpack.c.l.b16 %v614
    %v883 = vunpack.c.h.b16 %v614
    %v884 = vunpack.c.l.b16 %v615
    %v885 = vunpack.c.h.b16 %v615
    %v886 = vunpack.c.l.b16 %v616
    %v887 = vunpack.c.h.b16 %v616
    %v888 = vunpack.c.l.b16 %v617
    %v889 = vunpack.c.h.b16 %v617
    %v890 = vunpack.c.l.b16 %v618
    %v891 = vunpack.c.h.b16 %v618
    %v892 = vunpack.c.l.b16 %v619
    %v893 = vunpack.c.h.b16 %v619
    %v894 = vunpack.c.l.b16 %v620
    %v895 = vunpack.c.h.b16 %v620
    %v896 = vunpack.c.l.b16 %v621
    %v897 = vunpack.c.h.b16 %v621
    %v898 = vunpack.c.l.b16 %v622
    %v899 = vunpack.c.h.b16 %v622
    %v900 = vunpack.c.l.b16 %v623
    %v901 = vunpack.c.h.b16 %v623
    %v902 = vunpack.c.l.b16 %v624
    %v903 = vunpack.c.h.b16 %v624
    %v904 = vunpack.c.l.b16 %v625
    %v905 = vunpack.c.h.b16 %v625
    %v906 = vunpack.c.l.b16 %v626
    %v907 = vunpack.c.h.b16 %v626
    %v908 = vunpack.c.l.b16 %v627
    %v909 = vunpack.c.h.b16 %v627
    %v910 = vunpack.c.l.b16 %v628
    %v911 = vunpack.c.h.b16 %v628
    %v912 = vunpack.c.l.b16 %v629
    %v913 = vunpack.c.h.b16 %v629
    %v914 = vunpack.c.l.b16 %v630
    %v915 = vunpack.c.h.b16 %v630
    %v916 = vunpack.c.l.b16 %v631
    %v917 = vunpack.c.h.b16 %v631
    %v918 = vunpack.c.l.b16 %v632
    %v919 = vunpack.c.h.b16 %v632
    %v920 = vunpack.c.l.b16 %v633
    %v921 = vunpack.c.h.b16 %v633
    %v922 = vunpack.c.l.b16 %v634
    %v923 = vunpack.c.h.b16 %v634
    %v924 = vunpack.c.l.b16 %v635
    %v925 = vunpack.c.h.b16 %v635
    %v926 = vunpack.c.l.b16 %v636
    %v927 = vunpack.c.h.b16 %v636
    %v928 = vunpack.c.l.b16 %v637
    %v929 = vunpack.c.h.b16 %v637
    %v930 = vunpack.c.l.b16 %v638
    %v931 = vunpack.c.h.b16 %v638
    %v932 = vunpack.c.l.b16 %v639
    %v933 = vunpack.c.h.b16 %v639
    %v934 = vunpack.c.l.b16 %v640
    %v935 = vunpack.c.h.b16 %v640
    %v936 = vunpack.c.l.b16 %v641
    %v937 = vunpack.c.h.b16 %v641
    %v938 = vunpack.c.l.b16 %v642
    %v939 = vunpack.c.h.b16 %v642
    %v940 = vunpack.c.l.b16 %v643
    %v941 = vunpack.c.h.b16 %v643
    %v942 = vunpack.c.l.b16 %v644
    %v943 = vunpack.c.h.b16 %v644
    %v944 = vunpack.c.l.b16 %v645
    %v945 = vunpack.c.h.b16 %v645
    %v946 = vunpack.c.l.b16 %v646
    %v947 = vunpack.c.h.b16 %v646
    %v948 = vunpack.c.l.b16 %v647
    %v949 = vunpack.c.h.b16 %v647
    %v950 = vunpack.c.l.b16 %v648
    %v951 = vunpack.c.h.b16 %v648
    %v952 = vunpack.c.l.b16 %v649
    %v953 = vunpack.c.h.b16 %v649
    %v954 = vunpack.c.l.b16 %v650
    %v955 = vunpack.c.h.b16 %v650
    %v956 = vunpack.c.l.b16 %v651
    %v957 = vunpack.c.h.b16 %v651
    %v958 = vunpack.c.l.b16 %v652
    %v959 = vunpack.c.h.b16 %v652
    %v960 = vunpack.c.l.b16 %v653
    %v961 = vunpack.c.h.b16 %v653
    %v962 = vunpack.c.l.b16 %v654
    %v963 = vunpack.c.h.b16 %v654
    %v964 = vunpack.c.l.b16 %v655
    %v965 = vunpack.c.h.b16 %v655
    %v966 = vunpack.c.l.b16 %v656
    %v967 = vunpack.c.h.b16 %v656
    %v968 = vunpack.c.l.b16 %v657
    %v969 = vunpack.c.h.b16 %v657
    %v970 = vunpack.c.l.b16 %v658
    %v971 = vunpack.c.h.b16 %v658
    %v972 = vunpack.c.l.b16 %v659
    %v973 = vunpack.c.h.b16 %v659
    %v974 = vunpack.c.l.b16 %v660
    %v975 = vunpack.c.h.b16 %v660
    %v976 = vunpack.c.l.b16 %v661
    %v977 = vunpack.c.h.b16 %v661
    %v978 = vunpack.c.l.b16 %v662
    %v979 = vunpack.c.h.b16 %v662
    %v980 = vunpack.c.l.b16 %v663
    %v981 = vunpack.c.h.b16 %v663
    %v982 = vunpack.c.l.b16 %v664
    %v983 = vunpack.c.h.b16 %v664
    %v984 = vunpack.c.l.b16 %v665
    %v985 = vunpack.c.h.b16 %v665
    %v986 = vunpack.c.l.b16 %v666
    %v987 = vunpack.c.h.b16 %v666
    %v988 = vunpack.c.l.b16 %v667
    %v989 = vunpack.c.h.b16 %v667
    %v990 = vunpack.c.l.b16 %v668
    %v991 = vunpack.c.h.b16 %v668
    %v992 = vunpack.c.l.b16 %v669
    %v993 = vunpack.c.h.b16 %v669
    %v994 = vunpack.c.l.b16 %v670
    %v995 = vunpack.c.h.b16 %v670
    %v996 = vunpack.c.l.b16 %v671
    %v997 = vunpack.c.h.b16 %v671
    %v998 = vunpack.c.l.b16 %v672
    %v999 = vunpack.c.h.b16 %v672
    %v1000 = vunpack.c.l.b16 %v673
    %v1001 = vunpack.c.h.b16 %v673
    %v1002 = vunpack.c.l.b16 %v674
    %v1003 = vunpack.c.h.b16 %v674
    %v1004 = vunpack.c.l.b16 %v675
    %v1005 = vunpack.c.h.b16 %v675
    %v1006 = vunpack.c.l.b16 %v676
    %v1007 = vunpack.c.h.b16 %v676
    %v1008 = vunpack.c.l.b16 %v677
    %v1009 = vunpack.c.h.b16 %v677
    %v1010 = vunpack.c.l.b16 %v678
    %v1011 = vunpack.c.h.b16 %v678
    %v1012 = vunpack.c.l.b16 %v679
    %v1013 = vunpack.c.h.b16 %v679
    %v1014 = vunpack.c.l.b16 %v680
    %v1015 = vunpack.c.h.b16 %v680
    %v1016 = vunpack.c.l.b16 %v681
    %v1017 = vunpack.c.h.b16 %v681
    %v1018 = vunpack.c.l.b16 %v682
    %v1019 = vunpack.c.h.b16 %v682
    %v1020 = vunpack.c.l.b16 %v683
    %v1021 = vunpack.c.h.b16 %v683
    %v1022 = vunpack.c.l.b16 %v684
    %v1023 = vunpack.c.h.b16 %v684
    %v1024 = vunpack.c.l.b16 %v685
    %v1025 = vunpack.c.h.b16 %v685
    %v1026 = vunpack.c.l.b16 %v686
    %v1027 = vunpack.c.h.b16 %v686
    %v1028 = vunpack.c.l.b16 %v687
    %v1029 = vunpack.c.h.b16 %v687
    %v1030 = vunpack.c.l.b16 %v688
    %v1031 = vunpack.c.h.b16 %v688
    %v1032 = vunpack.c.l.b16 %v689
    %v1033 = vunpack.c.h.b16 %v689
    %v1034 = vunpack.c.l.b16 %v690
    %v1035 = vunpack.c.h.b16 %v690
    %v1036 = vunpack.c.l.b16 %v691
    %v1037 = vunpack.c.h.b16 %v691
    %v1038 = vunpack.c.l.b16 %v692
    %v1039 = vunpack.c.h.b16 %v692
    %v1040 = vunpack.c.l.b16 %v693
    %v1041 = vunpack.c.h.b16 %v693
    %v1042 = vunpack.c.l.b16 %v694
    %v1043 = vunpack.c.h.b16 %v694
    %v1044 = vunpack.c.l.b16 %v695
    %v1045 = vunpack.c.h.b16 %v695
    %v1046 = vunpack.c.l.b16 %v696
    %v1047 = vunpack.c.h.b16 %v696
    %v1048 = vunpack.c.l.b16 %v697
    %v1049 = vunpack.c.h.b16 %v697
    %v1050 = vunpack.c.l.b16 %v698
    %v1051 = vunpack.c.h.b16 %v698
    %v1052 = vunpack.c.l.b16 %v699
    %v1053 = vunpack.c.h.b16 %v699
    %v1054 = vunpack.c.l.b16 %v700
    %v1055 = vunpack.c.h.b16 %v700
    %v1056 = vunpack.c.l.b16 %v701
    %v1057 = vunpack.c.h.b16 %v701
    %v1058 = vunpack.c.l.b16 %v702
    %v1059 = vunpack.c.h.b16 %v702
    %v1060 = vunpack.c.l.b16 %v703
    %v1061 = vunpack.c.h.b16 %v703
    %v1062 = vunpack.c.l.b16 %v704
    %v1063 = vunpack.c.h.b16 %v704
    %v1064 = vunpack.c.l.b16 %v705
    %v1065 = vunpack.c.h.b16 %v705
    %v1066 = vunpack.c.l.b16 %v706
    %v1067 = vunpack.c.h.b16 %v706
    %v1068 = vunpack.c.l.b16 %v707
    %v1069 = vunpack.c.h.b16 %v707
    %v1070 = vunpack.c.l.b16 %v708
    %v1071 = vunpack.c.h.b16 %v708
    %v1072 = vunpack.c.l.b16 %v709
    %v1073 = vunpack.c.h.b16 %v709
    %v1074 = vunpack.c.l.b16 %v710
    %v1075 = vunpack.c.h.b16 %v710
    %v1076 = vunpack.c.l.b16 %v711
    %v1077 = vunpack.c.h.b16 %v711
    %v1078 = vunpack.c.l.b16 %v712
    %v1079 = vunpack.c.h.b16 %v712
    %v1080 = vunpack.c.l.b16 %v713
    %v1081 = vunpack.c.h.b16 %v713
    %v1082 = vunpack.c.l.b16 %v714
    %v1083 = vunpack.c.h.b16 %v714
    %v1084 = vunpack.c.l.b16 %v715
    %v1085 = vunpack.c.h.b16 %v715
    %v1086 = vunpack.c.l.b16 %v716
    %v1087 = vunpack.c.h.b16 %v716
    %v1088 = vunpack.c.l.b16 %v717
    %v1089 = vunpack.c.h.b16 %v717
    %v1090 = vunpack.c.l.b16 %v718
    %v1091 = vunpack.c.h.b16 %v718
    %v1092 = vunpack.c.l.b16 %v719
    %v1093 = vunpack.c.h.b16 %v719
    %v1094 = vunpack.c.l.b16 %v720
    %v1095 = vunpack.c.h.b16 %v720
    %v1096 = vunpack.c.l.b16 %v721
    %v1097 = vunpack.c.h.b16 %v721
    %v1098 = vunpack.c.l.b16 %v722
    %v1099 = vunpack.c.h.b16 %v722
    %v1100 = vunpack.c.l.b16 %v723
    %v1101 = vunpack.c.h.b16 %v723
    %v1102 = vunpack.c.l.b16 %v724
    %v1103 = vunpack.c.h.b16 %v724
    %v1104 = vunpack.c.l.b16 %v725
    %v1105 = vunpack.c.h.b16 %v725
    %v1106 = vunpack.c.l.b16 %v726
    %v1107 = vunpack.c.h.b16 %v726
    %v1108 = vunpack.c.l.b16 %v727
    %v1109 = vunpack.c.h.b16 %v727
    %v1110 = vunpack.c.l.b16 %v728
    %v1111 = vunpack.c.h.b16 %v728
    %v1112 = vunpack.c.l.b16 %v729
    %v1113 = vunpack.c.h.b16 %v729
    %v1114 = vunpack.c.l.b16 %v730
    %v1115 = vunpack.c.h.b16 %v730
    %v1116 = vunpack.c.l.b16 %v731
    %v1117 = vunpack.c.h.b16 %v731
    %v1118 = vunpack.c.l.b16 %v732
    %v1119 = vunpack.c.h.b16 %v732
    %v1120 = vunpack.c.l.b16 %v733
    %v1121 = vunpack.c.h.b16 %v733
    %v1122 = vunpack.c.l.b16 %v734
    %v1123 = vunpack.c.h.b16 %v734
    %v1124 = vunpack.c.l.b16 %v735
    %v1125 = vunpack.c.h.b16 %v735
    %v1126 = vunpack.c.l.b16 %v736
    %v1127 = vunpack.c.h.b16 %v736
    %v1128 = vunpack.c.l.b16 %v737
    %v1129 = vunpack.c.h.b16 %v737
    %v1130 = vunpack.c.l.b16 %v738
    %v1131 = vunpack.c.h.b16 %v738
    %v1132 = vpack.c.b16 %v880, %v876
    %v1133 = vpack.c.b16 %v881, %v877
    %v1134 = vpack.c.b16 %v882, %v878
    %v1135 = vpack.c.b16 %v883, %v879
    %v1136 = vpack.c.b16 %v888, %v884
    %v1137 = vpack.c.b16 %v889, %v885
    %v1138 = vpack.c.b16 %v890, %v886
    %v1139 = vpack.c.b16 %v891, %v887
    %v1140 = vpack.c.b16 %v896, %v892
    %v1141 = vpack.c.b16 %v897, %v893
    %v1142 = vpack.c.b16 %v898, %v894
    %v1143 = vpack.c.b16 %v899, %v895
    %v1144 = vpack.c.b16 %v904, %v900
    %v1145 = vpack.c.b16 %v905, %v901
    %v1146 = vpack.c.b16 %v906, %v902
    %v1147 = vpack.c.b16 %v907, %v903
    %v1148 = vpack.c.b16 %v912, %v908
    %v1149 = vpack.c.b16 %v913, %v909
    %v1150 = vpack.c.b16 %v914, %v910
    %v1151 = vpack.c.b16 %v915, %v911
    %v1152 = vpack.c.b16 %v920, %v916
    %v1153 = vpack.c.b16 %v921, %v917
    %v1154 = vpack.c.b16 %v922, %v918
    %v1155 = vpack.c.b16 %v923, %v919
    %v1156 = vpack.c.b16 %v928, %v924
    %v1157 = vpack.c.b16 %v929, %v925
    %v1158 = vpack.c.b16 %v930, %v926
    %v1159 = vpack.c.b16 %v931, %v927
    %v1160 = vpack.c.b16 %v936, %v932
    %v1161 = vpack.c.b16 %v937, %v933
    %v1162 = vpack.c.b16 %v938, %v934
    %v1163 = vpack.c.b16 %v939, %v935
    %v1164 = vpack.c.b16 %v944, %v940
    %v1165 = vpack.c.b16 %v945, %v941
    %v1166 = vpack.c.b16 %v946, %v942
    %v1167 = vpack.c.b16 %v947, %v943
    %v1168 = vpack.c.b16 %v952, %v948
    %v1169 = vpack.c.b16 %v953, %v949
    %v1170 = vpack.c.b16 %v954, %v950
    %v1171 = vpack.c.b16 %v955, %v951
    %v1172 = vpack.c.b16 %v960, %v956
    %v1173 = vpack.c.b16 %v961, %v957
    %v1174 = vpack.c.b16 %v962, %v958
    %v1175 = vpack.c.b16 %v963, %v959
    %v1176 = vpack.c.b16 %v968, %v964
    %v1177 = vpack.c.b16 %v969, %v965
    %v1178 = vpack.c.b16 %v970, %v966
    %v1179 = vpack.c.b16 %v971, %v967
    %v1180 = vpack.c.b16 %v976, %v972
    %v1181 = vpack.c.b16 %v977, %v973
    %v1182 = vpack.c.b16 %v978, %v974
    %v1183 = vpack.c.b16 %v979, %v975
    %v1184 = vpack.c.b16 %v984, %v980
    %v1185 = vpack.c.b16 %v985, %v981
    %v1186 = vpack.c.b16 %v986, %v982
    %v1187 = vpack.c.b16 %v987, %v983
    %v1188 = vpack.c.b16 %v992, %v988
    %v1189 = vpack.c.b16 %v993, %v989
    %v1190 = vpack.c.b16 %v994, %v990
    %v1191 = vpack.c.b16 %v995, %v991
    %v1192 = vpack.c.b16 %v1000, %v996
    %v1193 = vpack.c.b16 %v1001, %v997
    %v1194 = vpack.c.b16 %v1002, %v998
    %v1195 = vpack.c.b16 %v1003, %v999
    %v1196 = vpack.c.b16 %v1008, %v1004
    %v1197 = vpack.c.b16 %v1009, %v1005
    %v1198 = vpack.c.b16 %v1010, %v1006
    %v1199 = vpack.c.b16 %v1011, %v1007
    %v1200 = vpack.c.b16 %v1016, %v1012
    %v1201 = vpack.c.b16 %v1017, %v1013
    %v1202 = vpack.c.b16 %v1018, %v1014
    %v1203 = vpack.c.b16 %v1019, %v1015
    %v1204 = vpack.c.b16 %v1024, %v1020
    %v1205 = vpack.c.b16 %v1025, %v1021
    %v1206 = vpack.c.b16 %v1026, %v1022
    %v1207 = vpack.c.b16 %v1027, %v1023
    %v1208 = vpack.c.b16 %v1032, %v1028
    %v1209 = vpack.c.b16 %v1033, %v1029
    %v1210 = vpack.c.b16 %v1034, %v1030
    %v1211 = vpack.c.b16 %v1035, %v1031
    %v1212 = vpack.c.b16 %v1040, %v1036
    %v1213 = vpack.c.b16 %v1041, %v1037
    %v1214 = vpack.c.b16 %v1042, %v1038
    %v1215 = vpack.c.b16 %v1043, %v1039
    %v1216 = vpack.c.b16 %v1048, %v1044
    %v1217 = vpack.c.b16 %v1049, %v1045
    %v1218 = vpack.c.b16 %v1050, %v1046
    %v1219 = vpack.c.b16 %v1051, %v1047
    %v1220 = vpack.c.b16 %v1056, %v1052
    %v1221 = vpack.c.b16 %v1057, %v1053
    %v1222 = vpack.c.b16 %v1058, %v1054
    %v1223 = vpack.c.b16 %v1059, %v1055
    %v1224 = vpack.c.b16 %v1064, %v1060
    %v1225 = vpack.c.b16 %v1065, %v1061
    %v1226 = vpack.c.b16 %v1066, %v1062
    %v1227 = vpack.c.b16 %v1067, %v1063
    %v1228 = vpack.c.b16 %v1072, %v1068
    %v1229 = vpack.c.b16 %v1073, %v1069
    %v1230 = vpack.c.b16 %v1074, %v1070
    %v1231 = vpack.c.b16 %v1075, %v1071
    %v1232 = vpack.c.b16 %v1080, %v1076
    %v1233 = vpack.c.b16 %v1081, %v1077
    %v1234 = vpack.c.b16 %v1082, %v1078
    %v1235 = vpack.c.b16 %v1083, %v1079
    %v1236 = vpack.c.b16 %v1088, %v1084
    %v1237 = vpack.c.b16 %v1089, %v1085
    %v1238 = vpack.c.b16 %v1090, %v1086
    %v1239 = vpack.c.b16 %v1091, %v1087
    %v1240 = vpack.c.b16 %v1096, %v1092
    %v1241 = vpack.c.b16 %v1097, %v1093
    %v1242 = vpack.c.b16 %v1098, %v1094
    %v1243 = vpack.c.b16 %v1099, %v1095
    %v1244 = vpack.c.b16 %v1104, %v1100
    %v1245 = vpack.c.b16 %v1105, %v1101
    %v1246 = vpack.c.b16 %v1106, %v1102
    %v1247 = vpack.c.b16 %v1107, %v1103
    %v1248 = vpack.c.b16 %v1112, %v1108
    %v1249 = vpack.c.b16 %v1113, %v1109
    %v1250 = vpack.c.b16 %v1114, %v1110
    %v1251 = vpack.c.b16 %v1115, %v1111
    %v1252 = vpack.c.b16 %v1120, %v1116
    %v1253 = vpack.c.b16 %v1121, %v1117
    %v1254 = vpack.c.b16 %v1122, %v1118
    %v1255 = vpack.c.b16 %v1123, %v1119
    %v1256 = vpack.c.b16 %v1128, %v1124
    %v1257 = vpack.c.b16 %v1129, %v1125
    %v1258 = vpack.c.b16 %v1130, %v1126
    %v1259 = vpack.c.b16 %v1131, %v1127
    %1388 = vmatpush.bf16.msra.mxu0 %v1160
    %1389 = vmatpush.bf16.msra.mxu0 %v1156
    %1390 = vmatpush.bf16.msra.mxu0 %v1152
    %1391 = vmatpush.bf16.msra.mxu0 %v1148
    %1392 = vmatpush.bf16.msra.mxu0 %v1144
    %1393 = vmatpush.bf16.msra.mxu0 %v1140
    %1394 = vmatpush.bf16.msra.mxu0 %v1136
    %1395 = vmatpush.bf16.msra.mxu0 %v1132
    %1396 = vmatmul.bf16.gmra.mxu0 %v607
    %v1397 = vpop.f32.mrf.mxu0
    %v1398 = vadd.f32 %v740, %v1397
    %v1399 = vpop.f32.mrf.mxu0
    %1400 = vdwg.mxu0
    %1401 = vmatpush.bf16.msra.mxu0 %v1192
    %1402 = vmatpush.bf16.msra.mxu0 %v1188
    %1403 = vmatpush.bf16.msra.mxu0 %v1184
    %1404 = vmatpush.bf16.msra.mxu0 %v1180
    %1405 = vmatpush.bf16.msra.mxu0 %v1176
    %1406 = vmatpush.bf16.msra.mxu0 %v1172
    %1407 = vmatpush.bf16.msra.mxu0 %v1168
    %1408 = vmatpush.bf16.msra.mxu0 %v1164
    %1409 = vmatmul.bf16.gmra.mxu0 %v608
    %v1410 = vpop.f32.mrf.mxu0
    %v1411 = vadd.f32 %v1398, %v1410
    %v1412 = vpop.f32.mrf.mxu0
    %1413 = vdwg.mxu0
    %1414 = vmatpush.bf16.msra.mxu0 %v1224
    %1415 = vmatpush.bf16.msra.mxu0 %v1220
    %1416 = vmatpush.bf16.msra.mxu0 %v1216
    %1417 = vmatpush.bf16.msra.mxu0 %v1212
    %1418 = vmatpush.bf16.msra.mxu0 %v1208
    %1419 = vmatpush.bf16.msra.mxu0 %v1204
    %1420 = vmatpush.bf16.msra.mxu0 %v1200
    %1421 = vmatpush.bf16.msra.mxu0 %v1196
    %1422 = vmatmul.bf16.gmra.mxu0 %v609
    %v1423 = vpop.f32.mrf.mxu0
    %v1424 = vadd.f32 %v1411, %v1423
    %v1425 = vpop.f32.mrf.mxu0
    %1426 = vdwg.mxu0
    %1427 = vmatpush.bf16.msra.mxu0 %v1256
    %1428 = vmatpush.bf16.msra.mxu0 %v1252
    %1429 = vmatpush.bf16.msra.mxu0 %v1248
    %1430 = vmatpush.bf16.msra.mxu0 %v1244
    %1431 = vmatpush.bf16.msra.mxu0 %v1240
    %1432 = vmatpush.bf16.msra.mxu0 %v1236
    %1433 = vmatpush.bf16.msra.mxu0 %v1232
    %1434 = vmatpush.bf16.msra.mxu0 %v1228
    %1435 = vmatmul.bf16.gmra.mxu0 %v610
    %v1436 = vpop.f32.mrf.mxu0
    %v1437 = vadd.f32 %v1424, %v1436
    %v1438 = vpop.f32.mrf.mxu0
    %1439 = vdwg.mxu0
    %1440 = vmatpush.bf16.msra.mxu0 %v1161
    %1441 = vmatpush.bf16.msra.mxu0 %v1157
    %1442 = vmatpush.bf16.msra.mxu0 %v1153
    %1443 = vmatpush.bf16.msra.mxu0 %v1149
    %1444 = vmatpush.bf16.msra.mxu0 %v1145
    %1445 = vmatpush.bf16.msra.mxu0 %v1141
    %1446 = vmatpush.bf16.msra.mxu0 %v1137
    %1447 = vmatpush.bf16.msra.mxu0 %v1133
    %1448 = vmatmul.bf16.gmra.mxu0 %v607
    %v1449 = vpop.f32.mrf.mxu0
    %v1450 = vadd.f32 %v741, %v1449
    %v1451 = vpop.f32.mrf.mxu0
    %1452 = vdwg.mxu0
    %1453 = vmatpush.bf16.msra.mxu0 %v1193
    %1454 = vmatpush.bf16.msra.mxu0 %v1189
    %1455 = vmatpush.bf16.msra.mxu0 %v1185
    %1456 = vmatpush.bf16.msra.mxu0 %v1181
    %1457 = vmatpush.bf16.msra.mxu0 %v1177
    %1458 = vmatpush.bf16.msra.mxu0 %v1173
    %1459 = vmatpush.bf16.msra.mxu0 %v1169
    %1460 = vmatpush.bf16.msra.mxu0 %v1165
    %1461 = vmatmul.bf16.gmra.mxu0 %v608
    %v1462 = vpop.f32.mrf.mxu0
    %v1463 = vadd.f32 %v1450, %v1462
    %v1464 = vpop.f32.mrf.mxu0
    %1465 = vdwg.mxu0
    %1466 = vmatpush.bf16.msra.mxu0 %v1225
    %1467 = vmatpush.bf16.msra.mxu0 %v1221
    %1468 = vmatpush.bf16.msra.mxu0 %v1217
    %1469 = vmatpush.bf16.msra.mxu0 %v1213
    %1470 = vmatpush.bf16.msra.mxu0 %v1209
    %1471 = vmatpush.bf16.msra.mxu0 %v1205
    %1472 = vmatpush.bf16.msra.mxu0 %v1201
    %1473 = vmatpush.bf16.msra.mxu0 %v1197
    %1474 = vmatmul.bf16.gmra.mxu0 %v609
    %v1475 = vpop.f32.mrf.mxu0
    %v1476 = vadd.f32 %v1463, %v1475
    %v1477 = vpop.f32.mrf.mxu0
    %1478 = vdwg.mxu0
    %1479 = vmatpush.bf16.msra.mxu0 %v1257
    %1480 = vmatpush.bf16.msra.mxu0 %v1253
    %1481 = vmatpush.bf16.msra.mxu0 %v1249
    %1482 = vmatpush.bf16.msra.mxu0 %v1245
    %1483 = vmatpush.bf16.msra.mxu0 %v1241
    %1484 = vmatpush.bf16.msra.mxu0 %v1237
    %1485 = vmatpush.bf16.msra.mxu0 %v1233
    %1486 = vmatpush.bf16.msra.mxu0 %v1229
    %1487 = vmatmul.bf16.gmra.mxu0 %v610
    %v1488 = vpop.f32.mrf.mxu0
    %v1489 = vadd.f32 %v1476, %v1488
    %v1490 = vpop.f32.mrf.mxu0
    %1491 = vdwg.mxu0
    %1492 = vmatpush.bf16.msra.mxu0 %v1162
    %1493 = vmatpush.bf16.msra.mxu0 %v1158
    %1494 = vmatpush.bf16.msra.mxu0 %v1154
    %1495 = vmatpush.bf16.msra.mxu0 %v1150
    %1496 = vmatpush.bf16.msra.mxu0 %v1146
    %1497 = vmatpush.bf16.msra.mxu0 %v1142
    %1498 = vmatpush.bf16.msra.mxu0 %v1138
    %1499 = vmatpush.bf16.msra.mxu0 %v1134
    %1500 = vmatmul.bf16.gmra.mxu0 %v607
    %v1501 = vpop.f32.mrf.mxu0
    %v1502 = vadd.f32 %v742, %v1501
    %v1503 = vpop.f32.mrf.mxu0
    %1504 = vdwg.mxu0
    %1505 = vmatpush.bf16.msra.mxu0 %v1194
    %1506 = vmatpush.bf16.msra.mxu0 %v1190
    %1507 = vmatpush.bf16.msra.mxu0 %v1186
    %1508 = vmatpush.bf16.msra.mxu0 %v1182
    %1509 = vmatpush.bf16.msra.mxu0 %v1178
    %1510 = vmatpush.bf16.msra.mxu0 %v1174
    %1511 = vmatpush.bf16.msra.mxu0 %v1170
    %1512 = vmatpush.bf16.msra.mxu0 %v1166
    %1513 = vmatmul.bf16.gmra.mxu0 %v608
    %v1514 = vpop.f32.mrf.mxu0
    %v1515 = vadd.f32 %v1502, %v1514
    %v1516 = vpop.f32.mrf.mxu0
    %1517 = vdwg.mxu0
    %1518 = vmatpush.bf16.msra.mxu0 %v1226
    %1519 = vmatpush.bf16.msra.mxu0 %v1222
    %1520 = vmatpush.bf16.msra.mxu0 %v1218
    %1521 = vmatpush.bf16.msra.mxu0 %v1214
    %1522 = vmatpush.bf16.msra.mxu0 %v1210
    %1523 = vmatpush.bf16.msra.mxu0 %v1206
    %1524 = vmatpush.bf16.msra.mxu0 %v1202
    %1525 = vmatpush.bf16.msra.mxu0 %v1198
    %1526 = vmatmul.bf16.gmra.mxu0 %v609
    %v1527 = vpop.f32.mrf.mxu0
    %v1528 = vadd.f32 %v1515, %v1527
    %v1529 = vpop.f32.mrf.mxu0
    %1530 = vdwg.mxu0
    %1531 = vmatpush.bf16.msra.mxu0 %v1258
    %1532 = vmatpush.bf16.msra.mxu0 %v1254
    %1533 = vmatpush.bf16.msra.mxu0 %v1250
    %1534 = vmatpush.bf16.msra.mxu0 %v1246
    %1535 = vmatpush.bf16.msra.mxu0 %v1242
    %1536 = vmatpush.bf16.msra.mxu0 %v1238
    %1537 = vmatpush.bf16.msra.mxu0 %v1234
    %1538 = vmatpush.bf16.msra.mxu0 %v1230
    %1539 = vmatmul.bf16.gmra.mxu0 %v610
    %v1540 = vpop.f32.mrf.mxu0
    %v1541 = vadd.f32 %v1528, %v1540
    %v1542 = vpop.f32.mrf.mxu0
    %1543 = vdwg.mxu0
    %1544 = vmatpush.bf16.msra.mxu0 %v1163
    %1545 = vmatpush.bf16.msra.mxu0 %v1159
    %1546 = vmatpush.bf16.msra.mxu0 %v1155
    %1547 = vmatpush.bf16.msra.mxu0 %v1151
    %1548 = vmatpush.bf16.msra.mxu0 %v1147
    %1549 = vmatpush.bf16.msra.mxu0 %v1143
    %1550 = vmatpush.bf16.msra.mxu0 %v1139
    %1551 = vmatpush.bf16.msra.mxu0 %v1135
    %1552 = vmatmul.bf16.gmra.mxu0 %v607
    %v1553 = vpop.f32.mrf.mxu0
    %v1554 = vadd.f32 %v743, %v1553
    %v1555 = vpop.f32.mrf.mxu0
    %1556 = vdwg.mxu0
    %1557 = vmatpush.bf16.msra.mxu0 %v1195
    %1558 = vmatpush.bf16.msra.mxu0 %v1191
    %1559 = vmatpush.bf16.msra.mxu0 %v1187
    %1560 = vmatpush.bf16.msra.mxu0 %v1183
    %1561 = vmatpush.bf16.msra.mxu0 %v1179
    %1562 = vmatpush.bf16.msra.mxu0 %v1175
    %1563 = vmatpush.bf16.msra.mxu0 %v1171
    %1564 = vmatpush.bf16.msra.mxu0 %v1167
    %1565 = vmatmul.bf16.gmra.mxu0 %v608
    %v1566 = vpop.f32.mrf.mxu0
    %v1567 = vadd.f32 %v1554, %v1566
    %v1568 = vpop.f32.mrf.mxu0
    %1569 = vdwg.mxu0
    %1570 = vmatpush.bf16.msra.mxu0 %v1227
    %1571 = vmatpush.bf16.msra.mxu0 %v1223
    %1572 = vmatpush.bf16.msra.mxu0 %v1219
    %1573 = vmatpush.bf16.msra.mxu0 %v1215
    %1574 = vmatpush.bf16.msra.mxu0 %v1211
    %1575 = vmatpush.bf16.msra.mxu0 %v1207
    %1576 = vmatpush.bf16.msra.mxu0 %v1203
    %1577 = vmatpush.bf16.msra.mxu0 %v1199
    %1578 = vmatmul.bf16.gmra.mxu0 %v609
    %v1579 = vpop.f32.mrf.mxu0
    %v1580 = vadd.f32 %v1567, %v1579
    %v1581 = vpop.f32.mrf.mxu0
    %1582 = vdwg.mxu0
    %1583 = vmatpush.bf16.msra.mxu0 %v1259
    %1584 = vmatpush.bf16.msra.mxu0 %v1255
    %1585 = vmatpush.bf16.msra.mxu0 %v1251
    %1586 = vmatpush.bf16.msra.mxu0 %v1247
    %1587 = vmatpush.bf16.msra.mxu0 %v1243
    %1588 = vmatpush.bf16.msra.mxu0 %v1239
    %1589 = vmatpush.bf16.msra.mxu0 %v1235
    %1590 = vmatpush.bf16.msra.mxu0 %v1231
    %1591 = vmatmul.bf16.gmra.mxu0 %v610
    %v1592 = vpop.f32.mrf.mxu0
    %v1593 = vadd.f32 %v1580, %v1592
    %v1594 = vpop.f32.mrf.mxu0
    %1595 = vdwg.mxu0
    %v1596 = vmax.f32 %v1437, 0.0
    %v1597 = vmax.f32 %v1489, 0.0
    %v1598 = vmax.f32 %v1541, 0.0
    %v1599 = vmax.f32 %v1593, 0.0
    %v1600 = vpack.c.bf16 %v1596, %v1596
    %v1601 = vpack.c.bf16 %v1597, %v1597
    %v1602 = vpack.c.bf16 %v1598, %v1598
    %v1603 = vpack.c.bf16 %v1599, %v1599
    %v1604 = vld [vmem:[#allocation8] sm:$0xf]
    %v1605 = vld [vmem:[#allocation8 + $0x4] sm:$0xf]
    %v1606 = vld [vmem:[#allocation8 + $0x8] sm:$0xf]
    %v1607 = vld [vmem:[#allocation8 + $0xc] sm:$0xf]
    %v1608 = vld [vmem:[#allocation8 + $0x10] sm:$0xf]
    %v1609 = vld [vmem:[#allocation8 + $0x14] sm:$0xf]
    %v1610 = vld [vmem:[#allocation8 + $0x18] sm:$0xf]
    %v1611 = vld [vmem:[#allocation8 + $0x1c] sm:$0xf]
    %v1612 = vld [vmem:[#allocation8 + $0x20] sm:$0xf]
    %v1613 = vld [vmem:[#allocation8 + $0x24] sm:$0xf]
    %v1614 = vld [vmem:[#allocation8 + $0x28] sm:$0xf]
    %v1615 = vld [vmem:[#allocation8 + $0x2c] sm:$0xf]
    %v1616 = vld [vmem:[#allocation8 + $0x30] sm:$0xf]
    %v1617 = vld [vmem:[#allocation8 + $0x34] sm:$0xf]
    %v1618 = vld [vmem:[#allocation8 + $0x38] sm:$0xf]
    %v1619 = vld [vmem:[#allocation8 + $0x3c] sm:$0xf]
    %v1620 = vld [vmem:[#allocation8 + $0x40] sm:$0xf]
    %v1621 = vld [vmem:[#allocation8 + $0x44] sm:$0xf]
    %v1622 = vld [vmem:[#allocation8 + $0x48] sm:$0xf]
    %v1623 = vld [vmem:[#allocation8 + $0x4c] sm:$0xf]
    %v1624 = vld [vmem:[#allocation8 + $0x50] sm:$0xf]
    %v1625 = vld [vmem:[#allocation8 + $0x54] sm:$0xf]
    %v1626 = vld [vmem:[#allocation8 + $0x58] sm:$0xf]
    %v1627 = vld [vmem:[#allocation8 + $0x5c] sm:$0xf]
    %v1628 = vld [vmem:[#allocation8 + $0x60] sm:$0xf]
    %v1629 = vld [vmem:[#allocation8 + $0x64] sm:$0xf]
    %v1630 = vld [vmem:[#allocation8 + $0x68] sm:$0xf]
    %v1631 = vld [vmem:[#allocation8 + $0x6c] sm:$0xf]
    %v1632 = vld [vmem:[#allocation8 + $0x70] sm:$0xf]
    %v1633 = vld [vmem:[#allocation8 + $0x74] sm:$0xf]
    %v1634 = vld [vmem:[#allocation8 + $0x78] sm:$0xf]
    %v1635 = vld [vmem:[#allocation8 + $0x7c] sm:$0xf]
    %v1636 = vld [vmem:[#allocation8 + $0x80] sm:$0xf]
    %v1637 = vld [vmem:[#allocation8 + $0x84] sm:$0xf]
    %v1638 = vld [vmem:[#allocation8 + $0x88] sm:$0xf]
    %v1639 = vld [vmem:[#allocation8 + $0x8c] sm:$0xf]
    %v1640 = vld [vmem:[#allocation8 + $0x90] sm:$0xf]
    %v1641 = vld [vmem:[#allocation8 + $0x94] sm:$0xf]
    %v1642 = vld [vmem:[#allocation8 + $0x98] sm:$0xf]
    %v1643 = vld [vmem:[#allocation8 + $0x9c] sm:$0xf]
    %v1644 = vld [vmem:[#allocation8 + $0xa0] sm:$0xf]
    %v1645 = vld [vmem:[#allocation8 + $0xa4] sm:$0xf]
    %v1646 = vld [vmem:[#allocation8 + $0xa8] sm:$0xf]
    %v1647 = vld [vmem:[#allocation8 + $0xac] sm:$0xf]
    %v1648 = vld [vmem:[#allocation8 + $0xb0] sm:$0xf]
    %v1649 = vld [vmem:[#allocation8 + $0xb4] sm:$0xf]
    %v1650 = vld [vmem:[#allocation8 + $0xb8] sm:$0xf]
    %v1651 = vld [vmem:[#allocation8 + $0xbc] sm:$0xf]
    %v1652 = vld [vmem:[#allocation8 + $0xc0] sm:$0xf]
    %v1653 = vld [vmem:[#allocation8 + $0xc4] sm:$0xf]
    %v1654 = vld [vmem:[#allocation8 + $0xc8] sm:$0xf]
    %v1655 = vld [vmem:[#allocation8 + $0xcc] sm:$0xf]
    %v1656 = vld [vmem:[#allocation8 + $0xd0] sm:$0xf]
    %v1657 = vld [vmem:[#allocation8 + $0xd4] sm:$0xf]
    %v1658 = vld [vmem:[#allocation8 + $0xd8] sm:$0xf]
    %v1659 = vld [vmem:[#allocation8 + $0xdc] sm:$0xf]
    %v1660 = vld [vmem:[#allocation8 + $0xe0] sm:$0xf]
    %v1661 = vld [vmem:[#allocation8 + $0xe4] sm:$0xf]
    %v1662 = vld [vmem:[#allocation8 + $0xe8] sm:$0xf]
    %v1663 = vld [vmem:[#allocation8 + $0xec] sm:$0xf]
    %v1664 = vld [vmem:[#allocation8 + $0xf0] sm:$0xf]
    %v1665 = vld [vmem:[#allocation8 + $0xf4] sm:$0xf]
    %v1666 = vld [vmem:[#allocation8 + $0xf8] sm:$0xf]
    %v1667 = vld [vmem:[#allocation8 + $0xfc] sm:$0xf]
    %v1669 = vperm.slane %v97, 0
    %v1735 = vunpack.c.l.b16 %v1604
    %v1736 = vunpack.c.l.b16 %v1605
    %v1737 = vunpack.c.l.b16 %v1606
    %v1738 = vunpack.c.l.b16 %v1607
    %v1739 = vunpack.c.l.b16 %v1608
    %v1740 = vunpack.c.l.b16 %v1609
    %v1741 = vunpack.c.l.b16 %v1610
    %v1742 = vunpack.c.l.b16 %v1611
    %v1743 = vunpack.c.l.b16 %v1612
    %v1744 = vunpack.c.l.b16 %v1613
    %v1745 = vunpack.c.l.b16 %v1614
    %v1746 = vunpack.c.l.b16 %v1615
    %v1747 = vunpack.c.l.b16 %v1616
    %v1748 = vunpack.c.l.b16 %v1617
    %v1749 = vunpack.c.l.b16 %v1618
    %v1750 = vunpack.c.l.b16 %v1619
    %v1751 = vunpack.c.l.b16 %v1620
    %v1752 = vunpack.c.l.b16 %v1621
    %v1753 = vunpack.c.l.b16 %v1622
    %v1754 = vunpack.c.l.b16 %v1623
    %v1755 = vunpack.c.l.b16 %v1624
    %v1756 = vunpack.c.l.b16 %v1625
    %v1757 = vunpack.c.l.b16 %v1626
    %v1758 = vunpack.c.l.b16 %v1627
    %v1759 = vunpack.c.l.b16 %v1628
    %v1760 = vunpack.c.l.b16 %v1629
    %v1761 = vunpack.c.l.b16 %v1630
    %v1762 = vunpack.c.l.b16 %v1631
    %v1763 = vunpack.c.l.b16 %v1632
    %v1764 = vunpack.c.l.b16 %v1633
    %v1765 = vunpack.c.l.b16 %v1634
    %v1766 = vunpack.c.l.b16 %v1635
    %v1767 = vunpack.c.l.b16 %v1636
    %v1768 = vunpack.c.l.b16 %v1637
    %v1769 = vunpack.c.l.b16 %v1638
    %v1770 = vunpack.c.l.b16 %v1639
    %v1771 = vunpack.c.l.b16 %v1640
    %v1772 = vunpack.c.l.b16 %v1641
    %v1773 = vunpack.c.l.b16 %v1642
    %v1774 = vunpack.c.l.b16 %v1643
    %v1775 = vunpack.c.l.b16 %v1644
    %v1776 = vunpack.c.l.b16 %v1645
    %v1777 = vunpack.c.l.b16 %v1646
    %v1778 = vunpack.c.l.b16 %v1647
    %v1779 = vunpack.c.l.b16 %v1648
    %v1780 = vunpack.c.l.b16 %v1649
    %v1781 = vunpack.c.l.b16 %v1650
    %v1782 = vunpack.c.l.b16 %v1651
    %v1783 = vunpack.c.l.b16 %v1652
    %v1784 = vunpack.c.l.b16 %v1653
    %v1785 = vunpack.c.l.b16 %v1654
    %v1786 = vunpack.c.l.b16 %v1655
    %v1787 = vunpack.c.l.b16 %v1656
    %v1788 = vunpack.c.l.b16 %v1657
    %v1789 = vunpack.c.l.b16 %v1658
    %v1790 = vunpack.c.l.b16 %v1659
    %v1791 = vunpack.c.l.b16 %v1660
    %v1792 = vunpack.c.l.b16 %v1661
    %v1793 = vunpack.c.l.b16 %v1662
    %v1794 = vunpack.c.l.b16 %v1663
    %v1795 = vunpack.c.l.b16 %v1664
    %v1796 = vunpack.c.l.b16 %v1665
    %v1797 = vunpack.c.l.b16 %v1666
    %v1798 = vunpack.c.l.b16 %v1667
    %v1799 = vpack.c.b16 %v1736, %v1735
    %v1800 = vpack.c.b16 %v1738, %v1737
    %v1801 = vpack.c.b16 %v1740, %v1739
    %v1802 = vpack.c.b16 %v1742, %v1741
    %v1803 = vpack.c.b16 %v1744, %v1743
    %v1804 = vpack.c.b16 %v1746, %v1745
    %v1805 = vpack.c.b16 %v1748, %v1747
    %v1806 = vpack.c.b16 %v1750, %v1749
    %v1807 = vpack.c.b16 %v1752, %v1751
    %v1808 = vpack.c.b16 %v1754, %v1753
    %v1809 = vpack.c.b16 %v1756, %v1755
    %v1810 = vpack.c.b16 %v1758, %v1757
    %v1811 = vpack.c.b16 %v1760, %v1759
    %v1812 = vpack.c.b16 %v1762, %v1761
    %v1813 = vpack.c.b16 %v1764, %v1763
    %v1814 = vpack.c.b16 %v1766, %v1765
    %v1815 = vpack.c.b16 %v1768, %v1767
    %v1816 = vpack.c.b16 %v1770, %v1769
    %v1817 = vpack.c.b16 %v1772, %v1771
    %v1818 = vpack.c.b16 %v1774, %v1773
    %v1819 = vpack.c.b16 %v1776, %v1775
    %v1820 = vpack.c.b16 %v1778, %v1777
    %v1821 = vpack.c.b16 %v1780, %v1779
    %v1822 = vpack.c.b16 %v1782, %v1781
    %v1823 = vpack.c.b16 %v1784, %v1783
    %v1824 = vpack.c.b16 %v1786, %v1785
    %v1825 = vpack.c.b16 %v1788, %v1787
    %v1826 = vpack.c.b16 %v1790, %v1789
    %v1827 = vpack.c.b16 %v1792, %v1791
    %v1828 = vpack.c.b16 %v1794, %v1793
    %v1829 = vpack.c.b16 %v1796, %v1795
    %v1830 = vpack.c.b16 %v1798, %v1797
    %1863 = vmatpush.bf16.msra.mxu0 %v1806
    %1864 = vmatpush.bf16.msra.mxu0 %v1805
    %1865 = vmatpush.bf16.msra.mxu0 %v1804
    %1866 = vmatpush.bf16.msra.mxu0 %v1803
    %1867 = vmatpush.bf16.msra.mxu0 %v1802
    %1868 = vmatpush.bf16.msra.mxu0 %v1801
    %1869 = vmatpush.bf16.msra.mxu0 %v1800
    %1870 = vmatpush.bf16.msra.mxu0 %v1799
    %1871 = vmatmul.bf16.gmra.mxu0 %v1600
    %v1872 = vpop.f32.mrf.mxu0
    %v1873 = vadd.f32 %v1669, %v1872
    %v1874 = vpop.f32.mrf.mxu0
    %1875 = vdwg.mxu0
    %1876 = vmatpush.bf16.msra.mxu0 %v1814
    %1877 = vmatpush.bf16.msra.mxu0 %v1813
    %1878 = vmatpush.bf16.msra.mxu0 %v1812
    %1879 = vmatpush.bf16.msra.mxu0 %v1811
    %1880 = vmatpush.bf16.msra.mxu0 %v1810
    %1881 = vmatpush.bf16.msra.mxu0 %v1809
    %1882 = vmatpush.bf16.msra.mxu0 %v1808
    %1883 = vmatpush.bf16.msra.mxu0 %v1807
    %1884 = vmatmul.bf16.gmra.mxu0 %v1601
    %v1885 = vpop.f32.mrf.mxu0
    %v1886 = vadd.f32 %v1873, %v1885
    %v1887 = vpop.f32.mrf.mxu0
    %1888 = vdwg.mxu0
    %1889 = vmatpush.bf16.msra.mxu0 %v1822
    %1890 = vmatpush.bf16.msra.mxu0 %v1821
    %1891 = vmatpush.bf16.msra.mxu0 %v1820
    %1892 = vmatpush.bf16.msra.mxu0 %v1819
    %1893 = vmatpush.bf16.msra.mxu0 %v1818
    %1894 = vmatpush.bf16.msra.mxu0 %v1817
    %1895 = vmatpush.bf16.msra.mxu0 %v1816
    %1896 = vmatpush.bf16.msra.mxu0 %v1815
    %1897 = vmatmul.bf16.gmra.mxu0 %v1602
    %v1898 = vpop.f32.mrf.mxu0
    %v1899 = vadd.f32 %v1886, %v1898
    %v1900 = vpop.f32.mrf.mxu0
    %1901 = vdwg.mxu0
    %1902 = vmatpush.bf16.msra.mxu0 %v1830
    %1903 = vmatpush.bf16.msra.mxu0 %v1829
    %1904 = vmatpush.bf16.msra.mxu0 %v1828
    %1905 = vmatpush.bf16.msra.mxu0 %v1827
    %1906 = vmatpush.bf16.msra.mxu0 %v1826
    %1907 = vmatpush.bf16.msra.mxu0 %v1825
    %1908 = vmatpush.bf16.msra.mxu0 %v1824
    %1909 = vmatpush.bf16.msra.mxu0 %v1823
    %1910 = vmatmul.bf16.gmra.mxu0 %v1603
    %v1911 = vpop.f32.mrf.mxu0
    %v1912 = vadd.f32 %v1899, %v1911
    %v1913 = vpop.f32.mrf.mxu0
    %1914 = vdwg.mxu0
    %1915 = vst [vmem:[#allocation11] sm:$0xff] %v1912
    // Predicated region
    $region42: #{tpu_custom_call.1} parent=1 // pred_check
      _
    $region43: #{tpu_custom_call.1} parent=1 // pred_check_branch
      %1917 = sbr.rel (0) target = $region45
    $region44: #{tpu_custom_call.1} parent=1 // pred_region
      %1919 = vsyncadd [#allocation4], 0
      %s1921 = sshll.u32 [#allocation11], 4
      %s1922 = int_to_ptr.vmem [resolvable:$true] %s1921
      %s1923 = sshll.u32 %s5, 4
      %s1924 = int_to_ptr.hbm [resolvable:$true] %s1923
      %1926 = dma.vmem_to_hbm [thread:$0]  %s1922, 128, %s1924, [#allocation4]
    $region45: #{tpu_custom_call.1} parent=1 // pred_fallthru
      _
    // Predicated region
    $region46: #{tpu_custom_call.1} parent=1 // pred_check
      _
    $region47: #{tpu_custom_call.1} parent=1 // pred_check_branch
      %1928 = sbr.rel (0) target = $region49
    $region48: #{tpu_custom_call.1} parent=1 // pred_region
      %1930 = dma.done [#allocation4], 128
    $region49: #{tpu_custom_call.1} parent=1 // pred_fallthru
      _
    %1931 = vsyncpa [#allocation3], 1
    %1932 = vsyncpa [#allocation6], 1
    %1933 = vsyncpa [#allocation9], 1
    %1934 = vsyncpa [#allocation4], 1

</llo_original>
